<compile_context>
chip_gen: v5e
topology: v5e:2x2
jax: 0.10.0
libtpu: 0.0.40
codegen_flags: <defaults>
</compile_context>

<pallas_src>
import jax
import jax.numpy as jnp
from jax import lax
from jax.experimental import pallas as pl
from jax.experimental.pallas import tpu as pltpu


# ---------------------------------------------------------------------------
# Fused kernel: all RGCN layers + ReLU + train-mode BatchNorm1d + JK residual.
# ---------------------------------------------------------------------------
def make_fused_kernel(num_layers, num_rels, n_nodes):
    def kernel(*refs):
        adj_ref, feat_ref, gamma_ref, beta_ref = refs[0], refs[1], refs[2], refs[3]
        layer_refs = refs[4:4 + 3 * num_layers]
        o_ref = refs[4 + 3 * num_layers]
        hw_ref = refs[5 + 3 * num_layers]          # VMEM scratch [R*N, d_out] bf16

        h = feat_ref[...]                          # f32, resident across layers
        h_in = None
        for l in range(num_layers):                # unrolled at trace time
            w_rel_ref = layer_refs[3 * l]          # [R, d_in, d_out]  bf16
            w_self_ref = layer_refs[3 * l + 1]     # [d_in, d_out]     bf16
            bias_ref = layer_refs[3 * l + 2]       # [1, d_out]        f32
            if l > 0:
                h_in = h                           # penultimate output (residual)
            h_bf = h.astype(jnp.bfloat16)

            # self loop ("curr_emb") + bias
            acc = jnp.dot(h_bf, w_self_ref[...],
                          preferred_element_type=jnp.float32) + bias_ref[...]

            # stack (h @ W_r) blocks so the relation sum becomes ONE K = R*N matmul
            for r in range(num_rels):
                hw_ref[pl.ds(r * n_nodes, n_nodes), :] = jnp.dot(
                    h_bf, w_rel_ref[r],
                    preferred_element_type=jnp.float32).astype(jnp.bfloat16)

            # sum_r A_r @ (h W_r)  as a single [N, R*N] x [R*N, d_out] contraction
            acc = acc + jnp.dot(adj_ref[...], hw_ref[...],
                                preferred_element_type=jnp.float32)
            h = jnp.maximum(acc, 0.0)              # activation = F.relu

        # BatchNorm1d with batch statistics (biased variance) + residual.
        # The whole node set is a single block, so the axis-0 statistics are exact;
        # if N is ever tiled, the full-N reduction must stay explicit.
        mean = jnp.mean(h, axis=0, keepdims=True)
        var = jnp.mean(jnp.square(h - mean), axis=0, keepdims=True)
        h_norm = (h - mean) * lax.rsqrt(var + 1e-5)
        o_ref[...] = h_in + h_norm * gamma_ref[...] + beta_ref[...]

    return kernel


def _full_spec(shape):
    return pl.BlockSpec(shape, lambda i: (0,) * len(shape))


# ---------------------------------------------------------------------------
# Full RGCN.forward
# ---------------------------------------------------------------------------
def rgcn_forward(feat, adj, params):
    # TODO(synk): attention branch (has_attn=True -> A/B linears + sigmoid gate)
    #             and MLP/GRU aggregators are not implemented; sum aggregator,
    #             no dropout (p=0 / eval) only.
    N, _ = feat.shape
    R = adj.shape[0]
    layers = params["layers"]
    num_layers = len(layers)
    if num_layers < 2:
        # same limitation as the reference module: h_in is undefined for 1 layer
        raise ValueError("RGCN forward requires num_layers >= 2 (JK residual).")
    emb_dim = layers[0]["w_self"].shape[1]

    # ---- wrapper-side layout plumbing (tiny, fused by XLA under jit) ----------
    # adjacency concatenated along the contraction axis: [N_dst, R*N_src],
    # column index = r*N + s (edge norm already folded in); bf16 for the MXU.
    adj_cat = adj.transpose(1, 0, 2).reshape(N, R * N).astype(jnp.bfloat16)

    flat_inputs = [
        adj_cat,
        feat.astype(jnp.float32),
        params["bn_gamma"].reshape(1, emb_dim).astype(jnp.float32),
        params["bn_beta"].reshape(1, emb_dim).astype(jnp.float32),
    ]
    for lp in layers:
        # basis decomposition W_rel[r] = sum_b w_comp[r, b] * basis[b]
        # (K = num_bases, negligible -> plain jnp instead of a dedicated kernel)
        w_rel = jnp.einsum("rb,bio->rio", lp["w_comp"], lp["basis"])
        flat_inputs += [
            w_rel.astype(jnp.bfloat16),
            lp["w_self"].astype(jnp.bfloat16),
            lp["bias"].reshape(1, emb_dim).astype(jnp.float32),
        ]

    kernel = make_fused_kernel(num_layers, R, N)

    # NOTE: at this problem size every operand fits trivially in VMEM (well under
    # v7x's 64 MiB). For much larger subgraphs (N ~ thousands) the adjacency would
    # need a tiled reduction axis plus a "parallel" node-tile axis (v7x megacore).
    return pl.pallas_call(
        kernel,
        out_shape=jax.ShapeDtypeStruct((N, emb_dim), jnp.float32),
        grid=(1,),
        in_specs=[_full_spec(x.shape) for x in flat_inputs],
        out_specs=_full_spec((N, emb_dim)),
        scratch_shapes=[pltpu.VMEM((R * N, emb_dim), jnp.bfloat16)],
        compiler_params=pltpu.CompilerParams(dimension_semantics=("arbitrary",)),
    )(*flat_inputs)


# ---------------------------------------------------------------------------
# Deterministic parameter / input construction
# ---------------------------------------------------------------------------
def xavier(key, shape):
    fan_in, fan_out = shape[-2], shape[-1]
    limit = (6.0 / (fan_in + fan_out)) ** 0.5
    return jax.random.uniform(key, shape, minval=-limit, maxval=limit,
                              dtype=jnp.float32)


def build_params(key, inp_dim, emb_dim, num_rels, num_bases, num_layers):
    layers = []
    for l in range(num_layers):
        d_in = inp_dim if l == 0 else emb_dim
        key, k1, k2, k3 = jax.random.split(key, 4)
        layers.append({
            "basis": xavier(k1, (num_bases, d_in, emb_dim)),
            "w_comp": xavier(k2, (num_rels, num_bases)),
            "w_self": xavier(k3, (d_in, emb_dim)),
            "bias": jnp.zeros((emb_dim,), jnp.float32),
        })
    return {
        "layers": layers,
        "bn_gamma": jnp.ones((emb_dim,), jnp.float32),   # nn.BatchNorm1d default init
        "bn_beta": jnp.zeros((emb_dim,), jnp.float32),
    }


if __name__ == "__main__":
    # Small, module-consistent shapes.
    N = 64            # nodes in the (batched) subgraph
    INP_DIM = 32      # params.inp_dim
    EMB_DIM = 32      # params.emb_dim
    NUM_RELS = 8      # params.aug_num_rels
    NUM_BASES = 4     # params.num_bases
    NUM_LAYERS = 3    # params.num_gcn_layers (>=2 so h_in is defined)

    key = jax.random.PRNGKey(0)
    key, k_adj, k_par = jax.random.split(key, 3)

    # node features: one-hot labels (create_features -> arange(inp_dim) label ids)
    labels = jnp.arange(N) % INP_DIM
    feat = jax.nn.one_hot(labels, INP_DIM, dtype=jnp.float32)

    # per-relation adjacency [R, N_dst, N_src] with edge `norm` (1/in-degree) folded in
    adj_mask = (jax.random.uniform(k_adj, (NUM_RELS, N, N)) < 0.1).astype(jnp.float32)
    in_deg = jnp.clip(adj_mask.sum(axis=(0, 2)), 1.0, None)            # (N_dst,)
    adj = adj_mask / in_deg[None, :, None]

    params = build_params(k_par, INP_DIM, EMB_DIM, NUM_RELS, NUM_BASES, NUM_LAYERS)

    out = jax.jit(rgcn_forward)(feat, adj, params)
    out = jax.block_until_ready(out)
    assert out.shape == (N, EMB_DIM) and out.dtype == jnp.float32
    print("KERNEL_OK")
</pallas_src>

<mosaic_0001>
module attributes {stable_mosaic.version = 11 : i64} {
  func.func @kernel(%arg0: i32, %arg1: memref<64x512xbf16, #tpu.memory_space<vmem>>, %arg2: memref<64x32xf32, #tpu.memory_space<vmem>>, %arg3: memref<1x32xf32, #tpu.memory_space<vmem>>, %arg4: memref<1x32xf32, #tpu.memory_space<vmem>>, %arg5: memref<8x32x32xbf16, #tpu.memory_space<vmem>>, %arg6: memref<32x32xbf16, #tpu.memory_space<vmem>>, %arg7: memref<1x32xf32, #tpu.memory_space<vmem>>, %arg8: memref<8x32x32xbf16, #tpu.memory_space<vmem>>, %arg9: memref<32x32xbf16, #tpu.memory_space<vmem>>, %arg10: memref<1x32xf32, #tpu.memory_space<vmem>>, %arg11: memref<8x32x32xbf16, #tpu.memory_space<vmem>>, %arg12: memref<32x32xbf16, #tpu.memory_space<vmem>>, %arg13: memref<1x32xf32, #tpu.memory_space<vmem>>, %arg14: memref<64x32xf32, #tpu.memory_space<vmem>>, %arg15: memref<512x32xbf16, #tpu.memory_space<vmem>>) attributes {dimension_semantics = [#tpu.dimension_semantics<arbitrary>], iteration_bounds = array<i64: 1>, scalar_prefetch = 0 : i64, scratch_operands = 1 : i64, tpu.core_type = #tpu.core_type<tc>, window_params = [{pipeline_mode = #tpu.pipeline_mode<synchronous>, transform_indices = @transform_0, window_bounds = array<i64: 64, 512>}, {pipeline_mode = #tpu.pipeline_mode<synchronous>, transform_indices = @transform_1, window_bounds = array<i64: 64, 32>}, {pipeline_mode = #tpu.pipeline_mode<synchronous>, transform_indices = @transform_2, window_bounds = array<i64: 1, 32>}, {pipeline_mode = #tpu.pipeline_mode<synchronous>, transform_indices = @transform_3, window_bounds = array<i64: 1, 32>}, {pipeline_mode = #tpu.pipeline_mode<synchronous>, transform_indices = @transform_4, window_bounds = array<i64: 8, 32, 32>}, {pipeline_mode = #tpu.pipeline_mode<synchronous>, transform_indices = @transform_5, window_bounds = array<i64: 32, 32>}, {pipeline_mode = #tpu.pipeline_mode<synchronous>, transform_indices = @transform_6, window_bounds = array<i64: 1, 32>}, {pipeline_mode = #tpu.pipeline_mode<synchronous>, transform_indices = @transform_7, window_bounds = array<i64: 8, 32, 32>}, {pipeline_mode = #tpu.pipeline_mode<synchronous>, transform_indices = @transform_8, window_bounds = array<i64: 32, 32>}, {pipeline_mode = #tpu.pipeline_mode<synchronous>, transform_indices = @transform_9, window_bounds = array<i64: 1, 32>}, {pipeline_mode = #tpu.pipeline_mode<synchronous>, transform_indices = @transform_10, window_bounds = array<i64: 8, 32, 32>}, {pipeline_mode = #tpu.pipeline_mode<synchronous>, transform_indices = @transform_11, window_bounds = array<i64: 32, 32>}, {pipeline_mode = #tpu.pipeline_mode<synchronous>, transform_indices = @transform_12, window_bounds = array<i64: 1, 32>}, {pipeline_mode = #tpu.pipeline_mode<synchronous>, transform_indices = @transform_13, window_bounds = array<i64: 64, 32>}]} {
    %c0 = arith.constant 0 : index
    %c0_0 = arith.constant 0 : index
    %0 = vector.load %arg2[%c0, %c0_0] : memref<64x32xf32, #tpu.memory_space<vmem>>, vector<64x32xf32>
    %1 = arith.truncf %0 : vector<64x32xf32> to vector<64x32xbf16>
    %c0_1 = arith.constant 0 : index
    %c0_2 = arith.constant 0 : index
    %2 = vector.load %arg6[%c0_1, %c0_2] : memref<32x32xbf16, #tpu.memory_space<vmem>>, vector<32x32xbf16>
    %cst = arith.constant dense<0.000000e+00> : vector<64x32xf32>
    %3 = tpu.matmul %1, %2, %cst {dimension_numbers = #tpu.dot_dimension_numbers<[1], [0], [0], [1], [0, 0, 1, 1], [], []>} : vector<64x32xbf16>, vector<32x32xbf16>, vector<64x32xf32> -> vector<64x32xf32>
    %c0_3 = arith.constant 0 : index
    %c0_4 = arith.constant 0 : index
    %4 = vector.load %arg7[%c0_3, %c0_4] : memref<1x32xf32, #tpu.memory_space<vmem>>, vector<1x32xf32>
    %5 = vector.broadcast %4 : vector<1x32xf32> to vector<64x32xf32>
    %6 = arith.addf %3, %5 : vector<64x32xf32>
    %c0_5 = arith.constant 0 : index
    %c0_6 = arith.constant 0 : index
    %c0_7 = arith.constant 0 : index
    %7 = vector.load %arg5[%c0_5, %c0_6, %c0_7] : memref<8x32x32xbf16, #tpu.memory_space<vmem>>, vector<1x32x32xbf16>
    %8 = vector.shape_cast %7 : vector<1x32x32xbf16> to vector<32x32xbf16>
    %cst_8 = arith.constant dense<0.000000e+00> : vector<64x32xf32>
    %9 = tpu.matmul %1, %8, %cst_8 {dimension_numbers = #tpu.dot_dimension_numbers<[1], [0], [0], [1], [0, 0, 1, 1], [], []>} : vector<64x32xbf16>, vector<32x32xbf16>, vector<64x32xf32> -> vector<64x32xf32>
    %10 = arith.truncf %9 : vector<64x32xf32> to vector<64x32xbf16>
    %c0_9 = arith.constant 0 : index
    %c0_10 = arith.constant 0 : index
    %11 = vector.load %arg15[%c0_9, %c0_10] : memref<512x32xbf16, #tpu.memory_space<vmem>>, vector<64x32xbf16>
    tpu.vector_store %arg15[%c0_9, %c0_10], %10 {strides = array<i32>} : memref<512x32xbf16, #tpu.memory_space<vmem>>, vector<64x32xbf16>,
    %c1 = arith.constant 1 : index
    %c0_11 = arith.constant 0 : index
    %c0_12 = arith.constant 0 : index
    %12 = vector.load %arg5[%c1, %c0_11, %c0_12] : memref<8x32x32xbf16, #tpu.memory_space<vmem>>, vector<1x32x32xbf16>
    %13 = vector.shape_cast %12 : vector<1x32x32xbf16> to vector<32x32xbf16>
    %cst_13 = arith.constant dense<0.000000e+00> : vector<64x32xf32>
    %14 = tpu.matmul %1, %13, %cst_13 {dimension_numbers = #tpu.dot_dimension_numbers<[1], [0], [0], [1], [0, 0, 1, 1], [], []>} : vector<64x32xbf16>, vector<32x32xbf16>, vector<64x32xf32> -> vector<64x32xf32>
    %15 = arith.truncf %14 : vector<64x32xf32> to vector<64x32xbf16>
    %c64 = arith.constant 64 : index
    %c0_14 = arith.constant 0 : index
    %16 = vector.load %arg15[%c64, %c0_14] : memref<512x32xbf16, #tpu.memory_space<vmem>>, vector<64x32xbf16>
    tpu.vector_store %arg15[%c64, %c0_14], %15 {strides = array<i32>} : memref<512x32xbf16, #tpu.memory_space<vmem>>, vector<64x32xbf16>,
    %c2 = arith.constant 2 : index
    %c0_15 = arith.constant 0 : index
    %c0_16 = arith.constant 0 : index
    %17 = vector.load %arg5[%c2, %c0_15, %c0_16] : memref<8x32x32xbf16, #tpu.memory_space<vmem>>, vector<1x32x32xbf16>
    %18 = vector.shape_cast %17 : vector<1x32x32xbf16> to vector<32x32xbf16>
    %cst_17 = arith.constant dense<0.000000e+00> : vector<64x32xf32>
    %19 = tpu.matmul %1, %18, %cst_17 {dimension_numbers = #tpu.dot_dimension_numbers<[1], [0], [0], [1], [0, 0, 1, 1], [], []>} : vector<64x32xbf16>, vector<32x32xbf16>, vector<64x32xf32> -> vector<64x32xf32>
    %20 = arith.truncf %19 : vector<64x32xf32> to vector<64x32xbf16>
    %c128 = arith.constant 128 : index
    %c0_18 = arith.constant 0 : index
    %21 = vector.load %arg15[%c128, %c0_18] : memref<512x32xbf16, #tpu.memory_space<vmem>>, vector<64x32xbf16>
    tpu.vector_store %arg15[%c128, %c0_18], %20 {strides = array<i32>} : memref<512x32xbf16, #tpu.memory_space<vmem>>, vector<64x32xbf16>,
    %c3 = arith.constant 3 : index
    %c0_19 = arith.constant 0 : index
    %c0_20 = arith.constant 0 : index
    %22 = vector.load %arg5[%c3, %c0_19, %c0_20] : memref<8x32x32xbf16, #tpu.memory_space<vmem>>, vector<1x32x32xbf16>
    %23 = vector.shape_cast %22 : vector<1x32x32xbf16> to vector<32x32xbf16>
    %cst_21 = arith.constant dense<0.000000e+00> : vector<64x32xf32>
    %24 = tpu.matmul %1, %23, %cst_21 {dimension_numbers = #tpu.dot_dimension_numbers<[1], [0], [0], [1], [0, 0, 1, 1], [], []>} : vector<64x32xbf16>, vector<32x32xbf16>, vector<64x32xf32> -> vector<64x32xf32>
    %25 = arith.truncf %24 : vector<64x32xf32> to vector<64x32xbf16>
    %c192 = arith.constant 192 : index
    %c0_22 = arith.constant 0 : index
    %26 = vector.load %arg15[%c192, %c0_22] : memref<512x32xbf16, #tpu.memory_space<vmem>>, vector<64x32xbf16>
    tpu.vector_store %arg15[%c192, %c0_22], %25 {strides = array<i32>} : memref<512x32xbf16, #tpu.memory_space<vmem>>, vector<64x32xbf16>,
    %c4 = arith.constant 4 : index
    %c0_23 = arith.constant 0 : index
    %c0_24 = arith.constant 0 : index
    %27 = vector.load %arg5[%c4, %c0_23, %c0_24] : memref<8x32x32xbf16, #tpu.memory_space<vmem>>, vector<1x32x32xbf16>
    %28 = vector.shape_cast %27 : vector<1x32x32xbf16> to vector<32x32xbf16>
    %cst_25 = arith.constant dense<0.000000e+00> : vector<64x32xf32>
    %29 = tpu.matmul %1, %28, %cst_25 {dimension_numbers = #tpu.dot_dimension_numbers<[1], [0], [0], [1], [0, 0, 1, 1], [], []>} : vector<64x32xbf16>, vector<32x32xbf16>, vector<64x32xf32> -> vector<64x32xf32>
    %30 = arith.truncf %29 : vector<64x32xf32> to vector<64x32xbf16>
    %c256 = arith.constant 256 : index
    %c0_26 = arith.constant 0 : index
    %31 = vector.load %arg15[%c256, %c0_26] : memref<512x32xbf16, #tpu.memory_space<vmem>>, vector<64x32xbf16>
    tpu.vector_store %arg15[%c256, %c0_26], %30 {strides = array<i32>} : memref<512x32xbf16, #tpu.memory_space<vmem>>, vector<64x32xbf16>,
    %c5 = arith.constant 5 : index
    %c0_27 = arith.constant 0 : index
    %c0_28 = arith.constant 0 : index
    %32 = vector.load %arg5[%c5, %c0_27, %c0_28] : memref<8x32x32xbf16, #tpu.memory_space<vmem>>, vector<1x32x32xbf16>
    %33 = vector.shape_cast %32 : vector<1x32x32xbf16> to vector<32x32xbf16>
    %cst_29 = arith.constant dense<0.000000e+00> : vector<64x32xf32>
    %34 = tpu.matmul %1, %33, %cst_29 {dimension_numbers = #tpu.dot_dimension_numbers<[1], [0], [0], [1], [0, 0, 1, 1], [], []>} : vector<64x32xbf16>, vector<32x32xbf16>, vector<64x32xf32> -> vector<64x32xf32>
    %35 = arith.truncf %34 : vector<64x32xf32> to vector<64x32xbf16>
    %c320 = arith.constant 320 : index
    %c0_30 = arith.constant 0 : index
    %36 = vector.load %arg15[%c320, %c0_30] : memref<512x32xbf16, #tpu.memory_space<vmem>>, vector<64x32xbf16>
    tpu.vector_store %arg15[%c320, %c0_30], %35 {strides = array<i32>} : memref<512x32xbf16, #tpu.memory_space<vmem>>, vector<64x32xbf16>,
    %c6 = arith.constant 6 : index
    %c0_31 = arith.constant 0 : index
    %c0_32 = arith.constant 0 : index
    %37 = vector.load %arg5[%c6, %c0_31, %c0_32] : memref<8x32x32xbf16, #tpu.memory_space<vmem>>, vector<1x32x32xbf16>
    %38 = vector.shape_cast %37 : vector<1x32x32xbf16> to vector<32x32xbf16>
    %cst_33 = arith.constant dense<0.000000e+00> : vector<64x32xf32>
    %39 = tpu.matmul %1, %38, %cst_33 {dimension_numbers = #tpu.dot_dimension_numbers<[1], [0], [0], [1], [0, 0, 1, 1], [], []>} : vector<64x32xbf16>, vector<32x32xbf16>, vector<64x32xf32> -> vector<64x32xf32>
    %40 = arith.truncf %39 : vector<64x32xf32> to vector<64x32xbf16>
    %c384 = arith.constant 384 : index
    %c0_34 = arith.constant 0 : index
    %41 = vector.load %arg15[%c384, %c0_34] : memref<512x32xbf16, #tpu.memory_space<vmem>>, vector<64x32xbf16>
    tpu.vector_store %arg15[%c384, %c0_34], %40 {strides = array<i32>} : memref<512x32xbf16, #tpu.memory_space<vmem>>, vector<64x32xbf16>,
    %c7 = arith.constant 7 : index
    %c0_35 = arith.constant 0 : index
    %c0_36 = arith.constant 0 : index
    %42 = vector.load %arg5[%c7, %c0_35, %c0_36] : memref<8x32x32xbf16, #tpu.memory_space<vmem>>, vector<1x32x32xbf16>
    %43 = vector.shape_cast %42 : vector<1x32x32xbf16> to vector<32x32xbf16>
    %cst_37 = arith.constant dense<0.000000e+00> : vector<64x32xf32>
    %44 = tpu.matmul %1, %43, %cst_37 {dimension_numbers = #tpu.dot_dimension_numbers<[1], [0], [0], [1], [0, 0, 1, 1], [], []>} : vector<64x32xbf16>, vector<32x32xbf16>, vector<64x32xf32> -> vector<64x32xf32>
    %45 = arith.truncf %44 : vector<64x32xf32> to vector<64x32xbf16>
    %c448 = arith.constant 448 : index
    %c0_38 = arith.constant 0 : index
    %46 = vector.load %arg15[%c448, %c0_38] : memref<512x32xbf16, #tpu.memory_space<vmem>>, vector<64x32xbf16>
    tpu.vector_store %arg15[%c448, %c0_38], %45 {strides = array<i32>} : memref<512x32xbf16, #tpu.memory_space<vmem>>, vector<64x32xbf16>,
    %c0_39 = arith.constant 0 : index
    %c0_40 = arith.constant 0 : index
    %47 = vector.load %arg1[%c0_39, %c0_40] : memref<64x512xbf16, #tpu.memory_space<vmem>>, vector<64x512xbf16>
    %c0_41 = arith.constant 0 : index
    %c0_42 = arith.constant 0 : index
    %48 = vector.load %arg15[%c0_41, %c0_42] : memref<512x32xbf16, #tpu.memory_space<vmem>>, vector<512x32xbf16>
    %cst_43 = arith.constant dense<0.000000e+00> : vector<64x32xf32>
    %49 = tpu.matmul %47, %48, %cst_43 {dimension_numbers = #tpu.dot_dimension_numbers<[1], [0], [0], [1], [0, 0, 1, 1], [], []>} : vector<64x512xbf16>, vector<512x32xbf16>, vector<64x32xf32> -> vector<64x32xf32>
    %50 = arith.addf %6, %49 : vector<64x32xf32>
    %cst_44 = arith.constant 0.000000e+00 : f32
    %51 = vector.broadcast %cst_44 : f32 to vector<64x32xf32>
    %52 = arith.maximumf %50, %51 : vector<64x32xf32>
    %53 = arith.truncf %52 : vector<64x32xf32> to vector<64x32xbf16>
    %c0_45 = arith.constant 0 : index
    %c0_46 = arith.constant 0 : index
    %54 = vector.load %arg9[%c0_45, %c0_46] : memref<32x32xbf16, #tpu.memory_space<vmem>>, vector<32x32xbf16>
    %cst_47 = arith.constant dense<0.000000e+00> : vector<64x32xf32>
    %55 = tpu.matmul %53, %54, %cst_47 {dimension_numbers = #tpu.dot_dimension_numbers<[1], [0], [0], [1], [0, 0, 1, 1], [], []>} : vector<64x32xbf16>, vector<32x32xbf16>, vector<64x32xf32> -> vector<64x32xf32>
    %c0_48 = arith.constant 0 : index
    %c0_49 = arith.constant 0 : index
    %56 = vector.load %arg10[%c0_48, %c0_49] : memref<1x32xf32, #tpu.memory_space<vmem>>, vector<1x32xf32>
    %57 = vector.broadcast %56 : vector<1x32xf32> to vector<64x32xf32>
    %58 = arith.addf %55, %57 : vector<64x32xf32>
    %c0_50 = arith.constant 0 : index
    %c0_51 = arith.constant 0 : index
    %c0_52 = arith.constant 0 : index
    %59 = vector.load %arg8[%c0_50, %c0_51, %c0_52] : memref<8x32x32xbf16, #tpu.memory_space<vmem>>, vector<1x32x32xbf16>
    %60 = vector.shape_cast %59 : vector<1x32x32xbf16> to vector<32x32xbf16>
    %cst_53 = arith.constant dense<0.000000e+00> : vector<64x32xf32>
    %61 = tpu.matmul %53, %60, %cst_53 {dimension_numbers = #tpu.dot_dimension_numbers<[1], [0], [0], [1], [0, 0, 1, 1], [], []>} : vector<64x32xbf16>, vector<32x32xbf16>, vector<64x32xf32> -> vector<64x32xf32>
    %62 = arith.truncf %61 : vector<64x32xf32> to vector<64x32xbf16>
    %c0_54 = arith.constant 0 : index
    %c0_55 = arith.constant 0 : index
    %63 = vector.load %arg15[%c0_54, %c0_55] : memref<512x32xbf16, #tpu.memory_space<vmem>>, vector<64x32xbf16>
    tpu.vector_store %arg15[%c0_54, %c0_55], %62 {strides = array<i32>} : memref<512x32xbf16, #tpu.memory_space<vmem>>, vector<64x32xbf16>,
    %c1_56 = arith.constant 1 : index
    %c0_57 = arith.constant 0 : index
    %c0_58 = arith.constant 0 : index
    %64 = vector.load %arg8[%c1_56, %c0_57, %c0_58] : memref<8x32x32xbf16, #tpu.memory_space<vmem>>, vector<1x32x32xbf16>
    %65 = vector.shape_cast %64 : vector<1x32x32xbf16> to vector<32x32xbf16>
    %cst_59 = arith.constant dense<0.000000e+00> : vector<64x32xf32>
    %66 = tpu.matmul %53, %65, %cst_59 {dimension_numbers = #tpu.dot_dimension_numbers<[1], [0], [0], [1], [0, 0, 1, 1], [], []>} : vector<64x32xbf16>, vector<32x32xbf16>, vector<64x32xf32> -> vector<64x32xf32>
    %67 = arith.truncf %66 : vector<64x32xf32> to vector<64x32xbf16>
    %c64_60 = arith.constant 64 : index
    %c0_61 = arith.constant 0 : index
    %68 = vector.load %arg15[%c64_60, %c0_61] : memref<512x32xbf16, #tpu.memory_space<vmem>>, vector<64x32xbf16>
    tpu.vector_store %arg15[%c64_60, %c0_61], %67 {strides = array<i32>} : memref<512x32xbf16, #tpu.memory_space<vmem>>, vector<64x32xbf16>,
    %c2_62 = arith.constant 2 : index
    %c0_63 = arith.constant 0 : index
    %c0_64 = arith.constant 0 : index
    %69 = vector.load %arg8[%c2_62, %c0_63, %c0_64] : memref<8x32x32xbf16, #tpu.memory_space<vmem>>, vector<1x32x32xbf16>
    %70 = vector.shape_cast %69 : vector<1x32x32xbf16> to vector<32x32xbf16>
    %cst_65 = arith.constant dense<0.000000e+00> : vector<64x32xf32>
    %71 = tpu.matmul %53, %70, %cst_65 {dimension_numbers = #tpu.dot_dimension_numbers<[1], [0], [0], [1], [0, 0, 1, 1], [], []>} : vector<64x32xbf16>, vector<32x32xbf16>, vector<64x32xf32> -> vector<64x32xf32>
    %72 = arith.truncf %71 : vector<64x32xf32> to vector<64x32xbf16>
    %c128_66 = arith.constant 128 : index
    %c0_67 = arith.constant 0 : index
    %73 = vector.load %arg15[%c128_66, %c0_67] : memref<512x32xbf16, #tpu.memory_space<vmem>>, vector<64x32xbf16>
    tpu.vector_store %arg15[%c128_66, %c0_67], %72 {strides = array<i32>} : memref<512x32xbf16, #tpu.memory_space<vmem>>, vector<64x32xbf16>,
    %c3_68 = arith.constant 3 : index
    %c0_69 = arith.constant 0 : index
    %c0_70 = arith.constant 0 : index
    %74 = vector.load %arg8[%c3_68, %c0_69, %c0_70] : memref<8x32x32xbf16, #tpu.memory_space<vmem>>, vector<1x32x32xbf16>
    %75 = vector.shape_cast %74 : vector<1x32x32xbf16> to vector<32x32xbf16>
    %cst_71 = arith.constant dense<0.000000e+00> : vector<64x32xf32>
    %76 = tpu.matmul %53, %75, %cst_71 {dimension_numbers = #tpu.dot_dimension_numbers<[1], [0], [0], [1], [0, 0, 1, 1], [], []>} : vector<64x32xbf16>, vector<32x32xbf16>, vector<64x32xf32> -> vector<64x32xf32>
    %77 = arith.truncf %76 : vector<64x32xf32> to vector<64x32xbf16>
    %c192_72 = arith.constant 192 : index
    %c0_73 = arith.constant 0 : index
    %78 = vector.load %arg15[%c192_72, %c0_73] : memref<512x32xbf16, #tpu.memory_space<vmem>>, vector<64x32xbf16>
    tpu.vector_store %arg15[%c192_72, %c0_73], %77 {strides = array<i32>} : memref<512x32xbf16, #tpu.memory_space<vmem>>, vector<64x32xbf16>,
    %c4_74 = arith.constant 4 : index
    %c0_75 = arith.constant 0 : index
    %c0_76 = arith.constant 0 : index
    %79 = vector.load %arg8[%c4_74, %c0_75, %c0_76] : memref<8x32x32xbf16, #tpu.memory_space<vmem>>, vector<1x32x32xbf16>
    %80 = vector.shape_cast %79 : vector<1x32x32xbf16> to vector<32x32xbf16>
    %cst_77 = arith.constant dense<0.000000e+00> : vector<64x32xf32>
    %81 = tpu.matmul %53, %80, %cst_77 {dimension_numbers = #tpu.dot_dimension_numbers<[1], [0], [0], [1], [0, 0, 1, 1], [], []>} : vector<64x32xbf16>, vector<32x32xbf16>, vector<64x32xf32> -> vector<64x32xf32>
    %82 = arith.truncf %81 : vector<64x32xf32> to vector<64x32xbf16>
    %c256_78 = arith.constant 256 : index
    %c0_79 = arith.constant 0 : index
    %83 = vector.load %arg15[%c256_78, %c0_79] : memref<512x32xbf16, #tpu.memory_space<vmem>>, vector<64x32xbf16>
    tpu.vector_store %arg15[%c256_78, %c0_79], %82 {strides = array<i32>} : memref<512x32xbf16, #tpu.memory_space<vmem>>, vector<64x32xbf16>,
    %c5_80 = arith.constant 5 : index
    %c0_81 = arith.constant 0 : index
    %c0_82 = arith.constant 0 : index
    %84 = vector.load %arg8[%c5_80, %c0_81, %c0_82] : memref<8x32x32xbf16, #tpu.memory_space<vmem>>, vector<1x32x32xbf16>
    %85 = vector.shape_cast %84 : vector<1x32x32xbf16> to vector<32x32xbf16>
    %cst_83 = arith.constant dense<0.000000e+00> : vector<64x32xf32>
    %86 = tpu.matmul %53, %85, %cst_83 {dimension_numbers = #tpu.dot_dimension_numbers<[1], [0], [0], [1], [0, 0, 1, 1], [], []>} : vector<64x32xbf16>, vector<32x32xbf16>, vector<64x32xf32> -> vector<64x32xf32>
    %87 = arith.truncf %86 : vector<64x32xf32> to vector<64x32xbf16>
    %c320_84 = arith.constant 320 : index
    %c0_85 = arith.constant 0 : index
    %88 = vector.load %arg15[%c320_84, %c0_85] : memref<512x32xbf16, #tpu.memory_space<vmem>>, vector<64x32xbf16>
    tpu.vector_store %arg15[%c320_84, %c0_85], %87 {strides = array<i32>} : memref<512x32xbf16, #tpu.memory_space<vmem>>, vector<64x32xbf16>,
    %c6_86 = arith.constant 6 : index
    %c0_87 = arith.constant 0 : index
    %c0_88 = arith.constant 0 : index
    %89 = vector.load %arg8[%c6_86, %c0_87, %c0_88] : memref<8x32x32xbf16, #tpu.memory_space<vmem>>, vector<1x32x32xbf16>
    %90 = vector.shape_cast %89 : vector<1x32x32xbf16> to vector<32x32xbf16>
    %cst_89 = arith.constant dense<0.000000e+00> : vector<64x32xf32>
    %91 = tpu.matmul %53, %90, %cst_89 {dimension_numbers = #tpu.dot_dimension_numbers<[1], [0], [0], [1], [0, 0, 1, 1], [], []>} : vector<64x32xbf16>, vector<32x32xbf16>, vector<64x32xf32> -> vector<64x32xf32>
    %92 = arith.truncf %91 : vector<64x32xf32> to vector<64x32xbf16>
    %c384_90 = arith.constant 384 : index
    %c0_91 = arith.constant 0 : index
    %93 = vector.load %arg15[%c384_90, %c0_91] : memref<512x32xbf16, #tpu.memory_space<vmem>>, vector<64x32xbf16>
    tpu.vector_store %arg15[%c384_90, %c0_91], %92 {strides = array<i32>} : memref<512x32xbf16, #tpu.memory_space<vmem>>, vector<64x32xbf16>,
    %c7_92 = arith.constant 7 : index
    %c0_93 = arith.constant 0 : index
    %c0_94 = arith.constant 0 : index
    %94 = vector.load %arg8[%c7_92, %c0_93, %c0_94] : memref<8x32x32xbf16, #tpu.memory_space<vmem>>, vector<1x32x32xbf16>
    %95 = vector.shape_cast %94 : vector<1x32x32xbf16> to vector<32x32xbf16>
    %cst_95 = arith.constant dense<0.000000e+00> : vector<64x32xf32>
    %96 = tpu.matmul %53, %95, %cst_95 {dimension_numbers = #tpu.dot_dimension_numbers<[1], [0], [0], [1], [0, 0, 1, 1], [], []>} : vector<64x32xbf16>, vector<32x32xbf16>, vector<64x32xf32> -> vector<64x32xf32>
    %97 = arith.truncf %96 : vector<64x32xf32> to vector<64x32xbf16>
    %c448_96 = arith.constant 448 : index
    %c0_97 = arith.constant 0 : index
    %98 = vector.load %arg15[%c448_96, %c0_97] : memref<512x32xbf16, #tpu.memory_space<vmem>>, vector<64x32xbf16>
    tpu.vector_store %arg15[%c448_96, %c0_97], %97 {strides = array<i32>} : memref<512x32xbf16, #tpu.memory_space<vmem>>, vector<64x32xbf16>,
    %c0_98 = arith.constant 0 : index
    %c0_99 = arith.constant 0 : index
    %99 = vector.load %arg1[%c0_98, %c0_99] : memref<64x512xbf16, #tpu.memory_space<vmem>>, vector<64x512xbf16>
    %c0_100 = arith.constant 0 : index
    %c0_101 = arith.constant 0 : index
    %100 = vector.load %arg15[%c0_100, %c0_101] : memref<512x32xbf16, #tpu.memory_space<vmem>>, vector<512x32xbf16>
    %cst_102 = arith.constant dense<0.000000e+00> : vector<64x32xf32>
    %101 = tpu.matmul %99, %100, %cst_102 {dimension_numbers = #tpu.dot_dimension_numbers<[1], [0], [0], [1], [0, 0, 1, 1], [], []>} : vector<64x512xbf16>, vector<512x32xbf16>, vector<64x32xf32> -> vector<64x32xf32>
    %102 = arith.addf %58, %101 : vector<64x32xf32>
    %cst_103 = arith.constant 0.000000e+00 : f32
    %103 = vector.broadcast %cst_103 : f32 to vector<64x32xf32>
    %104 = arith.maximumf %102, %103 : vector<64x32xf32>
    %105 = arith.truncf %104 : vector<64x32xf32> to vector<64x32xbf16>
    %c0_104 = arith.constant 0 : index
    %c0_105 = arith.constant 0 : index
    %106 = vector.load %arg12[%c0_104, %c0_105] : memref<32x32xbf16, #tpu.memory_space<vmem>>, vector<32x32xbf16>
    %cst_106 = arith.constant dense<0.000000e+00> : vector<64x32xf32>
    %107 = tpu.matmul %105, %106, %cst_106 {dimension_numbers = #tpu.dot_dimension_numbers<[1], [0], [0], [1], [0, 0, 1, 1], [], []>} : vector<64x32xbf16>, vector<32x32xbf16>, vector<64x32xf32> -> vector<64x32xf32>
    %c0_107 = arith.constant 0 : index
    %c0_108 = arith.constant 0 : index
    %108 = vector.load %arg13[%c0_107, %c0_108] : memref<1x32xf32, #tpu.memory_space<vmem>>, vector<1x32xf32>
    %109 = vector.broadcast %108 : vector<1x32xf32> to vector<64x32xf32>
    %110 = arith.addf %107, %109 : vector<64x32xf32>
    %c0_109 = arith.constant 0 : index
    %c0_110 = arith.constant 0 : index
    %c0_111 = arith.constant 0 : index
    %111 = vector.load %arg11[%c0_109, %c0_110, %c0_111] : memref<8x32x32xbf16, #tpu.memory_space<vmem>>, vector<1x32x32xbf16>
    %112 = vector.shape_cast %111 : vector<1x32x32xbf16> to vector<32x32xbf16>
    %cst_112 = arith.constant dense<0.000000e+00> : vector<64x32xf32>
    %113 = tpu.matmul %105, %112, %cst_112 {dimension_numbers = #tpu.dot_dimension_numbers<[1], [0], [0], [1], [0, 0, 1, 1], [], []>} : vector<64x32xbf16>, vector<32x32xbf16>, vector<64x32xf32> -> vector<64x32xf32>
    %114 = arith.truncf %113 : vector<64x32xf32> to vector<64x32xbf16>
    %c0_113 = arith.constant 0 : index
    %c0_114 = arith.constant 0 : index
    %115 = vector.load %arg15[%c0_113, %c0_114] : memref<512x32xbf16, #tpu.memory_space<vmem>>, vector<64x32xbf16>
    tpu.vector_store %arg15[%c0_113, %c0_114], %114 {strides = array<i32>} : memref<512x32xbf16, #tpu.memory_space<vmem>>, vector<64x32xbf16>,
    %c1_115 = arith.constant 1 : index
    %c0_116 = arith.constant 0 : index
    %c0_117 = arith.constant 0 : index
    %116 = vector.load %arg11[%c1_115, %c0_116, %c0_117] : memref<8x32x32xbf16, #tpu.memory_space<vmem>>, vector<1x32x32xbf16>
    %117 = vector.shape_cast %116 : vector<1x32x32xbf16> to vector<32x32xbf16>
    %cst_118 = arith.constant dense<0.000000e+00> : vector<64x32xf32>
    %118 = tpu.matmul %105, %117, %cst_118 {dimension_numbers = #tpu.dot_dimension_numbers<[1], [0], [0], [1], [0, 0, 1, 1], [], []>} : vector<64x32xbf16>, vector<32x32xbf16>, vector<64x32xf32> -> vector<64x32xf32>
    %119 = arith.truncf %118 : vector<64x32xf32> to vector<64x32xbf16>
    %c64_119 = arith.constant 64 : index
    %c0_120 = arith.constant 0 : index
    %120 = vector.load %arg15[%c64_119, %c0_120] : memref<512x32xbf16, #tpu.memory_space<vmem>>, vector<64x32xbf16>
    tpu.vector_store %arg15[%c64_119, %c0_120], %119 {strides = array<i32>} : memref<512x32xbf16, #tpu.memory_space<vmem>>, vector<64x32xbf16>,
    %c2_121 = arith.constant 2 : index
    %c0_122 = arith.constant 0 : index
    %c0_123 = arith.constant 0 : index
    %121 = vector.load %arg11[%c2_121, %c0_122, %c0_123] : memref<8x32x32xbf16, #tpu.memory_space<vmem>>, vector<1x32x32xbf16>
    %122 = vector.shape_cast %121 : vector<1x32x32xbf16> to vector<32x32xbf16>
    %cst_124 = arith.constant dense<0.000000e+00> : vector<64x32xf32>
    %123 = tpu.matmul %105, %122, %cst_124 {dimension_numbers = #tpu.dot_dimension_numbers<[1], [0], [0], [1], [0, 0, 1, 1], [], []>} : vector<64x32xbf16>, vector<32x32xbf16>, vector<64x32xf32> -> vector<64x32xf32>
    %124 = arith.truncf %123 : vector<64x32xf32> to vector<64x32xbf16>
    %c128_125 = arith.constant 128 : index
    %c0_126 = arith.constant 0 : index
    %125 = vector.load %arg15[%c128_125, %c0_126] : memref<512x32xbf16, #tpu.memory_space<vmem>>, vector<64x32xbf16>
    tpu.vector_store %arg15[%c128_125, %c0_126], %124 {strides = array<i32>} : memref<512x32xbf16, #tpu.memory_space<vmem>>, vector<64x32xbf16>,
    %c3_127 = arith.constant 3 : index
    %c0_128 = arith.constant 0 : index
    %c0_129 = arith.constant 0 : index
    %126 = vector.load %arg11[%c3_127, %c0_128, %c0_129] : memref<8x32x32xbf16, #tpu.memory_space<vmem>>, vector<1x32x32xbf16>
    %127 = vector.shape_cast %126 : vector<1x32x32xbf16> to vector<32x32xbf16>
    %cst_130 = arith.constant dense<0.000000e+00> : vector<64x32xf32>
    %128 = tpu.matmul %105, %127, %cst_130 {dimension_numbers = #tpu.dot_dimension_numbers<[1], [0], [0], [1], [0, 0, 1, 1], [], []>} : vector<64x32xbf16>, vector<32x32xbf16>, vector<64x32xf32> -> vector<64x32xf32>
    %129 = arith.truncf %128 : vector<64x32xf32> to vector<64x32xbf16>
    %c192_131 = arith.constant 192 : index
    %c0_132 = arith.constant 0 : index
    %130 = vector.load %arg15[%c192_131, %c0_132] : memref<512x32xbf16, #tpu.memory_space<vmem>>, vector<64x32xbf16>
    tpu.vector_store %arg15[%c192_131, %c0_132], %129 {strides = array<i32>} : memref<512x32xbf16, #tpu.memory_space<vmem>>, vector<64x32xbf16>,
    %c4_133 = arith.constant 4 : index
    %c0_134 = arith.constant 0 : index
    %c0_135 = arith.constant 0 : index
    %131 = vector.load %arg11[%c4_133, %c0_134, %c0_135] : memref<8x32x32xbf16, #tpu.memory_space<vmem>>, vector<1x32x32xbf16>
    %132 = vector.shape_cast %131 : vector<1x32x32xbf16> to vector<32x32xbf16>
    %cst_136 = arith.constant dense<0.000000e+00> : vector<64x32xf32>
    %133 = tpu.matmul %105, %132, %cst_136 {dimension_numbers = #tpu.dot_dimension_numbers<[1], [0], [0], [1], [0, 0, 1, 1], [], []>} : vector<64x32xbf16>, vector<32x32xbf16>, vector<64x32xf32> -> vector<64x32xf32>
    %134 = arith.truncf %133 : vector<64x32xf32> to vector<64x32xbf16>
    %c256_137 = arith.constant 256 : index
    %c0_138 = arith.constant 0 : index
    %135 = vector.load %arg15[%c256_137, %c0_138] : memref<512x32xbf16, #tpu.memory_space<vmem>>, vector<64x32xbf16>
    tpu.vector_store %arg15[%c256_137, %c0_138], %134 {strides = array<i32>} : memref<512x32xbf16, #tpu.memory_space<vmem>>, vector<64x32xbf16>,
    %c5_139 = arith.constant 5 : index
    %c0_140 = arith.constant 0 : index
    %c0_141 = arith.constant 0 : index
    %136 = vector.load %arg11[%c5_139, %c0_140, %c0_141] : memref<8x32x32xbf16, #tpu.memory_space<vmem>>, vector<1x32x32xbf16>
    %137 = vector.shape_cast %136 : vector<1x32x32xbf16> to vector<32x32xbf16>
    %cst_142 = arith.constant dense<0.000000e+00> : vector<64x32xf32>
    %138 = tpu.matmul %105, %137, %cst_142 {dimension_numbers = #tpu.dot_dimension_numbers<[1], [0], [0], [1], [0, 0, 1, 1], [], []>} : vector<64x32xbf16>, vector<32x32xbf16>, vector<64x32xf32> -> vector<64x32xf32>
    %139 = arith.truncf %138 : vector<64x32xf32> to vector<64x32xbf16>
    %c320_143 = arith.constant 320 : index
    %c0_144 = arith.constant 0 : index
    %140 = vector.load %arg15[%c320_143, %c0_144] : memref<512x32xbf16, #tpu.memory_space<vmem>>, vector<64x32xbf16>
    tpu.vector_store %arg15[%c320_143, %c0_144], %139 {strides = array<i32>} : memref<512x32xbf16, #tpu.memory_space<vmem>>, vector<64x32xbf16>,
    %c6_145 = arith.constant 6 : index
    %c0_146 = arith.constant 0 : index
    %c0_147 = arith.constant 0 : index
    %141 = vector.load %arg11[%c6_145, %c0_146, %c0_147] : memref<8x32x32xbf16, #tpu.memory_space<vmem>>, vector<1x32x32xbf16>
    %142 = vector.shape_cast %141 : vector<1x32x32xbf16> to vector<32x32xbf16>
    %cst_148 = arith.constant dense<0.000000e+00> : vector<64x32xf32>
    %143 = tpu.matmul %105, %142, %cst_148 {dimension_numbers = #tpu.dot_dimension_numbers<[1], [0], [0], [1], [0, 0, 1, 1], [], []>} : vector<64x32xbf16>, vector<32x32xbf16>, vector<64x32xf32> -> vector<64x32xf32>
    %144 = arith.truncf %143 : vector<64x32xf32> to vector<64x32xbf16>
    %c384_149 = arith.constant 384 : index
    %c0_150 = arith.constant 0 : index
    %145 = vector.load %arg15[%c384_149, %c0_150] : memref<512x32xbf16, #tpu.memory_space<vmem>>, vector<64x32xbf16>
    tpu.vector_store %arg15[%c384_149, %c0_150], %144 {strides = array<i32>} : memref<512x32xbf16, #tpu.memory_space<vmem>>, vector<64x32xbf16>,
    %c7_151 = arith.constant 7 : index
    %c0_152 = arith.constant 0 : index
    %c0_153 = arith.constant 0 : index
    %146 = vector.load %arg11[%c7_151, %c0_152, %c0_153] : memref<8x32x32xbf16, #tpu.memory_space<vmem>>, vector<1x32x32xbf16>
    %147 = vector.shape_cast %146 : vector<1x32x32xbf16> to vector<32x32xbf16>
    %cst_154 = arith.constant dense<0.000000e+00> : vector<64x32xf32>
    %148 = tpu.matmul %105, %147, %cst_154 {dimension_numbers = #tpu.dot_dimension_numbers<[1], [0], [0], [1], [0, 0, 1, 1], [], []>} : vector<64x32xbf16>, vector<32x32xbf16>, vector<64x32xf32> -> vector<64x32xf32>
    %149 = arith.truncf %148 : vector<64x32xf32> to vector<64x32xbf16>
    %c448_155 = arith.constant 448 : index
    %c0_156 = arith.constant 0 : index
    %150 = vector.load %arg15[%c448_155, %c0_156] : memref<512x32xbf16, #tpu.memory_space<vmem>>, vector<64x32xbf16>
    tpu.vector_store %arg15[%c448_155, %c0_156], %149 {strides = array<i32>} : memref<512x32xbf16, #tpu.memory_space<vmem>>, vector<64x32xbf16>,
    %c0_157 = arith.constant 0 : index
    %c0_158 = arith.constant 0 : index
    %151 = vector.load %arg1[%c0_157, %c0_158] : memref<64x512xbf16, #tpu.memory_space<vmem>>, vector<64x512xbf16>
    %c0_159 = arith.constant 0 : index
    %c0_160 = arith.constant 0 : index
    %152 = vector.load %arg15[%c0_159, %c0_160] : memref<512x32xbf16, #tpu.memory_space<vmem>>, vector<512x32xbf16>
    %cst_161 = arith.constant dense<0.000000e+00> : vector<64x32xf32>
    %153 = tpu.matmul %151, %152, %cst_161 {dimension_numbers = #tpu.dot_dimension_numbers<[1], [0], [0], [1], [0, 0, 1, 1], [], []>} : vector<64x512xbf16>, vector<512x32xbf16>, vector<64x32xf32> -> vector<64x32xf32>
    %154 = arith.addf %110, %153 : vector<64x32xf32>
    %cst_162 = arith.constant 0.000000e+00 : f32
    %155 = vector.broadcast %cst_162 : f32 to vector<64x32xf32>
    %156 = arith.maximumf %154, %155 : vector<64x32xf32>
    %cst_163 = arith.constant dense<0.000000e+00> : vector<32xf32>
    %157 = vector.multi_reduction <add>, %156, %cst_163 [0] : vector<64x32xf32> to vector<32xf32>
    %158 = vector.shape_cast %157 : vector<32xf32> to vector<1x32xf32>
    %cst_164 = arith.constant 6.400000e+01 : f32
    %159 = vector.broadcast %cst_164 : f32 to vector<1x32xf32>
    %160 = arith.divf %158, %159 : vector<1x32xf32>
    %161 = vector.broadcast %160 : vector<1x32xf32> to vector<64x32xf32>
    %162 = arith.subf %156, %161 : vector<64x32xf32>
    %163 = arith.mulf %162, %162 : vector<64x32xf32>
    %cst_165 = arith.constant dense<0.000000e+00> : vector<32xf32>
    %164 = vector.multi_reduction <add>, %163, %cst_165 [0] : vector<64x32xf32> to vector<32xf32>
    %165 = vector.shape_cast %164 : vector<32xf32> to vector<1x32xf32>
    %cst_166 = arith.constant 6.400000e+01 : f32
    %166 = vector.broadcast %cst_166 : f32 to vector<1x32xf32>
    %167 = arith.divf %165, %166 : vector<1x32xf32>
    %168 = vector.broadcast %160 : vector<1x32xf32> to vector<64x32xf32>
    %169 = arith.subf %156, %168 : vector<64x32xf32>
    %cst_167 = arith.constant 9.99999974E-6 : f32
    %170 = vector.broadcast %cst_167 : f32 to vector<1x32xf32>
    %171 = arith.addf %167, %170 : vector<1x32xf32>
    %172 = math.rsqrt %171 : vector<1x32xf32>
    %173 = vector.broadcast %172 : vector<1x32xf32> to vector<64x32xf32>
    %174 = arith.mulf %169, %173 : vector<64x32xf32>
    %c0_168 = arith.constant 0 : index
    %c0_169 = arith.constant 0 : index
    %175 = vector.load %arg3[%c0_168, %c0_169] : memref<1x32xf32, #tpu.memory_space<vmem>>, vector<1x32xf32>
    %176 = vector.broadcast %175 : vector<1x32xf32> to vector<64x32xf32>
    %177 = arith.mulf %174, %176 : vector<64x32xf32>
    %178 = arith.addf %104, %177 : vector<64x32xf32>
    %c0_170 = arith.constant 0 : index
    %c0_171 = arith.constant 0 : index
    %179 = vector.load %arg4[%c0_170, %c0_171] : memref<1x32xf32, #tpu.memory_space<vmem>>, vector<1x32xf32>
    %180 = vector.broadcast %179 : vector<1x32xf32> to vector<64x32xf32>
    %181 = arith.addf %178, %180 : vector<64x32xf32>
    %c0_172 = arith.constant 0 : index
    %c0_173 = arith.constant 0 : index
    %182 = vector.load %arg14[%c0_172, %c0_173] : memref<64x32xf32, #tpu.memory_space<vmem>>, vector<64x32xf32>
    tpu.vector_store %arg14[%c0_172, %c0_173], %181 {strides = array<i32>} : memref<64x32xf32, #tpu.memory_space<vmem>>, vector<64x32xf32>,
    return
  }
  func.func @transform_0(%arg0: i32) -> (i32, i32) {
    %c0_i32 = arith.constant 0 : i32
    %c0_i32_0 = arith.constant 0 : i32
    %c0_i32_1 = arith.constant 0 : i32
    return %c0_i32, %c0_i32_0 : i32, i32
  }
  func.func @transform_1(%arg0: i32) -> (i32, i32) {
    %c0_i32 = arith.constant 0 : i32
    %c0_i32_0 = arith.constant 0 : i32
    %c0_i32_1 = arith.constant 0 : i32
    return %c0_i32, %c0_i32_0 : i32, i32
  }
  func.func @transform_2(%arg0: i32) -> (i32, i32) {
    %c0_i32 = arith.constant 0 : i32
    %c0_i32_0 = arith.constant 0 : i32
    %c0_i32_1 = arith.constant 0 : i32
    return %c0_i32, %c0_i32_0 : i32, i32
  }
  func.func @transform_3(%arg0: i32) -> (i32, i32) {
    %c0_i32 = arith.constant 0 : i32
    %c0_i32_0 = arith.constant 0 : i32
    %c0_i32_1 = arith.constant 0 : i32
    return %c0_i32, %c0_i32_0 : i32, i32
  }
  func.func @transform_4(%arg0: i32) -> (i32, i32, i32) {
    %c0_i32 = arith.constant 0 : i32
    %c0_i32_0 = arith.constant 0 : i32
    %c0_i32_1 = arith.constant 0 : i32
    %c0_i32_2 = arith.constant 0 : i32
    return %c0_i32, %c0_i32_0, %c0_i32_1 : i32, i32, i32
  }
  func.func @transform_5(%arg0: i32) -> (i32, i32) {
    %c0_i32 = arith.constant 0 : i32
    %c0_i32_0 = arith.constant 0 : i32
    %c0_i32_1 = arith.constant 0 : i32
    return %c0_i32, %c0_i32_0 : i32, i32
  }
  func.func @transform_6(%arg0: i32) -> (i32, i32) {
    %c0_i32 = arith.constant 0 : i32
    %c0_i32_0 = arith.constant 0 : i32
    %c0_i32_1 = arith.constant 0 : i32
    return %c0_i32, %c0_i32_0 : i32, i32
  }
  func.func @transform_7(%arg0: i32) -> (i32, i32, i32) {
    %c0_i32 = arith.constant 0 : i32
    %c0_i32_0 = arith.constant 0 : i32
    %c0_i32_1 = arith.constant 0 : i32
    %c0_i32_2 = arith.constant 0 : i32
    return %c0_i32, %c0_i32_0, %c0_i32_1 : i32, i32, i32
  }
  func.func @transform_8(%arg0: i32) -> (i32, i32) {
    %c0_i32 = arith.constant 0 : i32
    %c0_i32_0 = arith.constant 0 : i32
    %c0_i32_1 = arith.constant 0 : i32
    return %c0_i32, %c0_i32_0 : i32, i32
  }
  func.func @transform_9(%arg0: i32) -> (i32, i32) {
    %c0_i32 = arith.constant 0 : i32
    %c0_i32_0 = arith.constant 0 : i32
    %c0_i32_1 = arith.constant 0 : i32
    return %c0_i32, %c0_i32_0 : i32, i32
  }
  func.func @transform_10(%arg0: i32) -> (i32, i32, i32) {
    %c0_i32 = arith.constant 0 : i32
    %c0_i32_0 = arith.constant 0 : i32
    %c0_i32_1 = arith.constant 0 : i32
    %c0_i32_2 = arith.constant 0 : i32
    return %c0_i32, %c0_i32_0, %c0_i32_1 : i32, i32, i32
  }
  func.func @transform_11(%arg0: i32) -> (i32, i32) {
    %c0_i32 = arith.constant 0 : i32
    %c0_i32_0 = arith.constant 0 : i32
    %c0_i32_1 = arith.constant 0 : i32
    return %c0_i32, %c0_i32_0 : i32, i32
  }
  func.func @transform_12(%arg0: i32) -> (i32, i32) {
    %c0_i32 = arith.constant 0 : i32
    %c0_i32_0 = arith.constant 0 : i32
    %c0_i32_1 = arith.constant 0 : i32
    return %c0_i32, %c0_i32_0 : i32, i32
  }
  func.func @transform_13(%arg0: i32) -> (i32, i32) {
    %c0_i32 = arith.constant 0 : i32
    %c0_i32_0 = arith.constant 0 : i32
    %c0_i32_1 = arith.constant 0 : i32
    return %c0_i32, %c0_i32_0 : i32, i32
  }
}

</mosaic_0001>

<llo_original>
// kernel: rgcn_forward.1
$region0: #{rgcn_forward.1}
  #allocation0 [shape = 'u32[]', space=smem, size = 0x4, offset = 0x4, fixed_abs, tag = 'smem constant byte address 0x4 - core index']
  #allocation1 [shape = 'u32[72,128]{1,0:T(1,128)}', space=vmem, size = 0x9000, scoped, tag = 'internal scratch']
  #allocation2 [shape = 'bf16[512,32]{1,0:T(8,128)(2,1)}', space=vmem, size = 0x20000, scoped, tag = 'scratch operand']
  %s0 = inlined_call_operand.vmem [shape: bf16[64,512], index: 0, kind: input, shape index: {}]
  %s1 = inlined_call_operand.vmem [shape: f32[64,32], index: 1, kind: input, shape index: {}]
  %s2 = inlined_call_operand.vmem [shape: f32[1,32], index: 2, kind: input, shape index: {}]
  %s3 = inlined_call_operand.vmem [shape: f32[1,32], index: 3, kind: input, shape index: {}]
  %s4 = inlined_call_operand.vmem [shape: bf16[8,32,32], index: 4, kind: input, shape index: {}]
  %s5 = inlined_call_operand.vmem [shape: bf16[32,32], index: 5, kind: input, shape index: {}]
  %s6 = inlined_call_operand.vmem [shape: f32[1,32], index: 6, kind: input, shape index: {}]
  %s7 = inlined_call_operand.vmem [shape: bf16[8,32,32], index: 7, kind: input, shape index: {}]
  %s8 = inlined_call_operand.vmem [shape: bf16[32,32], index: 8, kind: input, shape index: {}]
  %s9 = inlined_call_operand.vmem [shape: f32[1,32], index: 9, kind: input, shape index: {}]
  %s10 = inlined_call_operand.vmem [shape: bf16[8,32,32], index: 10, kind: input, shape index: {}]
  %s11 = inlined_call_operand.vmem [shape: bf16[32,32], index: 11, kind: input, shape index: {}]
  %s12 = inlined_call_operand.vmem [shape: f32[1,32], index: 12, kind: input, shape index: {}]
  %s13 = inlined_call_operand.vmem [shape: f32[64,32], index: 13, kind: output, shape index: {}]
  %s14 = sld [smem:[#allocation0]]
  $region62: #{rgcn_forward.1} parent=0
    _
  %s16 = ssub.s32 1, %s14
  %s17 = scalar_select 0, %s16, %s14
  // Predicated region
  $region2: #{rgcn_forward.1} parent=0 // pred_check
    _
  $region3: #{rgcn_forward.1} parent=0 // pred_check_branch
    %19 = sbr.rel (0) target = $region5
  $region4: #{rgcn_forward.1} parent=0 // pred_region
    _
  $region5: #{rgcn_forward.1} parent=0 // pred_fallthru
    _
  // Predicated region
  $region6: #{rgcn_forward.1} parent=0 // pred_check
    _
  $region7: #{rgcn_forward.1} parent=0 // pred_check_branch
    %21 = sbr.rel (0) target = $region9
  $region8: #{rgcn_forward.1} parent=0 // pred_region
    _
  $region9: #{rgcn_forward.1} parent=0 // pred_fallthru
    _
  // Predicated region
  $region10: #{rgcn_forward.1} parent=0 // pred_check
    _
  $region11: #{rgcn_forward.1} parent=0 // pred_check_branch
    %23 = sbr.rel (0) target = $region13
  $region12: #{rgcn_forward.1} parent=0 // pred_region
    _
  $region13: #{rgcn_forward.1} parent=0 // pred_fallthru
    _
  // Predicated region
  $region14: #{rgcn_forward.1} parent=0 // pred_check
    _
  $region15: #{rgcn_forward.1} parent=0 // pred_check_branch
    %25 = sbr.rel (0) target = $region17
  $region16: #{rgcn_forward.1} parent=0 // pred_region
    _
  $region17: #{rgcn_forward.1} parent=0 // pred_fallthru
    _
  // Predicated region
  $region18: #{rgcn_forward.1} parent=0 // pred_check
    _
  $region19: #{rgcn_forward.1} parent=0 // pred_check_branch
    %27 = sbr.rel (0) target = $region21
  $region20: #{rgcn_forward.1} parent=0 // pred_region
    _
  $region21: #{rgcn_forward.1} parent=0 // pred_fallthru
    _
  // Predicated region
  $region22: #{rgcn_forward.1} parent=0 // pred_check
    _
  $region23: #{rgcn_forward.1} parent=0 // pred_check_branch
    %29 = sbr.rel (0) target = $region25
  $region24: #{rgcn_forward.1} parent=0 // pred_region
    _
  $region25: #{rgcn_forward.1} parent=0 // pred_fallthru
    _
  // Predicated region
  $region26: #{rgcn_forward.1} parent=0 // pred_check
    _
  $region27: #{rgcn_forward.1} parent=0 // pred_check_branch
    %31 = sbr.rel (0) target = $region29
  $region28: #{rgcn_forward.1} parent=0 // pred_region
    _
  $region29: #{rgcn_forward.1} parent=0 // pred_fallthru
    _
  // Predicated region
  $region30: #{rgcn_forward.1} parent=0 // pred_check
    _
  $region31: #{rgcn_forward.1} parent=0 // pred_check_branch
    %33 = sbr.rel (0) target = $region33
  $region32: #{rgcn_forward.1} parent=0 // pred_region
    _
  $region33: #{rgcn_forward.1} parent=0 // pred_fallthru
    _
  // Predicated region
  $region34: #{rgcn_forward.1} parent=0 // pred_check
    _
  $region35: #{rgcn_forward.1} parent=0 // pred_check_branch
    %35 = sbr.rel (0) target = $region37
  $region36: #{rgcn_forward.1} parent=0 // pred_region
    _
  $region37: #{rgcn_forward.1} parent=0 // pred_fallthru
    _
  // Predicated region
  $region38: #{rgcn_forward.1} parent=0 // pred_check
    _
  $region39: #{rgcn_forward.1} parent=0 // pred_check_branch
    %37 = sbr.rel (0) target = $region41
  $region40: #{rgcn_forward.1} parent=0 // pred_region
    _
  $region41: #{rgcn_forward.1} parent=0 // pred_fallthru
    _
  // Predicated region
  $region42: #{rgcn_forward.1} parent=0 // pred_check
    _
  $region43: #{rgcn_forward.1} parent=0 // pred_check_branch
    %39 = sbr.rel (0) target = $region45
  $region44: #{rgcn_forward.1} parent=0 // pred_region
    _
  $region45: #{rgcn_forward.1} parent=0 // pred_fallthru
    _
  // Predicated region
  $region46: #{rgcn_forward.1} parent=0 // pred_check
    _
  $region47: #{rgcn_forward.1} parent=0 // pred_check_branch
    %41 = sbr.rel (0) target = $region49
  $region48: #{rgcn_forward.1} parent=0 // pred_region
    _
  $region49: #{rgcn_forward.1} parent=0 // pred_fallthru
    _
  // Predicated region
  $region50: #{rgcn_forward.1} parent=0 // pred_check
    _
  $region51: #{rgcn_forward.1} parent=0 // pred_check_branch
    %43 = sbr.rel (0) target = $region53
  $region52: #{rgcn_forward.1} parent=0 // pred_region
    _
  $region53: #{rgcn_forward.1} parent=0 // pred_fallthru
    _
  %v45 = vld [vmem:[%s1] sm:$0xff]
  %v46 = vld [vmem:[%s1 + $0x8] sm:$0xff]
  %v47 = vld [vmem:[%s1 + $0x10] sm:$0xff]
  %v48 = vld [vmem:[%s1 + $0x18] sm:$0xff]
  %v49 = vld [vmem:[%s1 + $0x20] sm:$0xff]
  %v50 = vld [vmem:[%s1 + $0x28] sm:$0xff]
  %v51 = vld [vmem:[%s1 + $0x30] sm:$0xff]
  %v52 = vld [vmem:[%s1 + $0x38] sm:$0xff]
  %v53 = vpack.c.bf16 %v46, %v45
  %v54 = vpack.c.bf16 %v48, %v47
  %v55 = vpack.c.bf16 %v50, %v49
  %v56 = vpack.c.bf16 %v52, %v51
  %v57 = vld [vmem:[%s5] sm:$0xf]
  %v58 = vld [vmem:[%s5 + $0x4] sm:$0xf]
  %v59 = vld [vmem:[%s5 + $0x8] sm:$0xf]
  %v60 = vld [vmem:[%s5 + $0xc] sm:$0xf]
  %v61 = vld [vmem:[%s6] sm:$0x1]
  %v63 = vperm.slane %v61, 0
  %v69 = vunpack.c.l.b16 %v57
  %v70 = vunpack.c.l.b16 %v58
  %v71 = vunpack.c.l.b16 %v59
  %v72 = vunpack.c.l.b16 %v60
  %v73 = vpack.c.b16 %v70, %v69
  %v74 = vpack.c.b16 %v72, %v71
  %vm77 = vcmask 261120
  %v79 = vsel %vm77, %v53, 0
  %v82 = vsel %vm77, %v54, 0
  %v85 = vsel %vm77, %v55, 0
  %v88 = vsel %vm77, %v56, 0
  %90 = vmatpush.bf16.msra.mxu0 0
  %91 = vmatpush.bf16.msra.mxu0 0
  %92 = vmatpush.bf16.msra.mxu0 0
  %93 = vmatpush.bf16.msra.mxu0 0
  %94 = vmatpush.bf16.msra.mxu0 0
  %95 = vmatpush.bf16.msra.mxu0 0
  %96 = vmatpush.bf16.msra.mxu0 %v74
  %97 = vmatpush.bf16.msra.mxu0 %v73
  %98 = vmatmul.bf16.gmra.mxu0 %v79
  %v99 = vpop.f32.mrf.mxu0
  %v100 = vadd.f32 %v63, %v99
  %v101 = vpop.f32.mrf.mxu0
  %v102 = vadd.f32 %v63, %v101
  %103 = vmatmul.bf16.gmra.mxu0 %v82
  %v104 = vpop.f32.mrf.mxu0
  %v105 = vadd.f32 %v63, %v104
  %v106 = vpop.f32.mrf.mxu0
  %v107 = vadd.f32 %v63, %v106
  %108 = vmatmul.bf16.gmra.mxu0 %v85
  %v109 = vpop.f32.mrf.mxu0
  %v110 = vadd.f32 %v63, %v109
  %v111 = vpop.f32.mrf.mxu0
  %v112 = vadd.f32 %v63, %v111
  %113 = vmatmul.bf16.gmra.mxu0 %v88
  %v114 = vpop.f32.mrf.mxu0
  %v115 = vadd.f32 %v63, %v114
  %v116 = vpop.f32.mrf.mxu0
  %v117 = vadd.f32 %v63, %v116
  %118 = vdwg.mxu0
  %v119 = vld [vmem:[%s4] sm:$0xf]
  %v120 = vld [vmem:[%s4 + $0x4] sm:$0xf]
  %v121 = vld [vmem:[%s4 + $0x8] sm:$0xf]
  %v122 = vld [vmem:[%s4 + $0xc] sm:$0xf]
  %v127 = vunpack.c.l.b16 %v119
  %v128 = vunpack.c.l.b16 %v120
  %v129 = vunpack.c.l.b16 %v121
  %v130 = vunpack.c.l.b16 %v122
  %v131 = vpack.c.b16 %v128, %v127
  %v132 = vpack.c.b16 %v130, %v129
  %135 = vmatpush.bf16.msra.mxu0 0
  %136 = vmatpush.bf16.msra.mxu0 0
  %137 = vmatpush.bf16.msra.mxu0 0
  %138 = vmatpush.bf16.msra.mxu0 0
  %139 = vmatpush.bf16.msra.mxu0 0
  %140 = vmatpush.bf16.msra.mxu0 0
  %141 = vmatpush.bf16.msra.mxu0 %v132
  %142 = vmatpush.bf16.msra.mxu0 %v131
  %143 = vmatmul.bf16.gmra.mxu0 %v79
  %v144 = vpop.f32.mrf.mxu0
  %v145 = vadd.f32 0.0, %v144
  %v146 = vpop.f32.mrf.mxu0
  %v147 = vadd.f32 0.0, %v146
  %148 = vmatmul.bf16.gmra.mxu0 %v82
  %v149 = vpop.f32.mrf.mxu0
  %v150 = vadd.f32 0.0, %v149
  %v151 = vpop.f32.mrf.mxu0
  %v152 = vadd.f32 0.0, %v151
  %153 = vmatmul.bf16.gmra.mxu0 %v85
  %v154 = vpop.f32.mrf.mxu0
  %v155 = vadd.f32 0.0, %v154
  %v156 = vpop.f32.mrf.mxu0
  %v157 = vadd.f32 0.0, %v156
  %158 = vmatmul.bf16.gmra.mxu0 %v88
  %v159 = vpop.f32.mrf.mxu0
  %v160 = vadd.f32 0.0, %v159
  %v161 = vpop.f32.mrf.mxu0
  %v162 = vadd.f32 0.0, %v161
  %163 = vdwg.mxu0
  %v164 = vpack.c.bf16 %v145, %v145
  %v165 = vpack.c.bf16 %v147, %v147
  %v166 = vpack.c.bf16 %v150, %v150
  %v167 = vpack.c.bf16 %v152, %v152
  %v168 = vpack.c.bf16 %v155, %v155
  %v169 = vpack.c.bf16 %v157, %v157
  %v170 = vpack.c.bf16 %v160, %v160
  %v171 = vpack.c.bf16 %v162, %v162
  %vm172 = vcmask 257024
  %173 = vst.msk [vmem:[#allocation2] sm:$0xf] %vm172, %v164
  %174 = vst.msk [vmem:[#allocation2 + $0x4] sm:$0xf] %vm172, %v165
  %175 = vst.msk [vmem:[#allocation2 + $0x8] sm:$0xf] %vm172, %v166
  %176 = vst.msk [vmem:[#allocation2 + $0xc] sm:$0xf] %vm172, %v167
  %177 = vst.msk [vmem:[#allocation2 + $0x10] sm:$0xf] %vm172, %v168
  %178 = vst.msk [vmem:[#allocation2 + $0x14] sm:$0xf] %vm172, %v169
  %179 = vst.msk [vmem:[#allocation2 + $0x18] sm:$0xf] %vm172, %v170
  %180 = vst.msk [vmem:[#allocation2 + $0x1c] sm:$0xf] %vm172, %v171
  %s181 = scalar_lea.vmem %s4, 16
  %v182 = vld [vmem:[%s181] sm:$0xf]
  %v183 = vld [vmem:[%s181 + $0x4] sm:$0xf]
  %v184 = vld [vmem:[%s181 + $0x8] sm:$0xf]
  %v185 = vld [vmem:[%s181 + $0xc] sm:$0xf]
  %v190 = vunpack.c.l.b16 %v182
  %v191 = vunpack.c.l.b16 %v183
  %v192 = vunpack.c.l.b16 %v184
  %v193 = vunpack.c.l.b16 %v185
  %v194 = vpack.c.b16 %v191, %v190
  %v195 = vpack.c.b16 %v193, %v192
  %198 = vmatpush.bf16.msra.mxu0 0
  %199 = vmatpush.bf16.msra.mxu0 0
  %200 = vmatpush.bf16.msra.mxu0 0
  %201 = vmatpush.bf16.msra.mxu0 0
  %202 = vmatpush.bf16.msra.mxu0 0
  %203 = vmatpush.bf16.msra.mxu0 0
  %204 = vmatpush.bf16.msra.mxu0 %v195
  %205 = vmatpush.bf16.msra.mxu0 %v194
  %206 = vmatmul.bf16.gmra.mxu0 %v79
  %v207 = vpop.f32.mrf.mxu0
  %v208 = vadd.f32 0.0, %v207
  %v209 = vpop.f32.mrf.mxu0
  %v210 = vadd.f32 0.0, %v209
  %211 = vmatmul.bf16.gmra.mxu0 %v82
  %v212 = vpop.f32.mrf.mxu0
  %v213 = vadd.f32 0.0, %v212
  %v214 = vpop.f32.mrf.mxu0
  %v215 = vadd.f32 0.0, %v214
  %216 = vmatmul.bf16.gmra.mxu0 %v85
  %v217 = vpop.f32.mrf.mxu0
  %v218 = vadd.f32 0.0, %v217
  %v219 = vpop.f32.mrf.mxu0
  %v220 = vadd.f32 0.0, %v219
  %221 = vmatmul.bf16.gmra.mxu0 %v88
  %v222 = vpop.f32.mrf.mxu0
  %v223 = vadd.f32 0.0, %v222
  %v224 = vpop.f32.mrf.mxu0
  %v225 = vadd.f32 0.0, %v224
  %226 = vdwg.mxu0
  %v227 = vpack.c.bf16 %v208, %v208
  %v228 = vpack.c.bf16 %v210, %v210
  %v229 = vpack.c.bf16 %v213, %v213
  %v230 = vpack.c.bf16 %v215, %v215
  %v231 = vpack.c.bf16 %v218, %v218
  %v232 = vpack.c.bf16 %v220, %v220
  %v233 = vpack.c.bf16 %v223, %v223
  %v234 = vpack.c.bf16 %v225, %v225
  %235 = vst.msk [vmem:[#allocation2 + $0x20] sm:$0xf] %vm172, %v227
  %236 = vst.msk [vmem:[#allocation2 + $0x24] sm:$0xf] %vm172, %v228
  %237 = vst.msk [vmem:[#allocation2 + $0x28] sm:$0xf] %vm172, %v229
  %238 = vst.msk [vmem:[#allocation2 + $0x2c] sm:$0xf] %vm172, %v230
  %239 = vst.msk [vmem:[#allocation2 + $0x30] sm:$0xf] %vm172, %v231
  %240 = vst.msk [vmem:[#allocation2 + $0x34] sm:$0xf] %vm172, %v232
  %241 = vst.msk [vmem:[#allocation2 + $0x38] sm:$0xf] %vm172, %v233
  %242 = vst.msk [vmem:[#allocation2 + $0x3c] sm:$0xf] %vm172, %v234
  %s243 = scalar_lea.vmem %s4, 32
  %v244 = vld [vmem:[%s243] sm:$0xf]
  %v245 = vld [vmem:[%s243 + $0x4] sm:$0xf]
  %v246 = vld [vmem:[%s243 + $0x8] sm:$0xf]
  %v247 = vld [vmem:[%s243 + $0xc] sm:$0xf]
  %v252 = vunpack.c.l.b16 %v244
  %v253 = vunpack.c.l.b16 %v245
  %v254 = vunpack.c.l.b16 %v246
  %v255 = vunpack.c.l.b16 %v247
  %v256 = vpack.c.b16 %v253, %v252
  %v257 = vpack.c.b16 %v255, %v254
  %260 = vmatpush.bf16.msra.mxu0 0
  %261 = vmatpush.bf16.msra.mxu0 0
  %262 = vmatpush.bf16.msra.mxu0 0
  %263 = vmatpush.bf16.msra.mxu0 0
  %264 = vmatpush.bf16.msra.mxu0 0
  %265 = vmatpush.bf16.msra.mxu0 0
  %266 = vmatpush.bf16.msra.mxu0 %v257
  %267 = vmatpush.bf16.msra.mxu0 %v256
  %268 = vmatmul.bf16.gmra.mxu0 %v79
  %v269 = vpop.f32.mrf.mxu0
  %v270 = vadd.f32 0.0, %v269
  %v271 = vpop.f32.mrf.mxu0
  %v272 = vadd.f32 0.0, %v271
  %273 = vmatmul.bf16.gmra.mxu0 %v82
  %v274 = vpop.f32.mrf.mxu0
  %v275 = vadd.f32 0.0, %v274
  %v276 = vpop.f32.mrf.mxu0
  %v277 = vadd.f32 0.0, %v276
  %278 = vmatmul.bf16.gmra.mxu0 %v85
  %v279 = vpop.f32.mrf.mxu0
  %v280 = vadd.f32 0.0, %v279
  %v281 = vpop.f32.mrf.mxu0
  %v282 = vadd.f32 0.0, %v281
  %283 = vmatmul.bf16.gmra.mxu0 %v88
  %v284 = vpop.f32.mrf.mxu0
  %v285 = vadd.f32 0.0, %v284
  %v286 = vpop.f32.mrf.mxu0
  %v287 = vadd.f32 0.0, %v286
  %288 = vdwg.mxu0
  %v289 = vpack.c.bf16 %v270, %v270
  %v290 = vpack.c.bf16 %v272, %v272
  %v291 = vpack.c.bf16 %v275, %v275
  %v292 = vpack.c.bf16 %v277, %v277
  %v293 = vpack.c.bf16 %v280, %v280
  %v294 = vpack.c.bf16 %v282, %v282
  %v295 = vpack.c.bf16 %v285, %v285
  %v296 = vpack.c.bf16 %v287, %v287
  %297 = vst.msk [vmem:[#allocation2 + $0x40] sm:$0xf] %vm172, %v289
  %298 = vst.msk [vmem:[#allocation2 + $0x44] sm:$0xf] %vm172, %v290
  %299 = vst.msk [vmem:[#allocation2 + $0x48] sm:$0xf] %vm172, %v291
  %300 = vst.msk [vmem:[#allocation2 + $0x4c] sm:$0xf] %vm172, %v292
  %301 = vst.msk [vmem:[#allocation2 + $0x50] sm:$0xf] %vm172, %v293
  %302 = vst.msk [vmem:[#allocation2 + $0x54] sm:$0xf] %vm172, %v294
  %303 = vst.msk [vmem:[#allocation2 + $0x58] sm:$0xf] %vm172, %v295
  %304 = vst.msk [vmem:[#allocation2 + $0x5c] sm:$0xf] %vm172, %v296
  %s305 = scalar_lea.vmem %s4, 48
  %v306 = vld [vmem:[%s305] sm:$0xf]
  %v307 = vld [vmem:[%s305 + $0x4] sm:$0xf]
  %v308 = vld [vmem:[%s305 + $0x8] sm:$0xf]
  %v309 = vld [vmem:[%s305 + $0xc] sm:$0xf]
  %v314 = vunpack.c.l.b16 %v306
  %v315 = vunpack.c.l.b16 %v307
  %v316 = vunpack.c.l.b16 %v308
  %v317 = vunpack.c.l.b16 %v309
  %v318 = vpack.c.b16 %v315, %v314
  %v319 = vpack.c.b16 %v317, %v316
  %322 = vmatpush.bf16.msra.mxu0 0
  %323 = vmatpush.bf16.msra.mxu0 0
  %324 = vmatpush.bf16.msra.mxu0 0
  %325 = vmatpush.bf16.msra.mxu0 0
  %326 = vmatpush.bf16.msra.mxu0 0
  %327 = vmatpush.bf16.msra.mxu0 0
  %328 = vmatpush.bf16.msra.mxu0 %v319
  %329 = vmatpush.bf16.msra.mxu0 %v318
  %330 = vmatmul.bf16.gmra.mxu0 %v79
  %v331 = vpop.f32.mrf.mxu0
  %v332 = vadd.f32 0.0, %v331
  %v333 = vpop.f32.mrf.mxu0
  %v334 = vadd.f32 0.0, %v333
  %335 = vmatmul.bf16.gmra.mxu0 %v82
  %v336 = vpop.f32.mrf.mxu0
  %v337 = vadd.f32 0.0, %v336
  %v338 = vpop.f32.mrf.mxu0
  %v339 = vadd.f32 0.0, %v338
  %340 = vmatmul.bf16.gmra.mxu0 %v85
  %v341 = vpop.f32.mrf.mxu0
  %v342 = vadd.f32 0.0, %v341
  %v343 = vpop.f32.mrf.mxu0
  %v344 = vadd.f32 0.0, %v343
  %345 = vmatmul.bf16.gmra.mxu0 %v88
  %v346 = vpop.f32.mrf.mxu0
  %v347 = vadd.f32 0.0, %v346
  %v348 = vpop.f32.mrf.mxu0
  %v349 = vadd.f32 0.0, %v348
  %350 = vdwg.mxu0
  %v351 = vpack.c.bf16 %v332, %v332
  %v352 = vpack.c.bf16 %v334, %v334
  %v353 = vpack.c.bf16 %v337, %v337
  %v354 = vpack.c.bf16 %v339, %v339
  %v355 = vpack.c.bf16 %v342, %v342
  %v356 = vpack.c.bf16 %v344, %v344
  %v357 = vpack.c.bf16 %v347, %v347
  %v358 = vpack.c.bf16 %v349, %v349
  %359 = vst.msk [vmem:[#allocation2 + $0x60] sm:$0xf] %vm172, %v351
  %360 = vst.msk [vmem:[#allocation2 + $0x64] sm:$0xf] %vm172, %v352
  %361 = vst.msk [vmem:[#allocation2 + $0x68] sm:$0xf] %vm172, %v353
  %362 = vst.msk [vmem:[#allocation2 + $0x6c] sm:$0xf] %vm172, %v354
  %363 = vst.msk [vmem:[#allocation2 + $0x70] sm:$0xf] %vm172, %v355
  %364 = vst.msk [vmem:[#allocation2 + $0x74] sm:$0xf] %vm172, %v356
  %365 = vst.msk [vmem:[#allocation2 + $0x78] sm:$0xf] %vm172, %v357
  %366 = vst.msk [vmem:[#allocation2 + $0x7c] sm:$0xf] %vm172, %v358
  %s367 = scalar_lea.vmem %s4, 64
  %v368 = vld [vmem:[%s367] sm:$0xf]
  %v369 = vld [vmem:[%s367 + $0x4] sm:$0xf]
  %v370 = vld [vmem:[%s367 + $0x8] sm:$0xf]
  %v371 = vld [vmem:[%s367 + $0xc] sm:$0xf]
  %v376 = vunpack.c.l.b16 %v368
  %v377 = vunpack.c.l.b16 %v369
  %v378 = vunpack.c.l.b16 %v370
  %v379 = vunpack.c.l.b16 %v371
  %v380 = vpack.c.b16 %v377, %v376
  %v381 = vpack.c.b16 %v379, %v378
  %384 = vmatpush.bf16.msra.mxu0 0
  %385 = vmatpush.bf16.msra.mxu0 0
  %386 = vmatpush.bf16.msra.mxu0 0
  %387 = vmatpush.bf16.msra.mxu0 0
  %388 = vmatpush.bf16.msra.mxu0 0
  %389 = vmatpush.bf16.msra.mxu0 0
  %390 = vmatpush.bf16.msra.mxu0 %v381
  %391 = vmatpush.bf16.msra.mxu0 %v380
  %392 = vmatmul.bf16.gmra.mxu0 %v79
  %v393 = vpop.f32.mrf.mxu0
  %v394 = vadd.f32 0.0, %v393
  %v395 = vpop.f32.mrf.mxu0
  %v396 = vadd.f32 0.0, %v395
  %397 = vmatmul.bf16.gmra.mxu0 %v82
  %v398 = vpop.f32.mrf.mxu0
  %v399 = vadd.f32 0.0, %v398
  %v400 = vpop.f32.mrf.mxu0
  %v401 = vadd.f32 0.0, %v400
  %402 = vmatmul.bf16.gmra.mxu0 %v85
  %v403 = vpop.f32.mrf.mxu0
  %v404 = vadd.f32 0.0, %v403
  %v405 = vpop.f32.mrf.mxu0
  %v406 = vadd.f32 0.0, %v405
  %407 = vmatmul.bf16.gmra.mxu0 %v88
  %v408 = vpop.f32.mrf.mxu0
  %v409 = vadd.f32 0.0, %v408
  %v410 = vpop.f32.mrf.mxu0
  %v411 = vadd.f32 0.0, %v410
  %412 = vdwg.mxu0
  %v413 = vpack.c.bf16 %v394, %v394
  %v414 = vpack.c.bf16 %v396, %v396
  %v415 = vpack.c.bf16 %v399, %v399
  %v416 = vpack.c.bf16 %v401, %v401
  %v417 = vpack.c.bf16 %v404, %v404
  %v418 = vpack.c.bf16 %v406, %v406
  %v419 = vpack.c.bf16 %v409, %v409
  %v420 = vpack.c.bf16 %v411, %v411
  %421 = vst.msk [vmem:[#allocation2 + $0x80] sm:$0xf] %vm172, %v413
  %422 = vst.msk [vmem:[#allocation2 + $0x84] sm:$0xf] %vm172, %v414
  %423 = vst.msk [vmem:[#allocation2 + $0x88] sm:$0xf] %vm172, %v415
  %424 = vst.msk [vmem:[#allocation2 + $0x8c] sm:$0xf] %vm172, %v416
  %425 = vst.msk [vmem:[#allocation2 + $0x90] sm:$0xf] %vm172, %v417
  %426 = vst.msk [vmem:[#allocation2 + $0x94] sm:$0xf] %vm172, %v418
  %427 = vst.msk [vmem:[#allocation2 + $0x98] sm:$0xf] %vm172, %v419
  %428 = vst.msk [vmem:[#allocation2 + $0x9c] sm:$0xf] %vm172, %v420
  %s429 = scalar_lea.vmem %s4, 80
  %v430 = vld [vmem:[%s429] sm:$0xf]
  %v431 = vld [vmem:[%s429 + $0x4] sm:$0xf]
  %v432 = vld [vmem:[%s429 + $0x8] sm:$0xf]
  %v433 = vld [vmem:[%s429 + $0xc] sm:$0xf]
  %v438 = vunpack.c.l.b16 %v430
  %v439 = vunpack.c.l.b16 %v431
  %v440 = vunpack.c.l.b16 %v432
  %v441 = vunpack.c.l.b16 %v433
  %v442 = vpack.c.b16 %v439, %v438
  %v443 = vpack.c.b16 %v441, %v440
  %446 = vmatpush.bf16.msra.mxu0 0
  %447 = vmatpush.bf16.msra.mxu0 0
  %448 = vmatpush.bf16.msra.mxu0 0
  %449 = vmatpush.bf16.msra.mxu0 0
  %450 = vmatpush.bf16.msra.mxu0 0
  %451 = vmatpush.bf16.msra.mxu0 0
  %452 = vmatpush.bf16.msra.mxu0 %v443
  %453 = vmatpush.bf16.msra.mxu0 %v442
  %454 = vmatmul.bf16.gmra.mxu0 %v79
  %v455 = vpop.f32.mrf.mxu0
  %v456 = vadd.f32 0.0, %v455
  %v457 = vpop.f32.mrf.mxu0
  %v458 = vadd.f32 0.0, %v457
  %459 = vmatmul.bf16.gmra.mxu0 %v82
  %v460 = vpop.f32.mrf.mxu0
  %v461 = vadd.f32 0.0, %v460
  %v462 = vpop.f32.mrf.mxu0
  %v463 = vadd.f32 0.0, %v462
  %464 = vmatmul.bf16.gmra.mxu0 %v85
  %v465 = vpop.f32.mrf.mxu0
  %v466 = vadd.f32 0.0, %v465
  %v467 = vpop.f32.mrf.mxu0
  %v468 = vadd.f32 0.0, %v467
  %469 = vmatmul.bf16.gmra.mxu0 %v88
  %v470 = vpop.f32.mrf.mxu0
  %v471 = vadd.f32 0.0, %v470
  %v472 = vpop.f32.mrf.mxu0
  %v473 = vadd.f32 0.0, %v472
  %474 = vdwg.mxu0
  %v475 = vpack.c.bf16 %v456, %v456
  %v476 = vpack.c.bf16 %v458, %v458
  %v477 = vpack.c.bf16 %v461, %v461
  %v478 = vpack.c.bf16 %v463, %v463
  %v479 = vpack.c.bf16 %v466, %v466
  %v480 = vpack.c.bf16 %v468, %v468
  %v481 = vpack.c.bf16 %v471, %v471
  %v482 = vpack.c.bf16 %v473, %v473
  %483 = vst.msk [vmem:[#allocation2 + $0xa0] sm:$0xf] %vm172, %v475
  %484 = vst.msk [vmem:[#allocation2 + $0xa4] sm:$0xf] %vm172, %v476
  %485 = vst.msk [vmem:[#allocation2 + $0xa8] sm:$0xf] %vm172, %v477
  %486 = vst.msk [vmem:[#allocation2 + $0xac] sm:$0xf] %vm172, %v478
  %487 = vst.msk [vmem:[#allocation2 + $0xb0] sm:$0xf] %vm172, %v479
  %488 = vst.msk [vmem:[#allocation2 + $0xb4] sm:$0xf] %vm172, %v480
  %489 = vst.msk [vmem:[#allocation2 + $0xb8] sm:$0xf] %vm172, %v481
  %490 = vst.msk [vmem:[#allocation2 + $0xbc] sm:$0xf] %vm172, %v482
  %s491 = scalar_lea.vmem %s4, 96
  %v492 = vld [vmem:[%s491] sm:$0xf]
  %v493 = vld [vmem:[%s491 + $0x4] sm:$0xf]
  %v494 = vld [vmem:[%s491 + $0x8] sm:$0xf]
  %v495 = vld [vmem:[%s491 + $0xc] sm:$0xf]
  %v500 = vunpack.c.l.b16 %v492
  %v501 = vunpack.c.l.b16 %v493
  %v502 = vunpack.c.l.b16 %v494
  %v503 = vunpack.c.l.b16 %v495
  %v504 = vpack.c.b16 %v501, %v500
  %v505 = vpack.c.b16 %v503, %v502
  %508 = vmatpush.bf16.msra.mxu0 0
  %509 = vmatpush.bf16.msra.mxu0 0
  %510 = vmatpush.bf16.msra.mxu0 0
  %511 = vmatpush.bf16.msra.mxu0 0
  %512 = vmatpush.bf16.msra.mxu0 0
  %513 = vmatpush.bf16.msra.mxu0 0
  %514 = vmatpush.bf16.msra.mxu0 %v505
  %515 = vmatpush.bf16.msra.mxu0 %v504
  %516 = vmatmul.bf16.gmra.mxu0 %v79
  %v517 = vpop.f32.mrf.mxu0
  %v518 = vadd.f32 0.0, %v517
  %v519 = vpop.f32.mrf.mxu0
  %v520 = vadd.f32 0.0, %v519
  %521 = vmatmul.bf16.gmra.mxu0 %v82
  %v522 = vpop.f32.mrf.mxu0
  %v523 = vadd.f32 0.0, %v522
  %v524 = vpop.f32.mrf.mxu0
  %v525 = vadd.f32 0.0, %v524
  %526 = vmatmul.bf16.gmra.mxu0 %v85
  %v527 = vpop.f32.mrf.mxu0
  %v528 = vadd.f32 0.0, %v527
  %v529 = vpop.f32.mrf.mxu0
  %v530 = vadd.f32 0.0, %v529
  %531 = vmatmul.bf16.gmra.mxu0 %v88
  %v532 = vpop.f32.mrf.mxu0
  %v533 = vadd.f32 0.0, %v532
  %v534 = vpop.f32.mrf.mxu0
  %v535 = vadd.f32 0.0, %v534
  %536 = vdwg.mxu0
  %v537 = vpack.c.bf16 %v518, %v518
  %v538 = vpack.c.bf16 %v520, %v520
  %v539 = vpack.c.bf16 %v523, %v523
  %v540 = vpack.c.bf16 %v525, %v525
  %v541 = vpack.c.bf16 %v528, %v528
  %v542 = vpack.c.bf16 %v530, %v530
  %v543 = vpack.c.bf16 %v533, %v533
  %v544 = vpack.c.bf16 %v535, %v535
  %545 = vst.msk [vmem:[#allocation2 + $0xc0] sm:$0xf] %vm172, %v537
  %546 = vst.msk [vmem:[#allocation2 + $0xc4] sm:$0xf] %vm172, %v538
  %547 = vst.msk [vmem:[#allocation2 + $0xc8] sm:$0xf] %vm172, %v539
  %548 = vst.msk [vmem:[#allocation2 + $0xcc] sm:$0xf] %vm172, %v540
  %549 = vst.msk [vmem:[#allocation2 + $0xd0] sm:$0xf] %vm172, %v541
  %550 = vst.msk [vmem:[#allocation2 + $0xd4] sm:$0xf] %vm172, %v542
  %551 = vst.msk [vmem:[#allocation2 + $0xd8] sm:$0xf] %vm172, %v543
  %552 = vst.msk [vmem:[#allocation2 + $0xdc] sm:$0xf] %vm172, %v544
  %s553 = scalar_lea.vmem %s4, 112
  %v554 = vld [vmem:[%s553] sm:$0xf]
  %v555 = vld [vmem:[%s553 + $0x4] sm:$0xf]
  %v556 = vld [vmem:[%s553 + $0x8] sm:$0xf]
  %v557 = vld [vmem:[%s553 + $0xc] sm:$0xf]
  %v562 = vunpack.c.l.b16 %v554
  %v563 = vunpack.c.l.b16 %v555
  %v564 = vunpack.c.l.b16 %v556
  %v565 = vunpack.c.l.b16 %v557
  %v566 = vpack.c.b16 %v563, %v562
  %v567 = vpack.c.b16 %v565, %v564
  %570 = vmatpush.bf16.msra.mxu0 0
  %571 = vmatpush.bf16.msra.mxu0 0
  %572 = vmatpush.bf16.msra.mxu0 0
  %573 = vmatpush.bf16.msra.mxu0 0
  %574 = vmatpush.bf16.msra.mxu0 0
  %575 = vmatpush.bf16.msra.mxu0 0
  %576 = vmatpush.bf16.msra.mxu0 %v567
  %577 = vmatpush.bf16.msra.mxu0 %v566
  %578 = vmatmul.bf16.gmra.mxu0 %v79
  %v579 = vpop.f32.mrf.mxu0
  %v580 = vadd.f32 0.0, %v579
  %v581 = vpop.f32.mrf.mxu0
  %v582 = vadd.f32 0.0, %v581
  %583 = vmatmul.bf16.gmra.mxu0 %v82
  %v584 = vpop.f32.mrf.mxu0
  %v585 = vadd.f32 0.0, %v584
  %v586 = vpop.f32.mrf.mxu0
  %v587 = vadd.f32 0.0, %v586
  %588 = vmatmul.bf16.gmra.mxu0 %v85
  %v589 = vpop.f32.mrf.mxu0
  %v590 = vadd.f32 0.0, %v589
  %v591 = vpop.f32.mrf.mxu0
  %v592 = vadd.f32 0.0, %v591
  %593 = vmatmul.bf16.gmra.mxu0 %v88
  %v594 = vpop.f32.mrf.mxu0
  %v595 = vadd.f32 0.0, %v594
  %v596 = vpop.f32.mrf.mxu0
  %v597 = vadd.f32 0.0, %v596
  %598 = vdwg.mxu0
  %v599 = vpack.c.bf16 %v580, %v580
  %v600 = vpack.c.bf16 %v582, %v582
  %v601 = vpack.c.bf16 %v585, %v585
  %v602 = vpack.c.bf16 %v587, %v587
  %v603 = vpack.c.bf16 %v590, %v590
  %v604 = vpack.c.bf16 %v592, %v592
  %v605 = vpack.c.bf16 %v595, %v595
  %v606 = vpack.c.bf16 %v597, %v597
  %607 = vst.msk [vmem:[#allocation2 + $0xe0] sm:$0xf] %vm172, %v599
  %608 = vst.msk [vmem:[#allocation2 + $0xe4] sm:$0xf] %vm172, %v600
  %609 = vst.msk [vmem:[#allocation2 + $0xe8] sm:$0xf] %vm172, %v601
  %610 = vst.msk [vmem:[#allocation2 + $0xec] sm:$0xf] %vm172, %v602
  %611 = vst.msk [vmem:[#allocation2 + $0xf0] sm:$0xf] %vm172, %v603
  %612 = vst.msk [vmem:[#allocation2 + $0xf4] sm:$0xf] %vm172, %v604
  %613 = vst.msk [vmem:[#allocation2 + $0xf8] sm:$0xf] %vm172, %v605
  %614 = vst.msk [vmem:[#allocation2 + $0xfc] sm:$0xf] %vm172, %v606
  %v615 = vld [vmem:[%s0] sm:$0xff]
  %v616 = vld [vmem:[%s0 + $0x8] sm:$0xff]
  %v617 = vld [vmem:[%s0 + $0x10] sm:$0xff]
  %v618 = vld [vmem:[%s0 + $0x18] sm:$0xff]
  %v619 = vld [vmem:[%s0 + $0x20] sm:$0xff]
  %v620 = vld [vmem:[%s0 + $0x28] sm:$0xff]
  %v621 = vld [vmem:[%s0 + $0x30] sm:$0xff]
  %v622 = vld [vmem:[%s0 + $0x38] sm:$0xff]
  %v623 = vld [vmem:[%s0 + $0x40] sm:$0xff]
  %v624 = vld [vmem:[%s0 + $0x48] sm:$0xff]
  %v625 = vld [vmem:[%s0 + $0x50] sm:$0xff]
  %v626 = vld [vmem:[%s0 + $0x58] sm:$0xff]
  %v627 = vld [vmem:[%s0 + $0x60] sm:$0xff]
  %v628 = vld [vmem:[%s0 + $0x68] sm:$0xff]
  %v629 = vld [vmem:[%s0 + $0x70] sm:$0xff]
  %v630 = vld [vmem:[%s0 + $0x78] sm:$0xff]
  %v631 = vld [vmem:[#allocation2] sm:$0xf]
  %v632 = vld [vmem:[#allocation2 + $0x4] sm:$0xf]
  %v633 = vld [vmem:[#allocation2 + $0x8] sm:$0xf]
  %v634 = vld [vmem:[#allocation2 + $0xc] sm:$0xf]
  %v635 = vld [vmem:[#allocation2 + $0x10] sm:$0xf]
  %v636 = vld [vmem:[#allocation2 + $0x14] sm:$0xf]
  %v637 = vld [vmem:[#allocation2 + $0x18] sm:$0xf]
  %v638 = vld [vmem:[#allocation2 + $0x1c] sm:$0xf]
  %v639 = vld [vmem:[#allocation2 + $0x20] sm:$0xf]
  %v640 = vld [vmem:[#allocation2 + $0x24] sm:$0xf]
  %v641 = vld [vmem:[#allocation2 + $0x28] sm:$0xf]
  %v642 = vld [vmem:[#allocation2 + $0x2c] sm:$0xf]
  %v643 = vld [vmem:[#allocation2 + $0x30] sm:$0xf]
  %v644 = vld [vmem:[#allocation2 + $0x34] sm:$0xf]
  %v645 = vld [vmem:[#allocation2 + $0x38] sm:$0xf]
  %v646 = vld [vmem:[#allocation2 + $0x3c] sm:$0xf]
  %v647 = vld [vmem:[#allocation2 + $0x40] sm:$0xf]
  %v648 = vld [vmem:[#allocation2 + $0x44] sm:$0xf]
  %v649 = vld [vmem:[#allocation2 + $0x48] sm:$0xf]
  %v650 = vld [vmem:[#allocation2 + $0x4c] sm:$0xf]
  %v651 = vld [vmem:[#allocation2 + $0x50] sm:$0xf]
  %v652 = vld [vmem:[#allocation2 + $0x54] sm:$0xf]
  %v653 = vld [vmem:[#allocation2 + $0x58] sm:$0xf]
  %v654 = vld [vmem:[#allocation2 + $0x5c] sm:$0xf]
  %v655 = vld [vmem:[#allocation2 + $0x60] sm:$0xf]
  %v656 = vld [vmem:[#allocation2 + $0x64] sm:$0xf]
  %v657 = vld [vmem:[#allocation2 + $0x68] sm:$0xf]
  %v658 = vld [vmem:[#allocation2 + $0x6c] sm:$0xf]
  %v659 = vld [vmem:[#allocation2 + $0x70] sm:$0xf]
  %v660 = vld [vmem:[#allocation2 + $0x74] sm:$0xf]
  %v661 = vld [vmem:[#allocation2 + $0x78] sm:$0xf]
  %v662 = vld [vmem:[#allocation2 + $0x7c] sm:$0xf]
  %v663 = vld [vmem:[#allocation2 + $0x80] sm:$0xf]
  %v664 = vld [vmem:[#allocation2 + $0x84] sm:$0xf]
  %v665 = vld [vmem:[#allocation2 + $0x88] sm:$0xf]
  %v666 = vld [vmem:[#allocation2 + $0x8c] sm:$0xf]
  %v667 = vld [vmem:[#allocation2 + $0x90] sm:$0xf]
  %v668 = vld [vmem:[#allocation2 + $0x94] sm:$0xf]
  %v669 = vld [vmem:[#allocation2 + $0x98] sm:$0xf]
  %v670 = vld [vmem:[#allocation2 + $0x9c] sm:$0xf]
  %v671 = vld [vmem:[#allocation2 + $0xa0] sm:$0xf]
  %v672 = vld [vmem:[#allocation2 + $0xa4] sm:$0xf]
  %v673 = vld [vmem:[#allocation2 + $0xa8] sm:$0xf]
  %v674 = vld [vmem:[#allocation2 + $0xac] sm:$0xf]
  %v675 = vld [vmem:[#allocation2 + $0xb0] sm:$0xf]
  %v676 = vld [vmem:[#allocation2 + $0xb4] sm:$0xf]
  %v677 = vld [vmem:[#allocation2 + $0xb8] sm:$0xf]
  %v678 = vld [vmem:[#allocation2 + $0xbc] sm:$0xf]
  %v679 = vld [vmem:[#allocation2 + $0xc0] sm:$0xf]
  %v680 = vld [vmem:[#allocation2 + $0xc4] sm:$0xf]
  %v681 = vld [vmem:[#allocation2 + $0xc8] sm:$0xf]
  %v682 = vld [vmem:[#allocation2 + $0xcc] sm:$0xf]
  %v683 = vld [vmem:[#allocation2 + $0xd0] sm:$0xf]
  %v684 = vld [vmem:[#allocation2 + $0xd4] sm:$0xf]
  %v685 = vld [vmem:[#allocation2 + $0xd8] sm:$0xf]
  %v686 = vld [vmem:[#allocation2 + $0xdc] sm:$0xf]
  %v687 = vld [vmem:[#allocation2 + $0xe0] sm:$0xf]
  %v688 = vld [vmem:[#allocation2 + $0xe4] sm:$0xf]
  %v689 = vld [vmem:[#allocation2 + $0xe8] sm:$0xf]
  %v690 = vld [vmem:[#allocation2 + $0xec] sm:$0xf]
  %v691 = vld [vmem:[#allocation2 + $0xf0] sm:$0xf]
  %v692 = vld [vmem:[#allocation2 + $0xf4] sm:$0xf]
  %v693 = vld [vmem:[#allocation2 + $0xf8] sm:$0xf]
  %v694 = vld [vmem:[#allocation2 + $0xfc] sm:$0xf]
  %v711 = vunpack.c.l.b16 %v615
  %v712 = vunpack.c.h.b16 %v615
  %v713 = vunpack.c.l.b16 %v616
  %v714 = vunpack.c.h.b16 %v616
  %v715 = vunpack.c.l.b16 %v617
  %v716 = vunpack.c.h.b16 %v617
  %v717 = vunpack.c.l.b16 %v618
  %v718 = vunpack.c.h.b16 %v618
  %v719 = vunpack.c.l.b16 %v619
  %v720 = vunpack.c.h.b16 %v619
  %v721 = vunpack.c.l.b16 %v620
  %v722 = vunpack.c.h.b16 %v620
  %v723 = vunpack.c.l.b16 %v621
  %v724 = vunpack.c.h.b16 %v621
  %v725 = vunpack.c.l.b16 %v622
  %v726 = vunpack.c.h.b16 %v622
  %v727 = vunpack.c.l.b16 %v623
  %v728 = vunpack.c.h.b16 %v623
  %v729 = vunpack.c.l.b16 %v624
  %v730 = vunpack.c.h.b16 %v624
  %v731 = vunpack.c.l.b16 %v625
  %v732 = vunpack.c.h.b16 %v625
  %v733 = vunpack.c.l.b16 %v626
  %v734 = vunpack.c.h.b16 %v626
  %v735 = vunpack.c.l.b16 %v627
  %v736 = vunpack.c.h.b16 %v627
  %v737 = vunpack.c.l.b16 %v628
  %v738 = vunpack.c.h.b16 %v628
  %v739 = vunpack.c.l.b16 %v629
  %v740 = vunpack.c.h.b16 %v629
  %v741 = vunpack.c.l.b16 %v630
  %v742 = vunpack.c.h.b16 %v630
  %v743 = vpack.c.b16 %v715, %v711
  %v744 = vpack.c.b16 %v716, %v712
  %v745 = vpack.c.b16 %v717, %v713
  %v746 = vpack.c.b16 %v718, %v714
  %v747 = vpack.c.b16 %v723, %v719
  %v748 = vpack.c.b16 %v724, %v720
  %v749 = vpack.c.b16 %v725, %v721
  %v750 = vpack.c.b16 %v726, %v722
  %v751 = vpack.c.b16 %v731, %v727
  %v752 = vpack.c.b16 %v732, %v728
  %v753 = vpack.c.b16 %v733, %v729
  %v754 = vpack.c.b16 %v734, %v730
  %v755 = vpack.c.b16 %v739, %v735
  %v756 = vpack.c.b16 %v740, %v736
  %v757 = vpack.c.b16 %v741, %v737
  %v758 = vpack.c.b16 %v742, %v738
  %v839 = vunpack.c.l.b16 %v631
  %v840 = vunpack.c.l.b16 %v632
  %v841 = vunpack.c.l.b16 %v633
  %v842 = vunpack.c.l.b16 %v634
  %v843 = vunpack.c.l.b16 %v635
  %v844 = vunpack.c.l.b16 %v636
  %v845 = vunpack.c.l.b16 %v637
  %v846 = vunpack.c.l.b16 %v638
  %v847 = vunpack.c.l.b16 %v639
  %v848 = vunpack.c.l.b16 %v640
  %v849 = vunpack.c.l.b16 %v641
  %v850 = vunpack.c.l.b16 %v642
  %v851 = vunpack.c.l.b16 %v643
  %v852 = vunpack.c.l.b16 %v644
  %v853 = vunpack.c.l.b16 %v645
  %v854 = vunpack.c.l.b16 %v646
  %v855 = vunpack.c.l.b16 %v647
  %v856 = vunpack.c.l.b16 %v648
  %v857 = vunpack.c.l.b16 %v649
  %v858 = vunpack.c.l.b16 %v650
  %v859 = vunpack.c.l.b16 %v651
  %v860 = vunpack.c.l.b16 %v652
  %v861 = vunpack.c.l.b16 %v653
  %v862 = vunpack.c.l.b16 %v654
  %v863 = vunpack.c.l.b16 %v655
  %v864 = vunpack.c.l.b16 %v656
  %v865 = vunpack.c.l.b16 %v657
  %v866 = vunpack.c.l.b16 %v658
  %v867 = vunpack.c.l.b16 %v659
  %v868 = vunpack.c.l.b16 %v660
  %v869 = vunpack.c.l.b16 %v661
  %v870 = vunpack.c.l.b16 %v662
  %v871 = vunpack.c.l.b16 %v663
  %v872 = vunpack.c.l.b16 %v664
  %v873 = vunpack.c.l.b16 %v665
  %v874 = vunpack.c.l.b16 %v666
  %v875 = vunpack.c.l.b16 %v667
  %v876 = vunpack.c.l.b16 %v668
  %v877 = vunpack.c.l.b16 %v669
  %v878 = vunpack.c.l.b16 %v670
  %v879 = vunpack.c.l.b16 %v671
  %v880 = vunpack.c.l.b16 %v672
  %v881 = vunpack.c.l.b16 %v673
  %v882 = vunpack.c.l.b16 %v674
  %v883 = vunpack.c.l.b16 %v675
  %v884 = vunpack.c.l.b16 %v676
  %v885 = vunpack.c.l.b16 %v677
  %v886 = vunpack.c.l.b16 %v678
  %v887 = vunpack.c.l.b16 %v679
  %v888 = vunpack.c.l.b16 %v680
  %v889 = vunpack.c.l.b16 %v681
  %v890 = vunpack.c.l.b16 %v682
  %v891 = vunpack.c.l.b16 %v683
  %v892 = vunpack.c.l.b16 %v684
  %v893 = vunpack.c.l.b16 %v685
  %v894 = vunpack.c.l.b16 %v686
  %v895 = vunpack.c.l.b16 %v687
  %v896 = vunpack.c.l.b16 %v688
  %v897 = vunpack.c.l.b16 %v689
  %v898 = vunpack.c.l.b16 %v690
  %v899 = vunpack.c.l.b16 %v691
  %v900 = vunpack.c.l.b16 %v692
  %v901 = vunpack.c.l.b16 %v693
  %v902 = vunpack.c.l.b16 %v694
  %v903 = vpack.c.b16 %v840, %v839
  %v904 = vpack.c.b16 %v842, %v841
  %v905 = vpack.c.b16 %v844, %v843
  %v906 = vpack.c.b16 %v846, %v845
  %v907 = vpack.c.b16 %v848, %v847
  %v908 = vpack.c.b16 %v850, %v849
  %v909 = vpack.c.b16 %v852, %v851
  %v910 = vpack.c.b16 %v854, %v853
  %v911 = vpack.c.b16 %v856, %v855
  %v912 = vpack.c.b16 %v858, %v857
  %v913 = vpack.c.b16 %v860, %v859
  %v914 = vpack.c.b16 %v862, %v861
  %v915 = vpack.c.b16 %v864, %v863
  %v916 = vpack.c.b16 %v866, %v865
  %v917 = vpack.c.b16 %v868, %v867
  %v918 = vpack.c.b16 %v870, %v869
  %v919 = vpack.c.b16 %v872, %v871
  %v920 = vpack.c.b16 %v874, %v873
  %v921 = vpack.c.b16 %v876, %v875
  %v922 = vpack.c.b16 %v878, %v877
  %v923 = vpack.c.b16 %v880, %v879
  %v924 = vpack.c.b16 %v882, %v881
  %v925 = vpack.c.b16 %v884, %v883
  %v926 = vpack.c.b16 %v886, %v885
  %v927 = vpack.c.b16 %v888, %v887
  %v928 = vpack.c.b16 %v890, %v889
  %v929 = vpack.c.b16 %v892, %v891
  %v930 = vpack.c.b16 %v894, %v893
  %v931 = vpack.c.b16 %v896, %v895
  %v932 = vpack.c.b16 %v898, %v897
  %v933 = vpack.c.b16 %v900, %v899
  %v934 = vpack.c.b16 %v902, %v901
  %967 = vmatpush.bf16.msra.mxu0 %v910
  %968 = vmatpush.bf16.msra.mxu0 %v909
  %969 = vmatpush.bf16.msra.mxu0 %v908
  %970 = vmatpush.bf16.msra.mxu0 %v907
  %971 = vmatpush.bf16.msra.mxu0 %v906
  %972 = vmatpush.bf16.msra.mxu0 %v905
  %973 = vmatpush.bf16.msra.mxu0 %v904
  %974 = vmatpush.bf16.msra.mxu0 %v903
  %975 = vmatmul.bf16.gmra.mxu0 %v743
  %v976 = vpop.f32.mrf.mxu0
  %v977 = vadd.f32 0.0, %v976
  %v978 = vpop.f32.mrf.mxu0
  %v979 = vadd.f32 0.0, %v978
  %980 = vmatmul.bf16.gmra.mxu0 %v747
  %v981 = vpop.f32.mrf.mxu0
  %v982 = vadd.f32 0.0, %v981
  %v983 = vpop.f32.mrf.mxu0
  %v984 = vadd.f32 0.0, %v983
  %985 = vmatmul.bf16.gmra.mxu0 %v751
  %v986 = vpop.f32.mrf.mxu0
  %v987 = vadd.f32 0.0, %v986
  %v988 = vpop.f32.mrf.mxu0
  %v989 = vadd.f32 0.0, %v988
  %990 = vmatmul.bf16.gmra.mxu0 %v755
  %v991 = vpop.f32.mrf.mxu0
  %v992 = vadd.f32 0.0, %v991
  %v993 = vpop.f32.mrf.mxu0
  %v994 = vadd.f32 0.0, %v993
  %995 = vdwg.mxu0
  %996 = vmatpush.bf16.msra.mxu0 %v918
  %997 = vmatpush.bf16.msra.mxu0 %v917
  %998 = vmatpush.bf16.msra.mxu0 %v916
  %999 = vmatpush.bf16.msra.mxu0 %v915
  %1000 = vmatpush.bf16.msra.mxu0 %v914
  %1001 = vmatpush.bf16.msra.mxu0 %v913
  %1002 = vmatpush.bf16.msra.mxu0 %v912
  %1003 = vmatpush.bf16.msra.mxu0 %v911
  %1004 = vmatmul.bf16.gmra.mxu0 %v744
  %v1005 = vpop.f32.mrf.mxu0
  %v1006 = vadd.f32 %v977, %v1005
  %v1007 = vpop.f32.mrf.mxu0
  %v1008 = vadd.f32 %v979, %v1007
  %1009 = vmatmul.bf16.gmra.mxu0 %v748
  %v1010 = vpop.f32.mrf.mxu0
  %v1011 = vadd.f32 %v982, %v1010
  %v1012 = vpop.f32.mrf.mxu0
  %v1013 = vadd.f32 %v984, %v1012
  %1014 = vmatmul.bf16.gmra.mxu0 %v752
  %v1015 = vpop.f32.mrf.mxu0
  %v1016 = vadd.f32 %v987, %v1015
  %v1017 = vpop.f32.mrf.mxu0
  %v1018 = vadd.f32 %v989, %v1017
  %1019 = vmatmul.bf16.gmra.mxu0 %v756
  %v1020 = vpop.f32.mrf.mxu0
  %v1021 = vadd.f32 %v992, %v1020
  %v1022 = vpop.f32.mrf.mxu0
  %v1023 = vadd.f32 %v994, %v1022
  %1024 = vdwg.mxu0
  %1025 = vmatpush.bf16.msra.mxu0 %v926
  %1026 = vmatpush.bf16.msra.mxu0 %v925
  %1027 = vmatpush.bf16.msra.mxu0 %v924
  %1028 = vmatpush.bf16.msra.mxu0 %v923
  %1029 = vmatpush.bf16.msra.mxu0 %v922
  %1030 = vmatpush.bf16.msra.mxu0 %v921
  %1031 = vmatpush.bf16.msra.mxu0 %v920
  %1032 = vmatpush.bf16.msra.mxu0 %v919
  %1033 = vmatmul.bf16.gmra.mxu0 %v745
  %v1034 = vpop.f32.mrf.mxu0
  %v1035 = vadd.f32 %v1006, %v1034
  %v1036 = vpop.f32.mrf.mxu0
  %v1037 = vadd.f32 %v1008, %v1036
  %1038 = vmatmul.bf16.gmra.mxu0 %v749
  %v1039 = vpop.f32.mrf.mxu0
  %v1040 = vadd.f32 %v1011, %v1039
  %v1041 = vpop.f32.mrf.mxu0
  %v1042 = vadd.f32 %v1013, %v1041
  %1043 = vmatmul.bf16.gmra.mxu0 %v753
  %v1044 = vpop.f32.mrf.mxu0
  %v1045 = vadd.f32 %v1016, %v1044
  %v1046 = vpop.f32.mrf.mxu0
  %v1047 = vadd.f32 %v1018, %v1046
  %1048 = vmatmul.bf16.gmra.mxu0 %v757
  %v1049 = vpop.f32.mrf.mxu0
  %v1050 = vadd.f32 %v1021, %v1049
  %v1051 = vpop.f32.mrf.mxu0
  %v1052 = vadd.f32 %v1023, %v1051
  %1053 = vdwg.mxu0
  %1054 = vmatpush.bf16.msra.mxu0 %v934
  %1055 = vmatpush.bf16.msra.mxu0 %v933
  %1056 = vmatpush.bf16.msra.mxu0 %v932
  %1057 = vmatpush.bf16.msra.mxu0 %v931
  %1058 = vmatpush.bf16.msra.mxu0 %v930
  %1059 = vmatpush.bf16.msra.mxu0 %v929
  %1060 = vmatpush.bf16.msra.mxu0 %v928
  %1061 = vmatpush.bf16.msra.mxu0 %v927
  %1062 = vmatmul.bf16.gmra.mxu0 %v746
  %v1063 = vpop.f32.mrf.mxu0
  %v1064 = vadd.f32 %v1035, %v1063
  %v1065 = vpop.f32.mrf.mxu0
  %v1066 = vadd.f32 %v1037, %v1065
  %1067 = vmatmul.bf16.gmra.mxu0 %v750
  %v1068 = vpop.f32.mrf.mxu0
  %v1069 = vadd.f32 %v1040, %v1068
  %v1070 = vpop.f32.mrf.mxu0
  %v1071 = vadd.f32 %v1042, %v1070
  %1072 = vmatmul.bf16.gmra.mxu0 %v754
  %v1073 = vpop.f32.mrf.mxu0
  %v1074 = vadd.f32 %v1045, %v1073
  %v1075 = vpop.f32.mrf.mxu0
  %v1076 = vadd.f32 %v1047, %v1075
  %1077 = vmatmul.bf16.gmra.mxu0 %v758
  %v1078 = vpop.f32.mrf.mxu0
  %v1079 = vadd.f32 %v1050, %v1078
  %v1080 = vpop.f32.mrf.mxu0
  %v1081 = vadd.f32 %v1052, %v1080
  %1082 = vdwg.mxu0
  %v1083 = vadd.f32 %v100, %v1064
  %v1084 = vadd.f32 %v102, %v1066
  %v1085 = vadd.f32 %v105, %v1069
  %v1086 = vadd.f32 %v107, %v1071
  %v1087 = vadd.f32 %v110, %v1074
  %v1088 = vadd.f32 %v112, %v1076
  %v1089 = vadd.f32 %v115, %v1079
  %v1090 = vadd.f32 %v117, %v1081
  %v1091 = vmax.f32 %v1083, 0.0
  %v1092 = vmax.f32 %v1084, 0.0
  %v1093 = vmax.f32 %v1085, 0.0
  %v1094 = vmax.f32 %v1086, 0.0
  %v1095 = vmax.f32 %v1087, 0.0
  %v1096 = vmax.f32 %v1088, 0.0
  %v1097 = vmax.f32 %v1089, 0.0
  %v1098 = vmax.f32 %v1090, 0.0
  %v1099 = vpack.c.bf16 %v1092, %v1091
  %v1100 = vpack.c.bf16 %v1094, %v1093
  %v1101 = vpack.c.bf16 %v1096, %v1095
  %v1102 = vpack.c.bf16 %v1098, %v1097
  %v1103 = vld [vmem:[%s8] sm:$0xf]
  %v1104 = vld [vmem:[%s8 + $0x4] sm:$0xf]
  %v1105 = vld [vmem:[%s8 + $0x8] sm:$0xf]
  %v1106 = vld [vmem:[%s8 + $0xc] sm:$0xf]
  %v1107 = vld [vmem:[%s9] sm:$0x1]
  %v1109 = vperm.slane %v1107, 0
  %v1115 = vunpack.c.l.b16 %v1103
  %v1116 = vunpack.c.l.b16 %v1104
  %v1117 = vunpack.c.l.b16 %v1105
  %v1118 = vunpack.c.l.b16 %v1106
  %v1119 = vpack.c.b16 %v1116, %v1115
  %v1120 = vpack.c.b16 %v1118, %v1117
  %v1124 = vsel %vm77, %v1099, 0
  %v1127 = vsel %vm77, %v1100, 0
  %v1130 = vsel %vm77, %v1101, 0
  %v1133 = vsel %vm77, %v1102, 0
  %1135 = vmatpush.bf16.msra.mxu0 0
  %1136 = vmatpush.bf16.msra.mxu0 0
  %1137 = vmatpush.bf16.msra.mxu0 0
  %1138 = vmatpush.bf16.msra.mxu0 0
  %1139 = vmatpush.bf16.msra.mxu0 0
  %1140 = vmatpush.bf16.msra.mxu0 0
  %1141 = vmatpush.bf16.msra.mxu0 %v1120
  %1142 = vmatpush.bf16.msra.mxu0 %v1119
  %1143 = vmatmul.bf16.gmra.mxu0 %v1124
  %v1144 = vpop.f32.mrf.mxu0
  %v1145 = vadd.f32 %v1109, %v1144
  %v1146 = vpop.f32.mrf.mxu0
  %v1147 = vadd.f32 %v1109, %v1146
  %1148 = vmatmul.bf16.gmra.mxu0 %v1127
  %v1149 = vpop.f32.mrf.mxu0
  %v1150 = vadd.f32 %v1109, %v1149
  %v1151 = vpop.f32.mrf.mxu0
  %v1152 = vadd.f32 %v1109, %v1151
  %1153 = vmatmul.bf16.gmra.mxu0 %v1130
  %v1154 = vpop.f32.mrf.mxu0
  %v1155 = vadd.f32 %v1109, %v1154
  %v1156 = vpop.f32.mrf.mxu0
  %v1157 = vadd.f32 %v1109, %v1156
  %1158 = vmatmul.bf16.gmra.mxu0 %v1133
  %v1159 = vpop.f32.mrf.mxu0
  %v1160 = vadd.f32 %v1109, %v1159
  %v1161 = vpop.f32.mrf.mxu0
  %v1162 = vadd.f32 %v1109, %v1161
  %1163 = vdwg.mxu0
  %v1164 = vld [vmem:[%s7] sm:$0xf]
  %v1165 = vld [vmem:[%s7 + $0x4] sm:$0xf]
  %v1166 = vld [vmem:[%s7 + $0x8] sm:$0xf]
  %v1167 = vld [vmem:[%s7 + $0xc] sm:$0xf]
  %v1172 = vunpack.c.l.b16 %v1164
  %v1173 = vunpack.c.l.b16 %v1165
  %v1174 = vunpack.c.l.b16 %v1166
  %v1175 = vunpack.c.l.b16 %v1167
  %v1176 = vpack.c.b16 %v1173, %v1172
  %v1177 = vpack.c.b16 %v1175, %v1174
  %1180 = vmatpush.bf16.msra.mxu0 0
  %1181 = vmatpush.bf16.msra.mxu0 0
  %1182 = vmatpush.bf16.msra.mxu0 0
  %1183 = vmatpush.bf16.msra.mxu0 0
  %1184 = vmatpush.bf16.msra.mxu0 0
  %1185 = vmatpush.bf16.msra.mxu0 0
  %1186 = vmatpush.bf16.msra.mxu0 %v1177
  %1187 = vmatpush.bf16.msra.mxu0 %v1176
  %1188 = vmatmul.bf16.gmra.mxu0 %v1124
  %v1189 = vpop.f32.mrf.mxu0
  %v1190 = vadd.f32 0.0, %v1189
  %v1191 = vpop.f32.mrf.mxu0
  %v1192 = vadd.f32 0.0, %v1191
  %1193 = vmatmul.bf16.gmra.mxu0 %v1127
  %v1194 = vpop.f32.mrf.mxu0
  %v1195 = vadd.f32 0.0, %v1194
  %v1196 = vpop.f32.mrf.mxu0
  %v1197 = vadd.f32 0.0, %v1196
  %1198 = vmatmul.bf16.gmra.mxu0 %v1130
  %v1199 = vpop.f32.mrf.mxu0
  %v1200 = vadd.f32 0.0, %v1199
  %v1201 = vpop.f32.mrf.mxu0
  %v1202 = vadd.f32 0.0, %v1201
  %1203 = vmatmul.bf16.gmra.mxu0 %v1133
  %v1204 = vpop.f32.mrf.mxu0
  %v1205 = vadd.f32 0.0, %v1204
  %v1206 = vpop.f32.mrf.mxu0
  %v1207 = vadd.f32 0.0, %v1206
  %1208 = vdwg.mxu0
  %v1209 = vpack.c.bf16 %v1190, %v1190
  %v1210 = vpack.c.bf16 %v1192, %v1192
  %v1211 = vpack.c.bf16 %v1195, %v1195
  %v1212 = vpack.c.bf16 %v1197, %v1197
  %v1213 = vpack.c.bf16 %v1200, %v1200
  %v1214 = vpack.c.bf16 %v1202, %v1202
  %v1215 = vpack.c.bf16 %v1205, %v1205
  %v1216 = vpack.c.bf16 %v1207, %v1207
  %1217 = vst.msk [vmem:[#allocation2] sm:$0xf] %vm172, %v1209
  %1218 = vst.msk [vmem:[#allocation2 + $0x4] sm:$0xf] %vm172, %v1210
  %1219 = vst.msk [vmem:[#allocation2 + $0x8] sm:$0xf] %vm172, %v1211
  %1220 = vst.msk [vmem:[#allocation2 + $0xc] sm:$0xf] %vm172, %v1212
  %1221 = vst.msk [vmem:[#allocation2 + $0x10] sm:$0xf] %vm172, %v1213
  %1222 = vst.msk [vmem:[#allocation2 + $0x14] sm:$0xf] %vm172, %v1214
  %1223 = vst.msk [vmem:[#allocation2 + $0x18] sm:$0xf] %vm172, %v1215
  %1224 = vst.msk [vmem:[#allocation2 + $0x1c] sm:$0xf] %vm172, %v1216
  %s1225 = scalar_lea.vmem %s7, 16
  %v1226 = vld [vmem:[%s1225] sm:$0xf]
  %v1227 = vld [vmem:[%s1225 + $0x4] sm:$0xf]
  %v1228 = vld [vmem:[%s1225 + $0x8] sm:$0xf]
  %v1229 = vld [vmem:[%s1225 + $0xc] sm:$0xf]
  %v1234 = vunpack.c.l.b16 %v1226
  %v1235 = vunpack.c.l.b16 %v1227
  %v1236 = vunpack.c.l.b16 %v1228
  %v1237 = vunpack.c.l.b16 %v1229
  %v1238 = vpack.c.b16 %v1235, %v1234
  %v1239 = vpack.c.b16 %v1237, %v1236
  %1242 = vmatpush.bf16.msra.mxu0 0
  %1243 = vmatpush.bf16.msra.mxu0 0
  %1244 = vmatpush.bf16.msra.mxu0 0
  %1245 = vmatpush.bf16.msra.mxu0 0
  %1246 = vmatpush.bf16.msra.mxu0 0
  %1247 = vmatpush.bf16.msra.mxu0 0
  %1248 = vmatpush.bf16.msra.mxu0 %v1239
  %1249 = vmatpush.bf16.msra.mxu0 %v1238
  %1250 = vmatmul.bf16.gmra.mxu0 %v1124
  %v1251 = vpop.f32.mrf.mxu0
  %v1252 = vadd.f32 0.0, %v1251
  %v1253 = vpop.f32.mrf.mxu0
  %v1254 = vadd.f32 0.0, %v1253
  %1255 = vmatmul.bf16.gmra.mxu0 %v1127
  %v1256 = vpop.f32.mrf.mxu0
  %v1257 = vadd.f32 0.0, %v1256
  %v1258 = vpop.f32.mrf.mxu0
  %v1259 = vadd.f32 0.0, %v1258
  %1260 = vmatmul.bf16.gmra.mxu0 %v1130
  %v1261 = vpop.f32.mrf.mxu0
  %v1262 = vadd.f32 0.0, %v1261
  %v1263 = vpop.f32.mrf.mxu0
  %v1264 = vadd.f32 0.0, %v1263
  %1265 = vmatmul.bf16.gmra.mxu0 %v1133
  %v1266 = vpop.f32.mrf.mxu0
  %v1267 = vadd.f32 0.0, %v1266
  %v1268 = vpop.f32.mrf.mxu0
  %v1269 = vadd.f32 0.0, %v1268
  %1270 = vdwg.mxu0
  %v1271 = vpack.c.bf16 %v1252, %v1252
  %v1272 = vpack.c.bf16 %v1254, %v1254
  %v1273 = vpack.c.bf16 %v1257, %v1257
  %v1274 = vpack.c.bf16 %v1259, %v1259
  %v1275 = vpack.c.bf16 %v1262, %v1262
  %v1276 = vpack.c.bf16 %v1264, %v1264
  %v1277 = vpack.c.bf16 %v1267, %v1267
  %v1278 = vpack.c.bf16 %v1269, %v1269
  %1279 = vst.msk [vmem:[#allocation2 + $0x20] sm:$0xf] %vm172, %v1271
  %1280 = vst.msk [vmem:[#allocation2 + $0x24] sm:$0xf] %vm172, %v1272
  %1281 = vst.msk [vmem:[#allocation2 + $0x28] sm:$0xf] %vm172, %v1273
  %1282 = vst.msk [vmem:[#allocation2 + $0x2c] sm:$0xf] %vm172, %v1274
  %1283 = vst.msk [vmem:[#allocation2 + $0x30] sm:$0xf] %vm172, %v1275
  %1284 = vst.msk [vmem:[#allocation2 + $0x34] sm:$0xf] %vm172, %v1276
  %1285 = vst.msk [vmem:[#allocation2 + $0x38] sm:$0xf] %vm172, %v1277
  %1286 = vst.msk [vmem:[#allocation2 + $0x3c] sm:$0xf] %vm172, %v1278
  %s1287 = scalar_lea.vmem %s7, 32
  %v1288 = vld [vmem:[%s1287] sm:$0xf]
  %v1289 = vld [vmem:[%s1287 + $0x4] sm:$0xf]
  %v1290 = vld [vmem:[%s1287 + $0x8] sm:$0xf]
  %v1291 = vld [vmem:[%s1287 + $0xc] sm:$0xf]
  %v1296 = vunpack.c.l.b16 %v1288
  %v1297 = vunpack.c.l.b16 %v1289
  %v1298 = vunpack.c.l.b16 %v1290
  %v1299 = vunpack.c.l.b16 %v1291
  %v1300 = vpack.c.b16 %v1297, %v1296
  %v1301 = vpack.c.b16 %v1299, %v1298
  %1304 = vmatpush.bf16.msra.mxu0 0
  %1305 = vmatpush.bf16.msra.mxu0 0
  %1306 = vmatpush.bf16.msra.mxu0 0
  %1307 = vmatpush.bf16.msra.mxu0 0
  %1308 = vmatpush.bf16.msra.mxu0 0
  %1309 = vmatpush.bf16.msra.mxu0 0
  %1310 = vmatpush.bf16.msra.mxu0 %v1301
  %1311 = vmatpush.bf16.msra.mxu0 %v1300
  %1312 = vmatmul.bf16.gmra.mxu0 %v1124
  %v1313 = vpop.f32.mrf.mxu0
  %v1314 = vadd.f32 0.0, %v1313
  %v1315 = vpop.f32.mrf.mxu0
  %v1316 = vadd.f32 0.0, %v1315
  %1317 = vmatmul.bf16.gmra.mxu0 %v1127
  %v1318 = vpop.f32.mrf.mxu0
  %v1319 = vadd.f32 0.0, %v1318
  %v1320 = vpop.f32.mrf.mxu0
  %v1321 = vadd.f32 0.0, %v1320
  %1322 = vmatmul.bf16.gmra.mxu0 %v1130
  %v1323 = vpop.f32.mrf.mxu0
  %v1324 = vadd.f32 0.0, %v1323
  %v1325 = vpop.f32.mrf.mxu0
  %v1326 = vadd.f32 0.0, %v1325
  %1327 = vmatmul.bf16.gmra.mxu0 %v1133
  %v1328 = vpop.f32.mrf.mxu0
  %v1329 = vadd.f32 0.0, %v1328
  %v1330 = vpop.f32.mrf.mxu0
  %v1331 = vadd.f32 0.0, %v1330
  %1332 = vdwg.mxu0
  %v1333 = vpack.c.bf16 %v1314, %v1314
  %v1334 = vpack.c.bf16 %v1316, %v1316
  %v1335 = vpack.c.bf16 %v1319, %v1319
  %v1336 = vpack.c.bf16 %v1321, %v1321
  %v1337 = vpack.c.bf16 %v1324, %v1324
  %v1338 = vpack.c.bf16 %v1326, %v1326
  %v1339 = vpack.c.bf16 %v1329, %v1329
  %v1340 = vpack.c.bf16 %v1331, %v1331
  %1341 = vst.msk [vmem:[#allocation2 + $0x40] sm:$0xf] %vm172, %v1333
  %1342 = vst.msk [vmem:[#allocation2 + $0x44] sm:$0xf] %vm172, %v1334
  %1343 = vst.msk [vmem:[#allocation2 + $0x48] sm:$0xf] %vm172, %v1335
  %1344 = vst.msk [vmem:[#allocation2 + $0x4c] sm:$0xf] %vm172, %v1336
  %1345 = vst.msk [vmem:[#allocation2 + $0x50] sm:$0xf] %vm172, %v1337
  %1346 = vst.msk [vmem:[#allocation2 + $0x54] sm:$0xf] %vm172, %v1338
  %1347 = vst.msk [vmem:[#allocation2 + $0x58] sm:$0xf] %vm172, %v1339
  %1348 = vst.msk [vmem:[#allocation2 + $0x5c] sm:$0xf] %vm172, %v1340
  %s1349 = scalar_lea.vmem %s7, 48
  %v1350 = vld [vmem:[%s1349] sm:$0xf]
  %v1351 = vld [vmem:[%s1349 + $0x4] sm:$0xf]
  %v1352 = vld [vmem:[%s1349 + $0x8] sm:$0xf]
  %v1353 = vld [vmem:[%s1349 + $0xc] sm:$0xf]
  %v1358 = vunpack.c.l.b16 %v1350
  %v1359 = vunpack.c.l.b16 %v1351
  %v1360 = vunpack.c.l.b16 %v1352
  %v1361 = vunpack.c.l.b16 %v1353
  %v1362 = vpack.c.b16 %v1359, %v1358
  %v1363 = vpack.c.b16 %v1361, %v1360
  %1366 = vmatpush.bf16.msra.mxu0 0
  %1367 = vmatpush.bf16.msra.mxu0 0
  %1368 = vmatpush.bf16.msra.mxu0 0
  %1369 = vmatpush.bf16.msra.mxu0 0
  %1370 = vmatpush.bf16.msra.mxu0 0
  %1371 = vmatpush.bf16.msra.mxu0 0
  %1372 = vmatpush.bf16.msra.mxu0 %v1363
  %1373 = vmatpush.bf16.msra.mxu0 %v1362
  %1374 = vmatmul.bf16.gmra.mxu0 %v1124
  %v1375 = vpop.f32.mrf.mxu0
  %v1376 = vadd.f32 0.0, %v1375
  %v1377 = vpop.f32.mrf.mxu0
  %v1378 = vadd.f32 0.0, %v1377
  %1379 = vmatmul.bf16.gmra.mxu0 %v1127
  %v1380 = vpop.f32.mrf.mxu0
  %v1381 = vadd.f32 0.0, %v1380
  %v1382 = vpop.f32.mrf.mxu0
  %v1383 = vadd.f32 0.0, %v1382
  %1384 = vmatmul.bf16.gmra.mxu0 %v1130
  %v1385 = vpop.f32.mrf.mxu0
  %v1386 = vadd.f32 0.0, %v1385
  %v1387 = vpop.f32.mrf.mxu0
  %v1388 = vadd.f32 0.0, %v1387
  %1389 = vmatmul.bf16.gmra.mxu0 %v1133
  %v1390 = vpop.f32.mrf.mxu0
  %v1391 = vadd.f32 0.0, %v1390
  %v1392 = vpop.f32.mrf.mxu0
  %v1393 = vadd.f32 0.0, %v1392
  %1394 = vdwg.mxu0
  %v1395 = vpack.c.bf16 %v1376, %v1376
  %v1396 = vpack.c.bf16 %v1378, %v1378
  %v1397 = vpack.c.bf16 %v1381, %v1381
  %v1398 = vpack.c.bf16 %v1383, %v1383
  %v1399 = vpack.c.bf16 %v1386, %v1386
  %v1400 = vpack.c.bf16 %v1388, %v1388
  %v1401 = vpack.c.bf16 %v1391, %v1391
  %v1402 = vpack.c.bf16 %v1393, %v1393
  %1403 = vst.msk [vmem:[#allocation2 + $0x60] sm:$0xf] %vm172, %v1395
  %1404 = vst.msk [vmem:[#allocation2 + $0x64] sm:$0xf] %vm172, %v1396
  %1405 = vst.msk [vmem:[#allocation2 + $0x68] sm:$0xf] %vm172, %v1397
  %1406 = vst.msk [vmem:[#allocation2 + $0x6c] sm:$0xf] %vm172, %v1398
  %1407 = vst.msk [vmem:[#allocation2 + $0x70] sm:$0xf] %vm172, %v1399
  %1408 = vst.msk [vmem:[#allocation2 + $0x74] sm:$0xf] %vm172, %v1400
  %1409 = vst.msk [vmem:[#allocation2 + $0x78] sm:$0xf] %vm172, %v1401
  %1410 = vst.msk [vmem:[#allocation2 + $0x7c] sm:$0xf] %vm172, %v1402
  %s1411 = scalar_lea.vmem %s7, 64
  %v1412 = vld [vmem:[%s1411] sm:$0xf]
  %v1413 = vld [vmem:[%s1411 + $0x4] sm:$0xf]
  %v1414 = vld [vmem:[%s1411 + $0x8] sm:$0xf]
  %v1415 = vld [vmem:[%s1411 + $0xc] sm:$0xf]
  %v1420 = vunpack.c.l.b16 %v1412
  %v1421 = vunpack.c.l.b16 %v1413
  %v1422 = vunpack.c.l.b16 %v1414
  %v1423 = vunpack.c.l.b16 %v1415
  %v1424 = vpack.c.b16 %v1421, %v1420
  %v1425 = vpack.c.b16 %v1423, %v1422
  %1428 = vmatpush.bf16.msra.mxu0 0
  %1429 = vmatpush.bf16.msra.mxu0 0
  %1430 = vmatpush.bf16.msra.mxu0 0
  %1431 = vmatpush.bf16.msra.mxu0 0
  %1432 = vmatpush.bf16.msra.mxu0 0
  %1433 = vmatpush.bf16.msra.mxu0 0
  %1434 = vmatpush.bf16.msra.mxu0 %v1425
  %1435 = vmatpush.bf16.msra.mxu0 %v1424
  %1436 = vmatmul.bf16.gmra.mxu0 %v1124
  %v1437 = vpop.f32.mrf.mxu0
  %v1438 = vadd.f32 0.0, %v1437
  %v1439 = vpop.f32.mrf.mxu0
  %v1440 = vadd.f32 0.0, %v1439
  %1441 = vmatmul.bf16.gmra.mxu0 %v1127
  %v1442 = vpop.f32.mrf.mxu0
  %v1443 = vadd.f32 0.0, %v1442
  %v1444 = vpop.f32.mrf.mxu0
  %v1445 = vadd.f32 0.0, %v1444
  %1446 = vmatmul.bf16.gmra.mxu0 %v1130
  %v1447 = vpop.f32.mrf.mxu0
  %v1448 = vadd.f32 0.0, %v1447
  %v1449 = vpop.f32.mrf.mxu0
  %v1450 = vadd.f32 0.0, %v1449
  %1451 = vmatmul.bf16.gmra.mxu0 %v1133
  %v1452 = vpop.f32.mrf.mxu0
  %v1453 = vadd.f32 0.0, %v1452
  %v1454 = vpop.f32.mrf.mxu0
  %v1455 = vadd.f32 0.0, %v1454
  %1456 = vdwg.mxu0
  %v1457 = vpack.c.bf16 %v1438, %v1438
  %v1458 = vpack.c.bf16 %v1440, %v1440
  %v1459 = vpack.c.bf16 %v1443, %v1443
  %v1460 = vpack.c.bf16 %v1445, %v1445
  %v1461 = vpack.c.bf16 %v1448, %v1448
  %v1462 = vpack.c.bf16 %v1450, %v1450
  %v1463 = vpack.c.bf16 %v1453, %v1453
  %v1464 = vpack.c.bf16 %v1455, %v1455
  %1465 = vst.msk [vmem:[#allocation2 + $0x80] sm:$0xf] %vm172, %v1457
  %1466 = vst.msk [vmem:[#allocation2 + $0x84] sm:$0xf] %vm172, %v1458
  %1467 = vst.msk [vmem:[#allocation2 + $0x88] sm:$0xf] %vm172, %v1459
  %1468 = vst.msk [vmem:[#allocation2 + $0x8c] sm:$0xf] %vm172, %v1460
  %1469 = vst.msk [vmem:[#allocation2 + $0x90] sm:$0xf] %vm172, %v1461
  %1470 = vst.msk [vmem:[#allocation2 + $0x94] sm:$0xf] %vm172, %v1462
  %1471 = vst.msk [vmem:[#allocation2 + $0x98] sm:$0xf] %vm172, %v1463
  %1472 = vst.msk [vmem:[#allocation2 + $0x9c] sm:$0xf] %vm172, %v1464
  %s1473 = scalar_lea.vmem %s7, 80
  %v1474 = vld [vmem:[%s1473] sm:$0xf]
  %v1475 = vld [vmem:[%s1473 + $0x4] sm:$0xf]
  %v1476 = vld [vmem:[%s1473 + $0x8] sm:$0xf]
  %v1477 = vld [vmem:[%s1473 + $0xc] sm:$0xf]
  %v1482 = vunpack.c.l.b16 %v1474
  %v1483 = vunpack.c.l.b16 %v1475
  %v1484 = vunpack.c.l.b16 %v1476
  %v1485 = vunpack.c.l.b16 %v1477
  %v1486 = vpack.c.b16 %v1483, %v1482
  %v1487 = vpack.c.b16 %v1485, %v1484
  %1490 = vmatpush.bf16.msra.mxu0 0
  %1491 = vmatpush.bf16.msra.mxu0 0
  %1492 = vmatpush.bf16.msra.mxu0 0
  %1493 = vmatpush.bf16.msra.mxu0 0
  %1494 = vmatpush.bf16.msra.mxu0 0
  %1495 = vmatpush.bf16.msra.mxu0 0
  %1496 = vmatpush.bf16.msra.mxu0 %v1487
  %1497 = vmatpush.bf16.msra.mxu0 %v1486
  %1498 = vmatmul.bf16.gmra.mxu0 %v1124
  %v1499 = vpop.f32.mrf.mxu0
  %v1500 = vadd.f32 0.0, %v1499
  %v1501 = vpop.f32.mrf.mxu0
  %v1502 = vadd.f32 0.0, %v1501
  %1503 = vmatmul.bf16.gmra.mxu0 %v1127
  %v1504 = vpop.f32.mrf.mxu0
  %v1505 = vadd.f32 0.0, %v1504
  %v1506 = vpop.f32.mrf.mxu0
  %v1507 = vadd.f32 0.0, %v1506
  %1508 = vmatmul.bf16.gmra.mxu0 %v1130
  %v1509 = vpop.f32.mrf.mxu0
  %v1510 = vadd.f32 0.0, %v1509
  %v1511 = vpop.f32.mrf.mxu0
  %v1512 = vadd.f32 0.0, %v1511
  %1513 = vmatmul.bf16.gmra.mxu0 %v1133
  %v1514 = vpop.f32.mrf.mxu0
  %v1515 = vadd.f32 0.0, %v1514
  %v1516 = vpop.f32.mrf.mxu0
  %v1517 = vadd.f32 0.0, %v1516
  %1518 = vdwg.mxu0
  %v1519 = vpack.c.bf16 %v1500, %v1500
  %v1520 = vpack.c.bf16 %v1502, %v1502
  %v1521 = vpack.c.bf16 %v1505, %v1505
  %v1522 = vpack.c.bf16 %v1507, %v1507
  %v1523 = vpack.c.bf16 %v1510, %v1510
  %v1524 = vpack.c.bf16 %v1512, %v1512
  %v1525 = vpack.c.bf16 %v1515, %v1515
  %v1526 = vpack.c.bf16 %v1517, %v1517
  %1527 = vst.msk [vmem:[#allocation2 + $0xa0] sm:$0xf] %vm172, %v1519
  %1528 = vst.msk [vmem:[#allocation2 + $0xa4] sm:$0xf] %vm172, %v1520
  %1529 = vst.msk [vmem:[#allocation2 + $0xa8] sm:$0xf] %vm172, %v1521
  %1530 = vst.msk [vmem:[#allocation2 + $0xac] sm:$0xf] %vm172, %v1522
  %1531 = vst.msk [vmem:[#allocation2 + $0xb0] sm:$0xf] %vm172, %v1523
  %1532 = vst.msk [vmem:[#allocation2 + $0xb4] sm:$0xf] %vm172, %v1524
  %1533 = vst.msk [vmem:[#allocation2 + $0xb8] sm:$0xf] %vm172, %v1525
  %1534 = vst.msk [vmem:[#allocation2 + $0xbc] sm:$0xf] %vm172, %v1526
  %s1535 = scalar_lea.vmem %s7, 96
  %v1536 = vld [vmem:[%s1535] sm:$0xf]
  %v1537 = vld [vmem:[%s1535 + $0x4] sm:$0xf]
  %v1538 = vld [vmem:[%s1535 + $0x8] sm:$0xf]
  %v1539 = vld [vmem:[%s1535 + $0xc] sm:$0xf]
  %v1544 = vunpack.c.l.b16 %v1536
  %v1545 = vunpack.c.l.b16 %v1537
  %v1546 = vunpack.c.l.b16 %v1538
  %v1547 = vunpack.c.l.b16 %v1539
  %v1548 = vpack.c.b16 %v1545, %v1544
  %v1549 = vpack.c.b16 %v1547, %v1546
  %1552 = vmatpush.bf16.msra.mxu0 0
  %1553 = vmatpush.bf16.msra.mxu0 0
  %1554 = vmatpush.bf16.msra.mxu0 0
  %1555 = vmatpush.bf16.msra.mxu0 0
  %1556 = vmatpush.bf16.msra.mxu0 0
  %1557 = vmatpush.bf16.msra.mxu0 0
  %1558 = vmatpush.bf16.msra.mxu0 %v1549
  %1559 = vmatpush.bf16.msra.mxu0 %v1548
  %1560 = vmatmul.bf16.gmra.mxu0 %v1124
  %v1561 = vpop.f32.mrf.mxu0
  %v1562 = vadd.f32 0.0, %v1561
  %v1563 = vpop.f32.mrf.mxu0
  %v1564 = vadd.f32 0.0, %v1563
  %1565 = vmatmul.bf16.gmra.mxu0 %v1127
  %v1566 = vpop.f32.mrf.mxu0
  %v1567 = vadd.f32 0.0, %v1566
  %v1568 = vpop.f32.mrf.mxu0
  %v1569 = vadd.f32 0.0, %v1568
  %1570 = vmatmul.bf16.gmra.mxu0 %v1130
  %v1571 = vpop.f32.mrf.mxu0
  %v1572 = vadd.f32 0.0, %v1571
  %v1573 = vpop.f32.mrf.mxu0
  %v1574 = vadd.f32 0.0, %v1573
  %1575 = vmatmul.bf16.gmra.mxu0 %v1133
  %v1576 = vpop.f32.mrf.mxu0
  %v1577 = vadd.f32 0.0, %v1576
  %v1578 = vpop.f32.mrf.mxu0
  %v1579 = vadd.f32 0.0, %v1578
  %1580 = vdwg.mxu0
  %v1581 = vpack.c.bf16 %v1562, %v1562
  %v1582 = vpack.c.bf16 %v1564, %v1564
  %v1583 = vpack.c.bf16 %v1567, %v1567
  %v1584 = vpack.c.bf16 %v1569, %v1569
  %v1585 = vpack.c.bf16 %v1572, %v1572
  %v1586 = vpack.c.bf16 %v1574, %v1574
  %v1587 = vpack.c.bf16 %v1577, %v1577
  %v1588 = vpack.c.bf16 %v1579, %v1579
  %1589 = vst.msk [vmem:[#allocation2 + $0xc0] sm:$0xf] %vm172, %v1581
  %1590 = vst.msk [vmem:[#allocation2 + $0xc4] sm:$0xf] %vm172, %v1582
  %1591 = vst.msk [vmem:[#allocation2 + $0xc8] sm:$0xf] %vm172, %v1583
  %1592 = vst.msk [vmem:[#allocation2 + $0xcc] sm:$0xf] %vm172, %v1584
  %1593 = vst.msk [vmem:[#allocation2 + $0xd0] sm:$0xf] %vm172, %v1585
  %1594 = vst.msk [vmem:[#allocation2 + $0xd4] sm:$0xf] %vm172, %v1586
  %1595 = vst.msk [vmem:[#allocation2 + $0xd8] sm:$0xf] %vm172, %v1587
  %1596 = vst.msk [vmem:[#allocation2 + $0xdc] sm:$0xf] %vm172, %v1588
  %s1597 = scalar_lea.vmem %s7, 112
  %v1598 = vld [vmem:[%s1597] sm:$0xf]
  %v1599 = vld [vmem:[%s1597 + $0x4] sm:$0xf]
  %v1600 = vld [vmem:[%s1597 + $0x8] sm:$0xf]
  %v1601 = vld [vmem:[%s1597 + $0xc] sm:$0xf]
  %v1606 = vunpack.c.l.b16 %v1598
  %v1607 = vunpack.c.l.b16 %v1599
  %v1608 = vunpack.c.l.b16 %v1600
  %v1609 = vunpack.c.l.b16 %v1601
  %v1610 = vpack.c.b16 %v1607, %v1606
  %v1611 = vpack.c.b16 %v1609, %v1608
  %1614 = vmatpush.bf16.msra.mxu0 0
  %1615 = vmatpush.bf16.msra.mxu0 0
  %1616 = vmatpush.bf16.msra.mxu0 0
  %1617 = vmatpush.bf16.msra.mxu0 0
  %1618 = vmatpush.bf16.msra.mxu0 0
  %1619 = vmatpush.bf16.msra.mxu0 0
  %1620 = vmatpush.bf16.msra.mxu0 %v1611
  %1621 = vmatpush.bf16.msra.mxu0 %v1610
  %1622 = vmatmul.bf16.gmra.mxu0 %v1124
  %v1623 = vpop.f32.mrf.mxu0
  %v1624 = vadd.f32 0.0, %v1623
  %v1625 = vpop.f32.mrf.mxu0
  %v1626 = vadd.f32 0.0, %v1625
  %1627 = vmatmul.bf16.gmra.mxu0 %v1127
  %v1628 = vpop.f32.mrf.mxu0
  %v1629 = vadd.f32 0.0, %v1628
  %v1630 = vpop.f32.mrf.mxu0
  %v1631 = vadd.f32 0.0, %v1630
  %1632 = vmatmul.bf16.gmra.mxu0 %v1130
  %v1633 = vpop.f32.mrf.mxu0
  %v1634 = vadd.f32 0.0, %v1633
  %v1635 = vpop.f32.mrf.mxu0
  %v1636 = vadd.f32 0.0, %v1635
  %1637 = vmatmul.bf16.gmra.mxu0 %v1133
  %v1638 = vpop.f32.mrf.mxu0
  %v1639 = vadd.f32 0.0, %v1638
  %v1640 = vpop.f32.mrf.mxu0
  %v1641 = vadd.f32 0.0, %v1640
  %1642 = vdwg.mxu0
  %v1643 = vpack.c.bf16 %v1624, %v1624
  %v1644 = vpack.c.bf16 %v1626, %v1626
  %v1645 = vpack.c.bf16 %v1629, %v1629
  %v1646 = vpack.c.bf16 %v1631, %v1631
  %v1647 = vpack.c.bf16 %v1634, %v1634
  %v1648 = vpack.c.bf16 %v1636, %v1636
  %v1649 = vpack.c.bf16 %v1639, %v1639
  %v1650 = vpack.c.bf16 %v1641, %v1641
  %1651 = vst.msk [vmem:[#allocation2 + $0xe0] sm:$0xf] %vm172, %v1643
  %1652 = vst.msk [vmem:[#allocation2 + $0xe4] sm:$0xf] %vm172, %v1644
  %1653 = vst.msk [vmem:[#allocation2 + $0xe8] sm:$0xf] %vm172, %v1645
  %1654 = vst.msk [vmem:[#allocation2 + $0xec] sm:$0xf] %vm172, %v1646
  %1655 = vst.msk [vmem:[#allocation2 + $0xf0] sm:$0xf] %vm172, %v1647
  %1656 = vst.msk [vmem:[#allocation2 + $0xf4] sm:$0xf] %vm172, %v1648
  %1657 = vst.msk [vmem:[#allocation2 + $0xf8] sm:$0xf] %vm172, %v1649
  %1658 = vst.msk [vmem:[#allocation2 + $0xfc] sm:$0xf] %vm172, %v1650
  %v1659 = vld [vmem:[%s0] sm:$0xff]
  %v1660 = vld [vmem:[%s0 + $0x8] sm:$0xff]
  %v1661 = vld [vmem:[%s0 + $0x10] sm:$0xff]
  %v1662 = vld [vmem:[%s0 + $0x18] sm:$0xff]
  %v1663 = vld [vmem:[%s0 + $0x20] sm:$0xff]
  %v1664 = vld [vmem:[%s0 + $0x28] sm:$0xff]
  %v1665 = vld [vmem:[%s0 + $0x30] sm:$0xff]
  %v1666 = vld [vmem:[%s0 + $0x38] sm:$0xff]
  %v1667 = vld [vmem:[%s0 + $0x40] sm:$0xff]
  %v1668 = vld [vmem:[%s0 + $0x48] sm:$0xff]
  %v1669 = vld [vmem:[%s0 + $0x50] sm:$0xff]
  %v1670 = vld [vmem:[%s0 + $0x58] sm:$0xff]
  %v1671 = vld [vmem:[%s0 + $0x60] sm:$0xff]
  %v1672 = vld [vmem:[%s0 + $0x68] sm:$0xff]
  %v1673 = vld [vmem:[%s0 + $0x70] sm:$0xff]
  %v1674 = vld [vmem:[%s0 + $0x78] sm:$0xff]
  %v1675 = vld [vmem:[#allocation2] sm:$0xf]
  %v1676 = vld [vmem:[#allocation2 + $0x4] sm:$0xf]
  %v1677 = vld [vmem:[#allocation2 + $0x8] sm:$0xf]
  %v1678 = vld [vmem:[#allocation2 + $0xc] sm:$0xf]
  %v1679 = vld [vmem:[#allocation2 + $0x10] sm:$0xf]
  %v1680 = vld [vmem:[#allocation2 + $0x14] sm:$0xf]
  %v1681 = vld [vmem:[#allocation2 + $0x18] sm:$0xf]
  %v1682 = vld [vmem:[#allocation2 + $0x1c] sm:$0xf]
  %v1683 = vld [vmem:[#allocation2 + $0x20] sm:$0xf]
  %v1684 = vld [vmem:[#allocation2 + $0x24] sm:$0xf]
  %v1685 = vld [vmem:[#allocation2 + $0x28] sm:$0xf]
  %v1686 = vld [vmem:[#allocation2 + $0x2c] sm:$0xf]
  %v1687 = vld [vmem:[#allocation2 + $0x30] sm:$0xf]
  %v1688 = vld [vmem:[#allocation2 + $0x34] sm:$0xf]
  %v1689 = vld [vmem:[#allocation2 + $0x38] sm:$0xf]
  %v1690 = vld [vmem:[#allocation2 + $0x3c] sm:$0xf]
  %v1691 = vld [vmem:[#allocation2 + $0x40] sm:$0xf]
  %v1692 = vld [vmem:[#allocation2 + $0x44] sm:$0xf]
  %v1693 = vld [vmem:[#allocation2 + $0x48] sm:$0xf]
  %v1694 = vld [vmem:[#allocation2 + $0x4c] sm:$0xf]
  %v1695 = vld [vmem:[#allocation2 + $0x50] sm:$0xf]
  %v1696 = vld [vmem:[#allocation2 + $0x54] sm:$0xf]
  %v1697 = vld [vmem:[#allocation2 + $0x58] sm:$0xf]
  %v1698 = vld [vmem:[#allocation2 + $0x5c] sm:$0xf]
  %v1699 = vld [vmem:[#allocation2 + $0x60] sm:$0xf]
  %v1700 = vld [vmem:[#allocation2 + $0x64] sm:$0xf]
  %v1701 = vld [vmem:[#allocation2 + $0x68] sm:$0xf]
  %v1702 = vld [vmem:[#allocation2 + $0x6c] sm:$0xf]
  %v1703 = vld [vmem:[#allocation2 + $0x70] sm:$0xf]
  %v1704 = vld [vmem:[#allocation2 + $0x74] sm:$0xf]
  %v1705 = vld [vmem:[#allocation2 + $0x78] sm:$0xf]
  %v1706 = vld [vmem:[#allocation2 + $0x7c] sm:$0xf]
  %v1707 = vld [vmem:[#allocation2 + $0x80] sm:$0xf]
  %v1708 = vld [vmem:[#allocation2 + $0x84] sm:$0xf]
  %v1709 = vld [vmem:[#allocation2 + $0x88] sm:$0xf]
  %v1710 = vld [vmem:[#allocation2 + $0x8c] sm:$0xf]
  %v1711 = vld [vmem:[#allocation2 + $0x90] sm:$0xf]
  %v1712 = vld [vmem:[#allocation2 + $0x94] sm:$0xf]
  %v1713 = vld [vmem:[#allocation2 + $0x98] sm:$0xf]
  %v1714 = vld [vmem:[#allocation2 + $0x9c] sm:$0xf]
  %v1715 = vld [vmem:[#allocation2 + $0xa0] sm:$0xf]
  %v1716 = vld [vmem:[#allocation2 + $0xa4] sm:$0xf]
  %v1717 = vld [vmem:[#allocation2 + $0xa8] sm:$0xf]
  %v1718 = vld [vmem:[#allocation2 + $0xac] sm:$0xf]
  %v1719 = vld [vmem:[#allocation2 + $0xb0] sm:$0xf]
  %v1720 = vld [vmem:[#allocation2 + $0xb4] sm:$0xf]
  %v1721 = vld [vmem:[#allocation2 + $0xb8] sm:$0xf]
  %v1722 = vld [vmem:[#allocation2 + $0xbc] sm:$0xf]
  %v1723 = vld [vmem:[#allocation2 + $0xc0] sm:$0xf]
  %v1724 = vld [vmem:[#allocation2 + $0xc4] sm:$0xf]
  %v1725 = vld [vmem:[#allocation2 + $0xc8] sm:$0xf]
  %v1726 = vld [vmem:[#allocation2 + $0xcc] sm:$0xf]
  %v1727 = vld [vmem:[#allocation2 + $0xd0] sm:$0xf]
  %v1728 = vld [vmem:[#allocation2 + $0xd4] sm:$0xf]
  %v1729 = vld [vmem:[#allocation2 + $0xd8] sm:$0xf]
  %v1730 = vld [vmem:[#allocation2 + $0xdc] sm:$0xf]
  %v1731 = vld [vmem:[#allocation2 + $0xe0] sm:$0xf]
  %v1732 = vld [vmem:[#allocation2 + $0xe4] sm:$0xf]
  %v1733 = vld [vmem:[#allocation2 + $0xe8] sm:$0xf]
  %v1734 = vld [vmem:[#allocation2 + $0xec] sm:$0xf]
  %v1735 = vld [vmem:[#allocation2 + $0xf0] sm:$0xf]
  %v1736 = vld [vmem:[#allocation2 + $0xf4] sm:$0xf]
  %v1737 = vld [vmem:[#allocation2 + $0xf8] sm:$0xf]
  %v1738 = vld [vmem:[#allocation2 + $0xfc] sm:$0xf]
  %v1755 = vunpack.c.l.b16 %v1659
  %v1756 = vunpack.c.h.b16 %v1659
  %v1757 = vunpack.c.l.b16 %v1660
  %v1758 = vunpack.c.h.b16 %v1660
  %v1759 = vunpack.c.l.b16 %v1661
  %v1760 = vunpack.c.h.b16 %v1661
  %v1761 = vunpack.c.l.b16 %v1662
  %v1762 = vunpack.c.h.b16 %v1662
  %v1763 = vunpack.c.l.b16 %v1663
  %v1764 = vunpack.c.h.b16 %v1663
  %v1765 = vunpack.c.l.b16 %v1664
  %v1766 = vunpack.c.h.b16 %v1664
  %v1767 = vunpack.c.l.b16 %v1665
  %v1768 = vunpack.c.h.b16 %v1665
  %v1769 = vunpack.c.l.b16 %v1666
  %v1770 = vunpack.c.h.b16 %v1666
  %v1771 = vunpack.c.l.b16 %v1667
  %v1772 = vunpack.c.h.b16 %v1667
  %v1773 = vunpack.c.l.b16 %v1668
  %v1774 = vunpack.c.h.b16 %v1668
  %v1775 = vunpack.c.l.b16 %v1669
  %v1776 = vunpack.c.h.b16 %v1669
  %v1777 = vunpack.c.l.b16 %v1670
  %v1778 = vunpack.c.h.b16 %v1670
  %v1779 = vunpack.c.l.b16 %v1671
  %v1780 = vunpack.c.h.b16 %v1671
  %v1781 = vunpack.c.l.b16 %v1672
  %v1782 = vunpack.c.h.b16 %v1672
  %v1783 = vunpack.c.l.b16 %v1673
  %v1784 = vunpack.c.h.b16 %v1673
  %v1785 = vunpack.c.l.b16 %v1674
  %v1786 = vunpack.c.h.b16 %v1674
  %v1787 = vpack.c.b16 %v1759, %v1755
  %v1788 = vpack.c.b16 %v1760, %v1756
  %v1789 = vpack.c.b16 %v1761, %v1757
  %v1790 = vpack.c.b16 %v1762, %v1758
  %v1791 = vpack.c.b16 %v1767, %v1763
  %v1792 = vpack.c.b16 %v1768, %v1764
  %v1793 = vpack.c.b16 %v1769, %v1765
  %v1794 = vpack.c.b16 %v1770, %v1766
  %v1795 = vpack.c.b16 %v1775, %v1771
  %v1796 = vpack.c.b16 %v1776, %v1772
  %v1797 = vpack.c.b16 %v1777, %v1773
  %v1798 = vpack.c.b16 %v1778, %v1774
  %v1799 = vpack.c.b16 %v1783, %v1779
  %v1800 = vpack.c.b16 %v1784, %v1780
  %v1801 = vpack.c.b16 %v1785, %v1781
  %v1802 = vpack.c.b16 %v1786, %v1782
  %v1883 = vunpack.c.l.b16 %v1675
  %v1884 = vunpack.c.l.b16 %v1676
  %v1885 = vunpack.c.l.b16 %v1677
  %v1886 = vunpack.c.l.b16 %v1678
  %v1887 = vunpack.c.l.b16 %v1679
  %v1888 = vunpack.c.l.b16 %v1680
  %v1889 = vunpack.c.l.b16 %v1681
  %v1890 = vunpack.c.l.b16 %v1682
  %v1891 = vunpack.c.l.b16 %v1683
  %v1892 = vunpack.c.l.b16 %v1684
  %v1893 = vunpack.c.l.b16 %v1685
  %v1894 = vunpack.c.l.b16 %v1686
  %v1895 = vunpack.c.l.b16 %v1687
  %v1896 = vunpack.c.l.b16 %v1688
  %v1897 = vunpack.c.l.b16 %v1689
  %v1898 = vunpack.c.l.b16 %v1690
  %v1899 = vunpack.c.l.b16 %v1691
  %v1900 = vunpack.c.l.b16 %v1692
  %v1901 = vunpack.c.l.b16 %v1693
  %v1902 = vunpack.c.l.b16 %v1694
  %v1903 = vunpack.c.l.b16 %v1695
  %v1904 = vunpack.c.l.b16 %v1696
  %v1905 = vunpack.c.l.b16 %v1697
  %v1906 = vunpack.c.l.b16 %v1698
  %v1907 = vunpack.c.l.b16 %v1699
  %v1908 = vunpack.c.l.b16 %v1700
  %v1909 = vunpack.c.l.b16 %v1701
  %v1910 = vunpack.c.l.b16 %v1702
  %v1911 = vunpack.c.l.b16 %v1703
  %v1912 = vunpack.c.l.b16 %v1704
  %v1913 = vunpack.c.l.b16 %v1705
  %v1914 = vunpack.c.l.b16 %v1706
  %v1915 = vunpack.c.l.b16 %v1707
  %v1916 = vunpack.c.l.b16 %v1708
  %v1917 = vunpack.c.l.b16 %v1709
  %v1918 = vunpack.c.l.b16 %v1710
  %v1919 = vunpack.c.l.b16 %v1711
  %v1920 = vunpack.c.l.b16 %v1712
  %v1921 = vunpack.c.l.b16 %v1713
  %v1922 = vunpack.c.l.b16 %v1714
  %v1923 = vunpack.c.l.b16 %v1715
  %v1924 = vunpack.c.l.b16 %v1716
  %v1925 = vunpack.c.l.b16 %v1717
  %v1926 = vunpack.c.l.b16 %v1718
  %v1927 = vunpack.c.l.b16 %v1719
  %v1928 = vunpack.c.l.b16 %v1720
  %v1929 = vunpack.c.l.b16 %v1721
  %v1930 = vunpack.c.l.b16 %v1722
  %v1931 = vunpack.c.l.b16 %v1723
  %v1932 = vunpack.c.l.b16 %v1724
  %v1933 = vunpack.c.l.b16 %v1725
  %v1934 = vunpack.c.l.b16 %v1726
  %v1935 = vunpack.c.l.b16 %v1727
  %v1936 = vunpack.c.l.b16 %v1728
  %v1937 = vunpack.c.l.b16 %v1729
  %v1938 = vunpack.c.l.b16 %v1730
  %v1939 = vunpack.c.l.b16 %v1731
  %v1940 = vunpack.c.l.b16 %v1732
  %v1941 = vunpack.c.l.b16 %v1733
  %v1942 = vunpack.c.l.b16 %v1734
  %v1943 = vunpack.c.l.b16 %v1735
  %v1944 = vunpack.c.l.b16 %v1736
  %v1945 = vunpack.c.l.b16 %v1737
  %v1946 = vunpack.c.l.b16 %v1738
  %v1947 = vpack.c.b16 %v1884, %v1883
  %v1948 = vpack.c.b16 %v1886, %v1885
  %v1949 = vpack.c.b16 %v1888, %v1887
  %v1950 = vpack.c.b16 %v1890, %v1889
  %v1951 = vpack.c.b16 %v1892, %v1891
  %v1952 = vpack.c.b16 %v1894, %v1893
  %v1953 = vpack.c.b16 %v1896, %v1895
  %v1954 = vpack.c.b16 %v1898, %v1897
  %v1955 = vpack.c.b16 %v1900, %v1899
  %v1956 = vpack.c.b16 %v1902, %v1901
  %v1957 = vpack.c.b16 %v1904, %v1903
  %v1958 = vpack.c.b16 %v1906, %v1905
  %v1959 = vpack.c.b16 %v1908, %v1907
  %v1960 = vpack.c.b16 %v1910, %v1909
  %v1961 = vpack.c.b16 %v1912, %v1911
  %v1962 = vpack.c.b16 %v1914, %v1913
  %v1963 = vpack.c.b16 %v1916, %v1915
  %v1964 = vpack.c.b16 %v1918, %v1917
  %v1965 = vpack.c.b16 %v1920, %v1919
  %v1966 = vpack.c.b16 %v1922, %v1921
  %v1967 = vpack.c.b16 %v1924, %v1923
  %v1968 = vpack.c.b16 %v1926, %v1925
  %v1969 = vpack.c.b16 %v1928, %v1927
  %v1970 = vpack.c.b16 %v1930, %v1929
  %v1971 = vpack.c.b16 %v1932, %v1931
  %v1972 = vpack.c.b16 %v1934, %v1933
  %v1973 = vpack.c.b16 %v1936, %v1935
  %v1974 = vpack.c.b16 %v1938, %v1937
  %v1975 = vpack.c.b16 %v1940, %v1939
  %v1976 = vpack.c.b16 %v1942, %v1941
  %v1977 = vpack.c.b16 %v1944, %v1943
  %v1978 = vpack.c.b16 %v1946, %v1945
  %2011 = vmatpush.bf16.msra.mxu0 %v1954
  %2012 = vmatpush.bf16.msra.mxu0 %v1953
  %2013 = vmatpush.bf16.msra.mxu0 %v1952
  %2014 = vmatpush.bf16.msra.mxu0 %v1951
  %2015 = vmatpush.bf16.msra.mxu0 %v1950
  %2016 = vmatpush.bf16.msra.mxu0 %v1949
  %2017 = vmatpush.bf16.msra.mxu0 %v1948
  %2018 = vmatpush.bf16.msra.mxu0 %v1947
  %2019 = vmatmul.bf16.gmra.mxu0 %v1787
  %v2020 = vpop.f32.mrf.mxu0
  %v2021 = vadd.f32 0.0, %v2020
  %v2022 = vpop.f32.mrf.mxu0
  %v2023 = vadd.f32 0.0, %v2022
  %2024 = vmatmul.bf16.gmra.mxu0 %v1791
  %v2025 = vpop.f32.mrf.mxu0
  %v2026 = vadd.f32 0.0, %v2025
  %v2027 = vpop.f32.mrf.mxu0
  %v2028 = vadd.f32 0.0, %v2027
  %2029 = vmatmul.bf16.gmra.mxu0 %v1795
  %v2030 = vpop.f32.mrf.mxu0
  %v2031 = vadd.f32 0.0, %v2030
  %v2032 = vpop.f32.mrf.mxu0
  %v2033 = vadd.f32 0.0, %v2032
  %2034 = vmatmul.bf16.gmra.mxu0 %v1799
  %v2035 = vpop.f32.mrf.mxu0
  %v2036 = vadd.f32 0.0, %v2035
  %v2037 = vpop.f32.mrf.mxu0
  %v2038 = vadd.f32 0.0, %v2037
  %2039 = vdwg.mxu0
  %2040 = vmatpush.bf16.msra.mxu0 %v1962
  %2041 = vmatpush.bf16.msra.mxu0 %v1961
  %2042 = vmatpush.bf16.msra.mxu0 %v1960
  %2043 = vmatpush.bf16.msra.mxu0 %v1959
  %2044 = vmatpush.bf16.msra.mxu0 %v1958
  %2045 = vmatpush.bf16.msra.mxu0 %v1957
  %2046 = vmatpush.bf16.msra.mxu0 %v1956
  %2047 = vmatpush.bf16.msra.mxu0 %v1955
  %2048 = vmatmul.bf16.gmra.mxu0 %v1788
  %v2049 = vpop.f32.mrf.mxu0
  %v2050 = vadd.f32 %v2021, %v2049
  %v2051 = vpop.f32.mrf.mxu0
  %v2052 = vadd.f32 %v2023, %v2051
  %2053 = vmatmul.bf16.gmra.mxu0 %v1792
  %v2054 = vpop.f32.mrf.mxu0
  %v2055 = vadd.f32 %v2026, %v2054
  %v2056 = vpop.f32.mrf.mxu0
  %v2057 = vadd.f32 %v2028, %v2056
  %2058 = vmatmul.bf16.gmra.mxu0 %v1796
  %v2059 = vpop.f32.mrf.mxu0
  %v2060 = vadd.f32 %v2031, %v2059
  %v2061 = vpop.f32.mrf.mxu0
  %v2062 = vadd.f32 %v2033, %v2061
  %2063 = vmatmul.bf16.gmra.mxu0 %v1800
  %v2064 = vpop.f32.mrf.mxu0
  %v2065 = vadd.f32 %v2036, %v2064
  %v2066 = vpop.f32.mrf.mxu0
  %v2067 = vadd.f32 %v2038, %v2066
  %2068 = vdwg.mxu0
  %2069 = vmatpush.bf16.msra.mxu0 %v1970
  %2070 = vmatpush.bf16.msra.mxu0 %v1969
  %2071 = vmatpush.bf16.msra.mxu0 %v1968
  %2072 = vmatpush.bf16.msra.mxu0 %v1967
  %2073 = vmatpush.bf16.msra.mxu0 %v1966
  %2074 = vmatpush.bf16.msra.mxu0 %v1965
  %2075 = vmatpush.bf16.msra.mxu0 %v1964
  %2076 = vmatpush.bf16.msra.mxu0 %v1963
  %2077 = vmatmul.bf16.gmra.mxu0 %v1789
  %v2078 = vpop.f32.mrf.mxu0
  %v2079 = vadd.f32 %v2050, %v2078
  %v2080 = vpop.f32.mrf.mxu0
  %v2081 = vadd.f32 %v2052, %v2080
  %2082 = vmatmul.bf16.gmra.mxu0 %v1793
  %v2083 = vpop.f32.mrf.mxu0
  %v2084 = vadd.f32 %v2055, %v2083
  %v2085 = vpop.f32.mrf.mxu0
  %v2086 = vadd.f32 %v2057, %v2085
  %2087 = vmatmul.bf16.gmra.mxu0 %v1797
  %v2088 = vpop.f32.mrf.mxu0
  %v2089 = vadd.f32 %v2060, %v2088
  %v2090 = vpop.f32.mrf.mxu0
  %v2091 = vadd.f32 %v2062, %v2090
  %2092 = vmatmul.bf16.gmra.mxu0 %v1801
  %v2093 = vpop.f32.mrf.mxu0
  %v2094 = vadd.f32 %v2065, %v2093
  %v2095 = vpop.f32.mrf.mxu0
  %v2096 = vadd.f32 %v2067, %v2095
  %2097 = vdwg.mxu0
  %2098 = vmatpush.bf16.msra.mxu0 %v1978
  %2099 = vmatpush.bf16.msra.mxu0 %v1977
  %2100 = vmatpush.bf16.msra.mxu0 %v1976
  %2101 = vmatpush.bf16.msra.mxu0 %v1975
  %2102 = vmatpush.bf16.msra.mxu0 %v1974
  %2103 = vmatpush.bf16.msra.mxu0 %v1973
  %2104 = vmatpush.bf16.msra.mxu0 %v1972
  %2105 = vmatpush.bf16.msra.mxu0 %v1971
  %2106 = vmatmul.bf16.gmra.mxu0 %v1790
  %v2107 = vpop.f32.mrf.mxu0
  %v2108 = vadd.f32 %v2079, %v2107
  %v2109 = vpop.f32.mrf.mxu0
  %v2110 = vadd.f32 %v2081, %v2109
  %2111 = vmatmul.bf16.gmra.mxu0 %v1794
  %v2112 = vpop.f32.mrf.mxu0
  %v2113 = vadd.f32 %v2084, %v2112
  %v2114 = vpop.f32.mrf.mxu0
  %v2115 = vadd.f32 %v2086, %v2114
  %2116 = vmatmul.bf16.gmra.mxu0 %v1798
  %v2117 = vpop.f32.mrf.mxu0
  %v2118 = vadd.f32 %v2089, %v2117
  %v2119 = vpop.f32.mrf.mxu0
  %v2120 = vadd.f32 %v2091, %v2119
  %2121 = vmatmul.bf16.gmra.mxu0 %v1802
  %v2122 = vpop.f32.mrf.mxu0
  %v2123 = vadd.f32 %v2094, %v2122
  %v2124 = vpop.f32.mrf.mxu0
  %v2125 = vadd.f32 %v2096, %v2124
  %2126 = vdwg.mxu0
  %v2127 = vadd.f32 %v1145, %v2108
  %v2128 = vadd.f32 %v1147, %v2110
  %v2129 = vadd.f32 %v1150, %v2113
  %v2130 = vadd.f32 %v1152, %v2115
  %v2131 = vadd.f32 %v1155, %v2118
  %v2132 = vadd.f32 %v1157, %v2120
  %v2133 = vadd.f32 %v1160, %v2123
  %v2134 = vadd.f32 %v1162, %v2125
  %v2135 = vmax.f32 %v2127, 0.0
  %v2136 = vmax.f32 %v2128, 0.0
  %v2137 = vmax.f32 %v2129, 0.0
  %v2138 = vmax.f32 %v2130, 0.0
  %v2139 = vmax.f32 %v2131, 0.0
  %v2140 = vmax.f32 %v2132, 0.0
  %v2141 = vmax.f32 %v2133, 0.0
  %v2142 = vmax.f32 %v2134, 0.0
  %v2143 = vpack.c.bf16 %v2136, %v2135
  %v2144 = vpack.c.bf16 %v2138, %v2137
  %v2145 = vpack.c.bf16 %v2140, %v2139
  %v2146 = vpack.c.bf16 %v2142, %v2141
  %v2147 = vld [vmem:[%s11] sm:$0xf]
  %v2148 = vld [vmem:[%s11 + $0x4] sm:$0xf]
  %v2149 = vld [vmem:[%s11 + $0x8] sm:$0xf]
  %v2150 = vld [vmem:[%s11 + $0xc] sm:$0xf]
  %v2151 = vld [vmem:[%s12] sm:$0x1]
  %v2153 = vperm.slane %v2151, 0
  %v2159 = vunpack.c.l.b16 %v2147
  %v2160 = vunpack.c.l.b16 %v2148
  %v2161 = vunpack.c.l.b16 %v2149
  %v2162 = vunpack.c.l.b16 %v2150
  %v2163 = vpack.c.b16 %v2160, %v2159
  %v2164 = vpack.c.b16 %v2162, %v2161
  %v2168 = vsel %vm77, %v2143, 0
  %v2171 = vsel %vm77, %v2144, 0
  %v2174 = vsel %vm77, %v2145, 0
  %v2177 = vsel %vm77, %v2146, 0
  %2179 = vmatpush.bf16.msra.mxu0 0
  %2180 = vmatpush.bf16.msra.mxu0 0
  %2181 = vmatpush.bf16.msra.mxu0 0
  %2182 = vmatpush.bf16.msra.mxu0 0
  %2183 = vmatpush.bf16.msra.mxu0 0
  %2184 = vmatpush.bf16.msra.mxu0 0
  %2185 = vmatpush.bf16.msra.mxu0 %v2164
  %2186 = vmatpush.bf16.msra.mxu0 %v2163
  %2187 = vmatmul.bf16.gmra.mxu0 %v2168
  %v2188 = vpop.f32.mrf.mxu0
  %v2189 = vadd.f32 %v2153, %v2188
  %v2190 = vpop.f32.mrf.mxu0
  %v2191 = vadd.f32 %v2153, %v2190
  %2192 = vmatmul.bf16.gmra.mxu0 %v2171
  %v2193 = vpop.f32.mrf.mxu0
  %v2194 = vadd.f32 %v2153, %v2193
  %v2195 = vpop.f32.mrf.mxu0
  %v2196 = vadd.f32 %v2153, %v2195
  %2197 = vmatmul.bf16.gmra.mxu0 %v2174
  %v2198 = vpop.f32.mrf.mxu0
  %v2199 = vadd.f32 %v2153, %v2198
  %v2200 = vpop.f32.mrf.mxu0
  %v2201 = vadd.f32 %v2153, %v2200
  %2202 = vmatmul.bf16.gmra.mxu0 %v2177
  %v2203 = vpop.f32.mrf.mxu0
  %v2204 = vadd.f32 %v2153, %v2203
  %v2205 = vpop.f32.mrf.mxu0
  %v2206 = vadd.f32 %v2153, %v2205
  %2207 = vdwg.mxu0
  %v2208 = vld [vmem:[%s10] sm:$0xf]
  %v2209 = vld [vmem:[%s10 + $0x4] sm:$0xf]
  %v2210 = vld [vmem:[%s10 + $0x8] sm:$0xf]
  %v2211 = vld [vmem:[%s10 + $0xc] sm:$0xf]
  %v2216 = vunpack.c.l.b16 %v2208
  %v2217 = vunpack.c.l.b16 %v2209
  %v2218 = vunpack.c.l.b16 %v2210
  %v2219 = vunpack.c.l.b16 %v2211
  %v2220 = vpack.c.b16 %v2217, %v2216
  %v2221 = vpack.c.b16 %v2219, %v2218
  %2224 = vmatpush.bf16.msra.mxu0 0
  %2225 = vmatpush.bf16.msra.mxu0 0
  %2226 = vmatpush.bf16.msra.mxu0 0
  %2227 = vmatpush.bf16.msra.mxu0 0
  %2228 = vmatpush.bf16.msra.mxu0 0
  %2229 = vmatpush.bf16.msra.mxu0 0
  %2230 = vmatpush.bf16.msra.mxu0 %v2221
  %2231 = vmatpush.bf16.msra.mxu0 %v2220
  %2232 = vmatmul.bf16.gmra.mxu0 %v2168
  %v2233 = vpop.f32.mrf.mxu0
  %v2234 = vadd.f32 0.0, %v2233
  %v2235 = vpop.f32.mrf.mxu0
  %v2236 = vadd.f32 0.0, %v2235
  %2237 = vmatmul.bf16.gmra.mxu0 %v2171
  %v2238 = vpop.f32.mrf.mxu0
  %v2239 = vadd.f32 0.0, %v2238
  %v2240 = vpop.f32.mrf.mxu0
  %v2241 = vadd.f32 0.0, %v2240
  %2242 = vmatmul.bf16.gmra.mxu0 %v2174
  %v2243 = vpop.f32.mrf.mxu0
  %v2244 = vadd.f32 0.0, %v2243
  %v2245 = vpop.f32.mrf.mxu0
  %v2246 = vadd.f32 0.0, %v2245
  %2247 = vmatmul.bf16.gmra.mxu0 %v2177
  %v2248 = vpop.f32.mrf.mxu0
  %v2249 = vadd.f32 0.0, %v2248
  %v2250 = vpop.f32.mrf.mxu0
  %v2251 = vadd.f32 0.0, %v2250
  %2252 = vdwg.mxu0
  %v2253 = vpack.c.bf16 %v2234, %v2234
  %v2254 = vpack.c.bf16 %v2236, %v2236
  %v2255 = vpack.c.bf16 %v2239, %v2239
  %v2256 = vpack.c.bf16 %v2241, %v2241
  %v2257 = vpack.c.bf16 %v2244, %v2244
  %v2258 = vpack.c.bf16 %v2246, %v2246
  %v2259 = vpack.c.bf16 %v2249, %v2249
  %v2260 = vpack.c.bf16 %v2251, %v2251
  %2261 = vst.msk [vmem:[#allocation2] sm:$0xf] %vm172, %v2253
  %2262 = vst.msk [vmem:[#allocation2 + $0x4] sm:$0xf] %vm172, %v2254
  %2263 = vst.msk [vmem:[#allocation2 + $0x8] sm:$0xf] %vm172, %v2255
  %2264 = vst.msk [vmem:[#allocation2 + $0xc] sm:$0xf] %vm172, %v2256
  %2265 = vst.msk [vmem:[#allocation2 + $0x10] sm:$0xf] %vm172, %v2257
  %2266 = vst.msk [vmem:[#allocation2 + $0x14] sm:$0xf] %vm172, %v2258
  %2267 = vst.msk [vmem:[#allocation2 + $0x18] sm:$0xf] %vm172, %v2259
  %2268 = vst.msk [vmem:[#allocation2 + $0x1c] sm:$0xf] %vm172, %v2260
  %s2269 = scalar_lea.vmem %s10, 16
  %v2270 = vld [vmem:[%s2269] sm:$0xf]
  %v2271 = vld [vmem:[%s2269 + $0x4] sm:$0xf]
  %v2272 = vld [vmem:[%s2269 + $0x8] sm:$0xf]
  %v2273 = vld [vmem:[%s2269 + $0xc] sm:$0xf]
  %v2278 = vunpack.c.l.b16 %v2270
  %v2279 = vunpack.c.l.b16 %v2271
  %v2280 = vunpack.c.l.b16 %v2272
  %v2281 = vunpack.c.l.b16 %v2273
  %v2282 = vpack.c.b16 %v2279, %v2278
  %v2283 = vpack.c.b16 %v2281, %v2280
  %2286 = vmatpush.bf16.msra.mxu0 0
  %2287 = vmatpush.bf16.msra.mxu0 0
  %2288 = vmatpush.bf16.msra.mxu0 0
  %2289 = vmatpush.bf16.msra.mxu0 0
  %2290 = vmatpush.bf16.msra.mxu0 0
  %2291 = vmatpush.bf16.msra.mxu0 0
  %2292 = vmatpush.bf16.msra.mxu0 %v2283
  %2293 = vmatpush.bf16.msra.mxu0 %v2282
  %2294 = vmatmul.bf16.gmra.mxu0 %v2168
  %v2295 = vpop.f32.mrf.mxu0
  %v2296 = vadd.f32 0.0, %v2295
  %v2297 = vpop.f32.mrf.mxu0
  %v2298 = vadd.f32 0.0, %v2297
  %2299 = vmatmul.bf16.gmra.mxu0 %v2171
  %v2300 = vpop.f32.mrf.mxu0
  %v2301 = vadd.f32 0.0, %v2300
  %v2302 = vpop.f32.mrf.mxu0
  %v2303 = vadd.f32 0.0, %v2302
  %2304 = vmatmul.bf16.gmra.mxu0 %v2174
  %v2305 = vpop.f32.mrf.mxu0
  %v2306 = vadd.f32 0.0, %v2305
  %v2307 = vpop.f32.mrf.mxu0
  %v2308 = vadd.f32 0.0, %v2307
  %2309 = vmatmul.bf16.gmra.mxu0 %v2177
  %v2310 = vpop.f32.mrf.mxu0
  %v2311 = vadd.f32 0.0, %v2310
  %v2312 = vpop.f32.mrf.mxu0
  %v2313 = vadd.f32 0.0, %v2312
  %2314 = vdwg.mxu0
  %v2315 = vpack.c.bf16 %v2296, %v2296
  %v2316 = vpack.c.bf16 %v2298, %v2298
  %v2317 = vpack.c.bf16 %v2301, %v2301
  %v2318 = vpack.c.bf16 %v2303, %v2303
  %v2319 = vpack.c.bf16 %v2306, %v2306
  %v2320 = vpack.c.bf16 %v2308, %v2308
  %v2321 = vpack.c.bf16 %v2311, %v2311
  %v2322 = vpack.c.bf16 %v2313, %v2313
  %2323 = vst.msk [vmem:[#allocation2 + $0x20] sm:$0xf] %vm172, %v2315
  %2324 = vst.msk [vmem:[#allocation2 + $0x24] sm:$0xf] %vm172, %v2316
  %2325 = vst.msk [vmem:[#allocation2 + $0x28] sm:$0xf] %vm172, %v2317
  %2326 = vst.msk [vmem:[#allocation2 + $0x2c] sm:$0xf] %vm172, %v2318
  %2327 = vst.msk [vmem:[#allocation2 + $0x30] sm:$0xf] %vm172, %v2319
  %2328 = vst.msk [vmem:[#allocation2 + $0x34] sm:$0xf] %vm172, %v2320
  %2329 = vst.msk [vmem:[#allocation2 + $0x38] sm:$0xf] %vm172, %v2321
  %2330 = vst.msk [vmem:[#allocation2 + $0x3c] sm:$0xf] %vm172, %v2322
  %s2331 = scalar_lea.vmem %s10, 32
  %v2332 = vld [vmem:[%s2331] sm:$0xf]
  %v2333 = vld [vmem:[%s2331 + $0x4] sm:$0xf]
  %v2334 = vld [vmem:[%s2331 + $0x8] sm:$0xf]
  %v2335 = vld [vmem:[%s2331 + $0xc] sm:$0xf]
  %v2340 = vunpack.c.l.b16 %v2332
  %v2341 = vunpack.c.l.b16 %v2333
  %v2342 = vunpack.c.l.b16 %v2334
  %v2343 = vunpack.c.l.b16 %v2335
  %v2344 = vpack.c.b16 %v2341, %v2340
  %v2345 = vpack.c.b16 %v2343, %v2342
  %2348 = vmatpush.bf16.msra.mxu0 0
  %2349 = vmatpush.bf16.msra.mxu0 0
  %2350 = vmatpush.bf16.msra.mxu0 0
  %2351 = vmatpush.bf16.msra.mxu0 0
  %2352 = vmatpush.bf16.msra.mxu0 0
  %2353 = vmatpush.bf16.msra.mxu0 0
  %2354 = vmatpush.bf16.msra.mxu0 %v2345
  %2355 = vmatpush.bf16.msra.mxu0 %v2344
  %2356 = vmatmul.bf16.gmra.mxu0 %v2168
  %v2357 = vpop.f32.mrf.mxu0
  %v2358 = vadd.f32 0.0, %v2357
  %v2359 = vpop.f32.mrf.mxu0
  %v2360 = vadd.f32 0.0, %v2359
  %2361 = vmatmul.bf16.gmra.mxu0 %v2171
  %v2362 = vpop.f32.mrf.mxu0
  %v2363 = vadd.f32 0.0, %v2362
  %v2364 = vpop.f32.mrf.mxu0
  %v2365 = vadd.f32 0.0, %v2364
  %2366 = vmatmul.bf16.gmra.mxu0 %v2174
  %v2367 = vpop.f32.mrf.mxu0
  %v2368 = vadd.f32 0.0, %v2367
  %v2369 = vpop.f32.mrf.mxu0
  %v2370 = vadd.f32 0.0, %v2369
  %2371 = vmatmul.bf16.gmra.mxu0 %v2177
  %v2372 = vpop.f32.mrf.mxu0
  %v2373 = vadd.f32 0.0, %v2372
  %v2374 = vpop.f32.mrf.mxu0
  %v2375 = vadd.f32 0.0, %v2374
  %2376 = vdwg.mxu0
  %v2377 = vpack.c.bf16 %v2358, %v2358
  %v2378 = vpack.c.bf16 %v2360, %v2360
  %v2379 = vpack.c.bf16 %v2363, %v2363
  %v2380 = vpack.c.bf16 %v2365, %v2365
  %v2381 = vpack.c.bf16 %v2368, %v2368
  %v2382 = vpack.c.bf16 %v2370, %v2370
  %v2383 = vpack.c.bf16 %v2373, %v2373
  %v2384 = vpack.c.bf16 %v2375, %v2375
  %2385 = vst.msk [vmem:[#allocation2 + $0x40] sm:$0xf] %vm172, %v2377
  %2386 = vst.msk [vmem:[#allocation2 + $0x44] sm:$0xf] %vm172, %v2378
  %2387 = vst.msk [vmem:[#allocation2 + $0x48] sm:$0xf] %vm172, %v2379
  %2388 = vst.msk [vmem:[#allocation2 + $0x4c] sm:$0xf] %vm172, %v2380
  %2389 = vst.msk [vmem:[#allocation2 + $0x50] sm:$0xf] %vm172, %v2381
  %2390 = vst.msk [vmem:[#allocation2 + $0x54] sm:$0xf] %vm172, %v2382
  %2391 = vst.msk [vmem:[#allocation2 + $0x58] sm:$0xf] %vm172, %v2383
  %2392 = vst.msk [vmem:[#allocation2 + $0x5c] sm:$0xf] %vm172, %v2384
  %s2393 = scalar_lea.vmem %s10, 48
  %v2394 = vld [vmem:[%s2393] sm:$0xf]
  %v2395 = vld [vmem:[%s2393 + $0x4] sm:$0xf]
  %v2396 = vld [vmem:[%s2393 + $0x8] sm:$0xf]
  %v2397 = vld [vmem:[%s2393 + $0xc] sm:$0xf]
  %v2402 = vunpack.c.l.b16 %v2394
  %v2403 = vunpack.c.l.b16 %v2395
  %v2404 = vunpack.c.l.b16 %v2396
  %v2405 = vunpack.c.l.b16 %v2397
  %v2406 = vpack.c.b16 %v2403, %v2402
  %v2407 = vpack.c.b16 %v2405, %v2404
  %2410 = vmatpush.bf16.msra.mxu0 0
  %2411 = vmatpush.bf16.msra.mxu0 0
  %2412 = vmatpush.bf16.msra.mxu0 0
  %2413 = vmatpush.bf16.msra.mxu0 0
  %2414 = vmatpush.bf16.msra.mxu0 0
  %2415 = vmatpush.bf16.msra.mxu0 0
  %2416 = vmatpush.bf16.msra.mxu0 %v2407
  %2417 = vmatpush.bf16.msra.mxu0 %v2406
  %2418 = vmatmul.bf16.gmra.mxu0 %v2168
  %v2419 = vpop.f32.mrf.mxu0
  %v2420 = vadd.f32 0.0, %v2419
  %v2421 = vpop.f32.mrf.mxu0
  %v2422 = vadd.f32 0.0, %v2421
  %2423 = vmatmul.bf16.gmra.mxu0 %v2171
  %v2424 = vpop.f32.mrf.mxu0
  %v2425 = vadd.f32 0.0, %v2424
  %v2426 = vpop.f32.mrf.mxu0
  %v2427 = vadd.f32 0.0, %v2426
  %2428 = vmatmul.bf16.gmra.mxu0 %v2174
  %v2429 = vpop.f32.mrf.mxu0
  %v2430 = vadd.f32 0.0, %v2429
  %v2431 = vpop.f32.mrf.mxu0
  %v2432 = vadd.f32 0.0, %v2431
  %2433 = vmatmul.bf16.gmra.mxu0 %v2177
  %v2434 = vpop.f32.mrf.mxu0
  %v2435 = vadd.f32 0.0, %v2434
  %v2436 = vpop.f32.mrf.mxu0
  %v2437 = vadd.f32 0.0, %v2436
  %2438 = vdwg.mxu0
  %v2439 = vpack.c.bf16 %v2420, %v2420
  %v2440 = vpack.c.bf16 %v2422, %v2422
  %v2441 = vpack.c.bf16 %v2425, %v2425
  %v2442 = vpack.c.bf16 %v2427, %v2427
  %v2443 = vpack.c.bf16 %v2430, %v2430
  %v2444 = vpack.c.bf16 %v2432, %v2432
  %v2445 = vpack.c.bf16 %v2435, %v2435
  %v2446 = vpack.c.bf16 %v2437, %v2437
  %2447 = vst.msk [vmem:[#allocation2 + $0x60] sm:$0xf] %vm172, %v2439
  %2448 = vst.msk [vmem:[#allocation2 + $0x64] sm:$0xf] %vm172, %v2440
  %2449 = vst.msk [vmem:[#allocation2 + $0x68] sm:$0xf] %vm172, %v2441
  %2450 = vst.msk [vmem:[#allocation2 + $0x6c] sm:$0xf] %vm172, %v2442
  %2451 = vst.msk [vmem:[#allocation2 + $0x70] sm:$0xf] %vm172, %v2443
  %2452 = vst.msk [vmem:[#allocation2 + $0x74] sm:$0xf] %vm172, %v2444
  %2453 = vst.msk [vmem:[#allocation2 + $0x78] sm:$0xf] %vm172, %v2445
  %2454 = vst.msk [vmem:[#allocation2 + $0x7c] sm:$0xf] %vm172, %v2446
  %s2455 = scalar_lea.vmem %s10, 64
  %v2456 = vld [vmem:[%s2455] sm:$0xf]
  %v2457 = vld [vmem:[%s2455 + $0x4] sm:$0xf]
  %v2458 = vld [vmem:[%s2455 + $0x8] sm:$0xf]
  %v2459 = vld [vmem:[%s2455 + $0xc] sm:$0xf]
  %v2464 = vunpack.c.l.b16 %v2456
  %v2465 = vunpack.c.l.b16 %v2457
  %v2466 = vunpack.c.l.b16 %v2458
  %v2467 = vunpack.c.l.b16 %v2459
  %v2468 = vpack.c.b16 %v2465, %v2464
  %v2469 = vpack.c.b16 %v2467, %v2466
  %2472 = vmatpush.bf16.msra.mxu0 0
  %2473 = vmatpush.bf16.msra.mxu0 0
  %2474 = vmatpush.bf16.msra.mxu0 0
  %2475 = vmatpush.bf16.msra.mxu0 0
  %2476 = vmatpush.bf16.msra.mxu0 0
  %2477 = vmatpush.bf16.msra.mxu0 0
  %2478 = vmatpush.bf16.msra.mxu0 %v2469
  %2479 = vmatpush.bf16.msra.mxu0 %v2468
  %2480 = vmatmul.bf16.gmra.mxu0 %v2168
  %v2481 = vpop.f32.mrf.mxu0
  %v2482 = vadd.f32 0.0, %v2481
  %v2483 = vpop.f32.mrf.mxu0
  %v2484 = vadd.f32 0.0, %v2483
  %2485 = vmatmul.bf16.gmra.mxu0 %v2171
  %v2486 = vpop.f32.mrf.mxu0
  %v2487 = vadd.f32 0.0, %v2486
  %v2488 = vpop.f32.mrf.mxu0
  %v2489 = vadd.f32 0.0, %v2488
  %2490 = vmatmul.bf16.gmra.mxu0 %v2174
  %v2491 = vpop.f32.mrf.mxu0
  %v2492 = vadd.f32 0.0, %v2491
  %v2493 = vpop.f32.mrf.mxu0
  %v2494 = vadd.f32 0.0, %v2493
  %2495 = vmatmul.bf16.gmra.mxu0 %v2177
  %v2496 = vpop.f32.mrf.mxu0
  %v2497 = vadd.f32 0.0, %v2496
  %v2498 = vpop.f32.mrf.mxu0
  %v2499 = vadd.f32 0.0, %v2498
  %2500 = vdwg.mxu0
  %v2501 = vpack.c.bf16 %v2482, %v2482
  %v2502 = vpack.c.bf16 %v2484, %v2484
  %v2503 = vpack.c.bf16 %v2487, %v2487
  %v2504 = vpack.c.bf16 %v2489, %v2489
  %v2505 = vpack.c.bf16 %v2492, %v2492
  %v2506 = vpack.c.bf16 %v2494, %v2494
  %v2507 = vpack.c.bf16 %v2497, %v2497
  %v2508 = vpack.c.bf16 %v2499, %v2499
  %2509 = vst.msk [vmem:[#allocation2 + $0x80] sm:$0xf] %vm172, %v2501
  %2510 = vst.msk [vmem:[#allocation2 + $0x84] sm:$0xf] %vm172, %v2502
  %2511 = vst.msk [vmem:[#allocation2 + $0x88] sm:$0xf] %vm172, %v2503
  %2512 = vst.msk [vmem:[#allocation2 + $0x8c] sm:$0xf] %vm172, %v2504
  %2513 = vst.msk [vmem:[#allocation2 + $0x90] sm:$0xf] %vm172, %v2505
  %2514 = vst.msk [vmem:[#allocation2 + $0x94] sm:$0xf] %vm172, %v2506
  %2515 = vst.msk [vmem:[#allocation2 + $0x98] sm:$0xf] %vm172, %v2507
  %2516 = vst.msk [vmem:[#allocation2 + $0x9c] sm:$0xf] %vm172, %v2508
  %s2517 = scalar_lea.vmem %s10, 80
  %v2518 = vld [vmem:[%s2517] sm:$0xf]
  %v2519 = vld [vmem:[%s2517 + $0x4] sm:$0xf]
  %v2520 = vld [vmem:[%s2517 + $0x8] sm:$0xf]
  %v2521 = vld [vmem:[%s2517 + $0xc] sm:$0xf]
  %v2526 = vunpack.c.l.b16 %v2518
  %v2527 = vunpack.c.l.b16 %v2519
  %v2528 = vunpack.c.l.b16 %v2520
  %v2529 = vunpack.c.l.b16 %v2521
  %v2530 = vpack.c.b16 %v2527, %v2526
  %v2531 = vpack.c.b16 %v2529, %v2528
  %2534 = vmatpush.bf16.msra.mxu0 0
  %2535 = vmatpush.bf16.msra.mxu0 0
  %2536 = vmatpush.bf16.msra.mxu0 0
  %2537 = vmatpush.bf16.msra.mxu0 0
  %2538 = vmatpush.bf16.msra.mxu0 0
  %2539 = vmatpush.bf16.msra.mxu0 0
  %2540 = vmatpush.bf16.msra.mxu0 %v2531
  %2541 = vmatpush.bf16.msra.mxu0 %v2530
  %2542 = vmatmul.bf16.gmra.mxu0 %v2168
  %v2543 = vpop.f32.mrf.mxu0
  %v2544 = vadd.f32 0.0, %v2543
  %v2545 = vpop.f32.mrf.mxu0
  %v2546 = vadd.f32 0.0, %v2545
  %2547 = vmatmul.bf16.gmra.mxu0 %v2171
  %v2548 = vpop.f32.mrf.mxu0
  %v2549 = vadd.f32 0.0, %v2548
  %v2550 = vpop.f32.mrf.mxu0
  %v2551 = vadd.f32 0.0, %v2550
  %2552 = vmatmul.bf16.gmra.mxu0 %v2174
  %v2553 = vpop.f32.mrf.mxu0
  %v2554 = vadd.f32 0.0, %v2553
  %v2555 = vpop.f32.mrf.mxu0
  %v2556 = vadd.f32 0.0, %v2555
  %2557 = vmatmul.bf16.gmra.mxu0 %v2177
  %v2558 = vpop.f32.mrf.mxu0
  %v2559 = vadd.f32 0.0, %v2558
  %v2560 = vpop.f32.mrf.mxu0
  %v2561 = vadd.f32 0.0, %v2560
  %2562 = vdwg.mxu0
  %v2563 = vpack.c.bf16 %v2544, %v2544
  %v2564 = vpack.c.bf16 %v2546, %v2546
  %v2565 = vpack.c.bf16 %v2549, %v2549
  %v2566 = vpack.c.bf16 %v2551, %v2551
  %v2567 = vpack.c.bf16 %v2554, %v2554
  %v2568 = vpack.c.bf16 %v2556, %v2556
  %v2569 = vpack.c.bf16 %v2559, %v2559
  %v2570 = vpack.c.bf16 %v2561, %v2561
  %2571 = vst.msk [vmem:[#allocation2 + $0xa0] sm:$0xf] %vm172, %v2563
  %2572 = vst.msk [vmem:[#allocation2 + $0xa4] sm:$0xf] %vm172, %v2564
  %2573 = vst.msk [vmem:[#allocation2 + $0xa8] sm:$0xf] %vm172, %v2565
  %2574 = vst.msk [vmem:[#allocation2 + $0xac] sm:$0xf] %vm172, %v2566
  %2575 = vst.msk [vmem:[#allocation2 + $0xb0] sm:$0xf] %vm172, %v2567
  %2576 = vst.msk [vmem:[#allocation2 + $0xb4] sm:$0xf] %vm172, %v2568
  %2577 = vst.msk [vmem:[#allocation2 + $0xb8] sm:$0xf] %vm172, %v2569
  %2578 = vst.msk [vmem:[#allocation2 + $0xbc] sm:$0xf] %vm172, %v2570
  %s2579 = scalar_lea.vmem %s10, 96
  %v2580 = vld [vmem:[%s2579] sm:$0xf]
  %v2581 = vld [vmem:[%s2579 + $0x4] sm:$0xf]
  %v2582 = vld [vmem:[%s2579 + $0x8] sm:$0xf]
  %v2583 = vld [vmem:[%s2579 + $0xc] sm:$0xf]
  %v2588 = vunpack.c.l.b16 %v2580
  %v2589 = vunpack.c.l.b16 %v2581
  %v2590 = vunpack.c.l.b16 %v2582
  %v2591 = vunpack.c.l.b16 %v2583
  %v2592 = vpack.c.b16 %v2589, %v2588
  %v2593 = vpack.c.b16 %v2591, %v2590
  %2596 = vmatpush.bf16.msra.mxu0 0
  %2597 = vmatpush.bf16.msra.mxu0 0
  %2598 = vmatpush.bf16.msra.mxu0 0
  %2599 = vmatpush.bf16.msra.mxu0 0
  %2600 = vmatpush.bf16.msra.mxu0 0
  %2601 = vmatpush.bf16.msra.mxu0 0
  %2602 = vmatpush.bf16.msra.mxu0 %v2593
  %2603 = vmatpush.bf16.msra.mxu0 %v2592
  %2604 = vmatmul.bf16.gmra.mxu0 %v2168
  %v2605 = vpop.f32.mrf.mxu0
  %v2606 = vadd.f32 0.0, %v2605
  %v2607 = vpop.f32.mrf.mxu0
  %v2608 = vadd.f32 0.0, %v2607
  %2609 = vmatmul.bf16.gmra.mxu0 %v2171
  %v2610 = vpop.f32.mrf.mxu0
  %v2611 = vadd.f32 0.0, %v2610
  %v2612 = vpop.f32.mrf.mxu0
  %v2613 = vadd.f32 0.0, %v2612
  %2614 = vmatmul.bf16.gmra.mxu0 %v2174
  %v2615 = vpop.f32.mrf.mxu0
  %v2616 = vadd.f32 0.0, %v2615
  %v2617 = vpop.f32.mrf.mxu0
  %v2618 = vadd.f32 0.0, %v2617
  %2619 = vmatmul.bf16.gmra.mxu0 %v2177
  %v2620 = vpop.f32.mrf.mxu0
  %v2621 = vadd.f32 0.0, %v2620
  %v2622 = vpop.f32.mrf.mxu0
  %v2623 = vadd.f32 0.0, %v2622
  %2624 = vdwg.mxu0
  %v2625 = vpack.c.bf16 %v2606, %v2606
  %v2626 = vpack.c.bf16 %v2608, %v2608
  %v2627 = vpack.c.bf16 %v2611, %v2611
  %v2628 = vpack.c.bf16 %v2613, %v2613
  %v2629 = vpack.c.bf16 %v2616, %v2616
  %v2630 = vpack.c.bf16 %v2618, %v2618
  %v2631 = vpack.c.bf16 %v2621, %v2621
  %v2632 = vpack.c.bf16 %v2623, %v2623
  %2633 = vst.msk [vmem:[#allocation2 + $0xc0] sm:$0xf] %vm172, %v2625
  %2634 = vst.msk [vmem:[#allocation2 + $0xc4] sm:$0xf] %vm172, %v2626
  %2635 = vst.msk [vmem:[#allocation2 + $0xc8] sm:$0xf] %vm172, %v2627
  %2636 = vst.msk [vmem:[#allocation2 + $0xcc] sm:$0xf] %vm172, %v2628
  %2637 = vst.msk [vmem:[#allocation2 + $0xd0] sm:$0xf] %vm172, %v2629
  %2638 = vst.msk [vmem:[#allocation2 + $0xd4] sm:$0xf] %vm172, %v2630
  %2639 = vst.msk [vmem:[#allocation2 + $0xd8] sm:$0xf] %vm172, %v2631
  %2640 = vst.msk [vmem:[#allocation2 + $0xdc] sm:$0xf] %vm172, %v2632
  %s2641 = scalar_lea.vmem %s10, 112
  %v2642 = vld [vmem:[%s2641] sm:$0xf]
  %v2643 = vld [vmem:[%s2641 + $0x4] sm:$0xf]
  %v2644 = vld [vmem:[%s2641 + $0x8] sm:$0xf]
  %v2645 = vld [vmem:[%s2641 + $0xc] sm:$0xf]
  %v2650 = vunpack.c.l.b16 %v2642
  %v2651 = vunpack.c.l.b16 %v2643
  %v2652 = vunpack.c.l.b16 %v2644
  %v2653 = vunpack.c.l.b16 %v2645
  %v2654 = vpack.c.b16 %v2651, %v2650
  %v2655 = vpack.c.b16 %v2653, %v2652
  %2658 = vmatpush.bf16.msra.mxu0 0
  %2659 = vmatpush.bf16.msra.mxu0 0
  %2660 = vmatpush.bf16.msra.mxu0 0
  %2661 = vmatpush.bf16.msra.mxu0 0
  %2662 = vmatpush.bf16.msra.mxu0 0
  %2663 = vmatpush.bf16.msra.mxu0 0
  %2664 = vmatpush.bf16.msra.mxu0 %v2655
  %2665 = vmatpush.bf16.msra.mxu0 %v2654
  %2666 = vmatmul.bf16.gmra.mxu0 %v2168
  %v2667 = vpop.f32.mrf.mxu0
  %v2668 = vadd.f32 0.0, %v2667
  %v2669 = vpop.f32.mrf.mxu0
  %v2670 = vadd.f32 0.0, %v2669
  %2671 = vmatmul.bf16.gmra.mxu0 %v2171
  %v2672 = vpop.f32.mrf.mxu0
  %v2673 = vadd.f32 0.0, %v2672
  %v2674 = vpop.f32.mrf.mxu0
  %v2675 = vadd.f32 0.0, %v2674
  %2676 = vmatmul.bf16.gmra.mxu0 %v2174
  %v2677 = vpop.f32.mrf.mxu0
  %v2678 = vadd.f32 0.0, %v2677
  %v2679 = vpop.f32.mrf.mxu0
  %v2680 = vadd.f32 0.0, %v2679
  %2681 = vmatmul.bf16.gmra.mxu0 %v2177
  %v2682 = vpop.f32.mrf.mxu0
  %v2683 = vadd.f32 0.0, %v2682
  %v2684 = vpop.f32.mrf.mxu0
  %v2685 = vadd.f32 0.0, %v2684
  %2686 = vdwg.mxu0
  %v2687 = vpack.c.bf16 %v2668, %v2668
  %v2688 = vpack.c.bf16 %v2670, %v2670
  %v2689 = vpack.c.bf16 %v2673, %v2673
  %v2690 = vpack.c.bf16 %v2675, %v2675
  %v2691 = vpack.c.bf16 %v2678, %v2678
  %v2692 = vpack.c.bf16 %v2680, %v2680
  %v2693 = vpack.c.bf16 %v2683, %v2683
  %v2694 = vpack.c.bf16 %v2685, %v2685
  %2695 = vst.msk [vmem:[#allocation2 + $0xe0] sm:$0xf] %vm172, %v2687
  %2696 = vst.msk [vmem:[#allocation2 + $0xe4] sm:$0xf] %vm172, %v2688
  %2697 = vst.msk [vmem:[#allocation2 + $0xe8] sm:$0xf] %vm172, %v2689
  %2698 = vst.msk [vmem:[#allocation2 + $0xec] sm:$0xf] %vm172, %v2690
  %2699 = vst.msk [vmem:[#allocation2 + $0xf0] sm:$0xf] %vm172, %v2691
  %2700 = vst.msk [vmem:[#allocation2 + $0xf4] sm:$0xf] %vm172, %v2692
  %2701 = vst.msk [vmem:[#allocation2 + $0xf8] sm:$0xf] %vm172, %v2693
  %2702 = vst.msk [vmem:[#allocation2 + $0xfc] sm:$0xf] %vm172, %v2694
  %v2703 = vld [vmem:[%s0] sm:$0xff]
  %v2704 = vld [vmem:[%s0 + $0x8] sm:$0xff]
  %v2705 = vld [vmem:[%s0 + $0x10] sm:$0xff]
  %v2706 = vld [vmem:[%s0 + $0x18] sm:$0xff]
  %v2707 = vld [vmem:[%s0 + $0x20] sm:$0xff]
  %v2708 = vld [vmem:[%s0 + $0x28] sm:$0xff]
  %v2709 = vld [vmem:[%s0 + $0x30] sm:$0xff]
  %v2710 = vld [vmem:[%s0 + $0x38] sm:$0xff]
  %v2711 = vld [vmem:[%s0 + $0x40] sm:$0xff]
  %v2712 = vld [vmem:[%s0 + $0x48] sm:$0xff]
  %v2713 = vld [vmem:[%s0 + $0x50] sm:$0xff]
  %v2714 = vld [vmem:[%s0 + $0x58] sm:$0xff]
  %v2715 = vld [vmem:[%s0 + $0x60] sm:$0xff]
  %v2716 = vld [vmem:[%s0 + $0x68] sm:$0xff]
  %v2717 = vld [vmem:[%s0 + $0x70] sm:$0xff]
  %v2718 = vld [vmem:[%s0 + $0x78] sm:$0xff]
  %v2719 = vld [vmem:[#allocation2] sm:$0xf]
  %v2720 = vld [vmem:[#allocation2 + $0x4] sm:$0xf]
  %v2721 = vld [vmem:[#allocation2 + $0x8] sm:$0xf]
  %v2722 = vld [vmem:[#allocation2 + $0xc] sm:$0xf]
  %v2723 = vld [vmem:[#allocation2 + $0x10] sm:$0xf]
  %v2724 = vld [vmem:[#allocation2 + $0x14] sm:$0xf]
  %v2725 = vld [vmem:[#allocation2 + $0x18] sm:$0xf]
  %v2726 = vld [vmem:[#allocation2 + $0x1c] sm:$0xf]
  %v2727 = vld [vmem:[#allocation2 + $0x20] sm:$0xf]
  %v2728 = vld [vmem:[#allocation2 + $0x24] sm:$0xf]
  %v2729 = vld [vmem:[#allocation2 + $0x28] sm:$0xf]
  %v2730 = vld [vmem:[#allocation2 + $0x2c] sm:$0xf]
  %v2731 = vld [vmem:[#allocation2 + $0x30] sm:$0xf]
  %v2732 = vld [vmem:[#allocation2 + $0x34] sm:$0xf]
  %v2733 = vld [vmem:[#allocation2 + $0x38] sm:$0xf]
  %v2734 = vld [vmem:[#allocation2 + $0x3c] sm:$0xf]
  %v2735 = vld [vmem:[#allocation2 + $0x40] sm:$0xf]
  %v2736 = vld [vmem:[#allocation2 + $0x44] sm:$0xf]
  %v2737 = vld [vmem:[#allocation2 + $0x48] sm:$0xf]
  %v2738 = vld [vmem:[#allocation2 + $0x4c] sm:$0xf]
  %v2739 = vld [vmem:[#allocation2 + $0x50] sm:$0xf]
  %v2740 = vld [vmem:[#allocation2 + $0x54] sm:$0xf]
  %v2741 = vld [vmem:[#allocation2 + $0x58] sm:$0xf]
  %v2742 = vld [vmem:[#allocation2 + $0x5c] sm:$0xf]
  %v2743 = vld [vmem:[#allocation2 + $0x60] sm:$0xf]
  %v2744 = vld [vmem:[#allocation2 + $0x64] sm:$0xf]
  %v2745 = vld [vmem:[#allocation2 + $0x68] sm:$0xf]
  %v2746 = vld [vmem:[#allocation2 + $0x6c] sm:$0xf]
  %v2747 = vld [vmem:[#allocation2 + $0x70] sm:$0xf]
  %v2748 = vld [vmem:[#allocation2 + $0x74] sm:$0xf]
  %v2749 = vld [vmem:[#allocation2 + $0x78] sm:$0xf]
  %v2750 = vld [vmem:[#allocation2 + $0x7c] sm:$0xf]
  %v2751 = vld [vmem:[#allocation2 + $0x80] sm:$0xf]
  %v2752 = vld [vmem:[#allocation2 + $0x84] sm:$0xf]
  %v2753 = vld [vmem:[#allocation2 + $0x88] sm:$0xf]
  %v2754 = vld [vmem:[#allocation2 + $0x8c] sm:$0xf]
  %v2755 = vld [vmem:[#allocation2 + $0x90] sm:$0xf]
  %v2756 = vld [vmem:[#allocation2 + $0x94] sm:$0xf]
  %v2757 = vld [vmem:[#allocation2 + $0x98] sm:$0xf]
  %v2758 = vld [vmem:[#allocation2 + $0x9c] sm:$0xf]
  %v2759 = vld [vmem:[#allocation2 + $0xa0] sm:$0xf]
  %v2760 = vld [vmem:[#allocation2 + $0xa4] sm:$0xf]
  %v2761 = vld [vmem:[#allocation2 + $0xa8] sm:$0xf]
  %v2762 = vld [vmem:[#allocation2 + $0xac] sm:$0xf]
  %v2763 = vld [vmem:[#allocation2 + $0xb0] sm:$0xf]
  %v2764 = vld [vmem:[#allocation2 + $0xb4] sm:$0xf]
  %v2765 = vld [vmem:[#allocation2 + $0xb8] sm:$0xf]
  %v2766 = vld [vmem:[#allocation2 + $0xbc] sm:$0xf]
  %v2767 = vld [vmem:[#allocation2 + $0xc0] sm:$0xf]
  %v2768 = vld [vmem:[#allocation2 + $0xc4] sm:$0xf]
  %v2769 = vld [vmem:[#allocation2 + $0xc8] sm:$0xf]
  %v2770 = vld [vmem:[#allocation2 + $0xcc] sm:$0xf]
  %v2771 = vld [vmem:[#allocation2 + $0xd0] sm:$0xf]
  %v2772 = vld [vmem:[#allocation2 + $0xd4] sm:$0xf]
  %v2773 = vld [vmem:[#allocation2 + $0xd8] sm:$0xf]
  %v2774 = vld [vmem:[#allocation2 + $0xdc] sm:$0xf]
  %v2775 = vld [vmem:[#allocation2 + $0xe0] sm:$0xf]
  %v2776 = vld [vmem:[#allocation2 + $0xe4] sm:$0xf]
  %v2777 = vld [vmem:[#allocation2 + $0xe8] sm:$0xf]
  %v2778 = vld [vmem:[#allocation2 + $0xec] sm:$0xf]
  %v2779 = vld [vmem:[#allocation2 + $0xf0] sm:$0xf]
  %v2780 = vld [vmem:[#allocation2 + $0xf4] sm:$0xf]
  %v2781 = vld [vmem:[#allocation2 + $0xf8] sm:$0xf]
  %v2782 = vld [vmem:[#allocation2 + $0xfc] sm:$0xf]
  %v2799 = vunpack.c.l.b16 %v2703
  %v2800 = vunpack.c.h.b16 %v2703
  %v2801 = vunpack.c.l.b16 %v2704
  %v2802 = vunpack.c.h.b16 %v2704
  %v2803 = vunpack.c.l.b16 %v2705
  %v2804 = vunpack.c.h.b16 %v2705
  %v2805 = vunpack.c.l.b16 %v2706
  %v2806 = vunpack.c.h.b16 %v2706
  %v2807 = vunpack.c.l.b16 %v2707
  %v2808 = vunpack.c.h.b16 %v2707
  %v2809 = vunpack.c.l.b16 %v2708
  %v2810 = vunpack.c.h.b16 %v2708
  %v2811 = vunpack.c.l.b16 %v2709
  %v2812 = vunpack.c.h.b16 %v2709
  %v2813 = vunpack.c.l.b16 %v2710
  %v2814 = vunpack.c.h.b16 %v2710
  %v2815 = vunpack.c.l.b16 %v2711
  %v2816 = vunpack.c.h.b16 %v2711
  %v2817 = vunpack.c.l.b16 %v2712
  %v2818 = vunpack.c.h.b16 %v2712
  %v2819 = vunpack.c.l.b16 %v2713
  %v2820 = vunpack.c.h.b16 %v2713
  %v2821 = vunpack.c.l.b16 %v2714
  %v2822 = vunpack.c.h.b16 %v2714
  %v2823 = vunpack.c.l.b16 %v2715
  %v2824 = vunpack.c.h.b16 %v2715
  %v2825 = vunpack.c.l.b16 %v2716
  %v2826 = vunpack.c.h.b16 %v2716
  %v2827 = vunpack.c.l.b16 %v2717
  %v2828 = vunpack.c.h.b16 %v2717
  %v2829 = vunpack.c.l.b16 %v2718
  %v2830 = vunpack.c.h.b16 %v2718
  %v2831 = vpack.c.b16 %v2803, %v2799
  %v2832 = vpack.c.b16 %v2804, %v2800
  %v2833 = vpack.c.b16 %v2805, %v2801
  %v2834 = vpack.c.b16 %v2806, %v2802
  %v2835 = vpack.c.b16 %v2811, %v2807
  %v2836 = vpack.c.b16 %v2812, %v2808
  %v2837 = vpack.c.b16 %v2813, %v2809
  %v2838 = vpack.c.b16 %v2814, %v2810
  %v2839 = vpack.c.b16 %v2819, %v2815
  %v2840 = vpack.c.b16 %v2820, %v2816
  %v2841 = vpack.c.b16 %v2821, %v2817
  %v2842 = vpack.c.b16 %v2822, %v2818
  %v2843 = vpack.c.b16 %v2827, %v2823
  %v2844 = vpack.c.b16 %v2828, %v2824
  %v2845 = vpack.c.b16 %v2829, %v2825
  %v2846 = vpack.c.b16 %v2830, %v2826
  %v2927 = vunpack.c.l.b16 %v2719
  %v2928 = vunpack.c.l.b16 %v2720
  %v2929 = vunpack.c.l.b16 %v2721
  %v2930 = vunpack.c.l.b16 %v2722
  %v2931 = vunpack.c.l.b16 %v2723
  %v2932 = vunpack.c.l.b16 %v2724
  %v2933 = vunpack.c.l.b16 %v2725
  %v2934 = vunpack.c.l.b16 %v2726
  %v2935 = vunpack.c.l.b16 %v2727
  %v2936 = vunpack.c.l.b16 %v2728
  %v2937 = vunpack.c.l.b16 %v2729
  %v2938 = vunpack.c.l.b16 %v2730
  %v2939 = vunpack.c.l.b16 %v2731
  %v2940 = vunpack.c.l.b16 %v2732
  %v2941 = vunpack.c.l.b16 %v2733
  %v2942 = vunpack.c.l.b16 %v2734
  %v2943 = vunpack.c.l.b16 %v2735
  %v2944 = vunpack.c.l.b16 %v2736
  %v2945 = vunpack.c.l.b16 %v2737
  %v2946 = vunpack.c.l.b16 %v2738
  %v2947 = vunpack.c.l.b16 %v2739
  %v2948 = vunpack.c.l.b16 %v2740
  %v2949 = vunpack.c.l.b16 %v2741
  %v2950 = vunpack.c.l.b16 %v2742
  %v2951 = vunpack.c.l.b16 %v2743
  %v2952 = vunpack.c.l.b16 %v2744
  %v2953 = vunpack.c.l.b16 %v2745
  %v2954 = vunpack.c.l.b16 %v2746
  %v2955 = vunpack.c.l.b16 %v2747
  %v2956 = vunpack.c.l.b16 %v2748
  %v2957 = vunpack.c.l.b16 %v2749
  %v2958 = vunpack.c.l.b16 %v2750
  %v2959 = vunpack.c.l.b16 %v2751
  %v2960 = vunpack.c.l.b16 %v2752
  %v2961 = vunpack.c.l.b16 %v2753
  %v2962 = vunpack.c.l.b16 %v2754
  %v2963 = vunpack.c.l.b16 %v2755
  %v2964 = vunpack.c.l.b16 %v2756
  %v2965 = vunpack.c.l.b16 %v2757
  %v2966 = vunpack.c.l.b16 %v2758
  %v2967 = vunpack.c.l.b16 %v2759
  %v2968 = vunpack.c.l.b16 %v2760
  %v2969 = vunpack.c.l.b16 %v2761
  %v2970 = vunpack.c.l.b16 %v2762
  %v2971 = vunpack.c.l.b16 %v2763
  %v2972 = vunpack.c.l.b16 %v2764
  %v2973 = vunpack.c.l.b16 %v2765
  %v2974 = vunpack.c.l.b16 %v2766
  %v2975 = vunpack.c.l.b16 %v2767
  %v2976 = vunpack.c.l.b16 %v2768
  %v2977 = vunpack.c.l.b16 %v2769
  %v2978 = vunpack.c.l.b16 %v2770
  %v2979 = vunpack.c.l.b16 %v2771
  %v2980 = vunpack.c.l.b16 %v2772
  %v2981 = vunpack.c.l.b16 %v2773
  %v2982 = vunpack.c.l.b16 %v2774
  %v2983 = vunpack.c.l.b16 %v2775
  %v2984 = vunpack.c.l.b16 %v2776
  %v2985 = vunpack.c.l.b16 %v2777
  %v2986 = vunpack.c.l.b16 %v2778
  %v2987 = vunpack.c.l.b16 %v2779
  %v2988 = vunpack.c.l.b16 %v2780
  %v2989 = vunpack.c.l.b16 %v2781
  %v2990 = vunpack.c.l.b16 %v2782
  %v2991 = vpack.c.b16 %v2928, %v2927
  %v2992 = vpack.c.b16 %v2930, %v2929
  %v2993 = vpack.c.b16 %v2932, %v2931
  %v2994 = vpack.c.b16 %v2934, %v2933
  %v2995 = vpack.c.b16 %v2936, %v2935
  %v2996 = vpack.c.b16 %v2938, %v2937
  %v2997 = vpack.c.b16 %v2940, %v2939
  %v2998 = vpack.c.b16 %v2942, %v2941
  %v2999 = vpack.c.b16 %v2944, %v2943
  %v3000 = vpack.c.b16 %v2946, %v2945
  %v3001 = vpack.c.b16 %v2948, %v2947
  %v3002 = vpack.c.b16 %v2950, %v2949
  %v3003 = vpack.c.b16 %v2952, %v2951
  %v3004 = vpack.c.b16 %v2954, %v2953
  %v3005 = vpack.c.b16 %v2956, %v2955
  %v3006 = vpack.c.b16 %v2958, %v2957
  %v3007 = vpack.c.b16 %v2960, %v2959
  %v3008 = vpack.c.b16 %v2962, %v2961
  %v3009 = vpack.c.b16 %v2964, %v2963
  %v3010 = vpack.c.b16 %v2966, %v2965
  %v3011 = vpack.c.b16 %v2968, %v2967
  %v3012 = vpack.c.b16 %v2970, %v2969
  %v3013 = vpack.c.b16 %v2972, %v2971
  %v3014 = vpack.c.b16 %v2974, %v2973
  %v3015 = vpack.c.b16 %v2976, %v2975
  %v3016 = vpack.c.b16 %v2978, %v2977
  %v3017 = vpack.c.b16 %v2980, %v2979
  %v3018 = vpack.c.b16 %v2982, %v2981
  %v3019 = vpack.c.b16 %v2984, %v2983
  %v3020 = vpack.c.b16 %v2986, %v2985
  %v3021 = vpack.c.b16 %v2988, %v2987
  %v3022 = vpack.c.b16 %v2990, %v2989
  %3055 = vmatpush.bf16.msra.mxu0 %v2998
  %3056 = vmatpush.bf16.msra.mxu0 %v2997
  %3057 = vmatpush.bf16.msra.mxu0 %v2996
  %3058 = vmatpush.bf16.msra.mxu0 %v2995
  %3059 = vmatpush.bf16.msra.mxu0 %v2994
  %3060 = vmatpush.bf16.msra.mxu0 %v2993
  %3061 = vmatpush.bf16.msra.mxu0 %v2992
  %3062 = vmatpush.bf16.msra.mxu0 %v2991
  %3063 = vmatmul.bf16.gmra.mxu0 %v2831
  %v3064 = vpop.f32.mrf.mxu0
  %v3065 = vadd.f32 0.0, %v3064
  %v3066 = vpop.f32.mrf.mxu0
  %v3067 = vadd.f32 0.0, %v3066
  %3068 = vmatmul.bf16.gmra.mxu0 %v2835
  %v3069 = vpop.f32.mrf.mxu0
  %v3070 = vadd.f32 0.0, %v3069
  %v3071 = vpop.f32.mrf.mxu0
  %v3072 = vadd.f32 0.0, %v3071
  %3073 = vmatmul.bf16.gmra.mxu0 %v2839
  %v3074 = vpop.f32.mrf.mxu0
  %v3075 = vadd.f32 0.0, %v3074
  %v3076 = vpop.f32.mrf.mxu0
  %v3077 = vadd.f32 0.0, %v3076
  %3078 = vmatmul.bf16.gmra.mxu0 %v2843
  %v3079 = vpop.f32.mrf.mxu0
  %v3080 = vadd.f32 0.0, %v3079
  %v3081 = vpop.f32.mrf.mxu0
  %v3082 = vadd.f32 0.0, %v3081
  %3083 = vdwg.mxu0
  %3084 = vmatpush.bf16.msra.mxu0 %v3006
  %3085 = vmatpush.bf16.msra.mxu0 %v3005
  %3086 = vmatpush.bf16.msra.mxu0 %v3004
  %3087 = vmatpush.bf16.msra.mxu0 %v3003
  %3088 = vmatpush.bf16.msra.mxu0 %v3002
  %3089 = vmatpush.bf16.msra.mxu0 %v3001
  %3090 = vmatpush.bf16.msra.mxu0 %v3000
  %3091 = vmatpush.bf16.msra.mxu0 %v2999
  %3092 = vmatmul.bf16.gmra.mxu0 %v2832
  %v3093 = vpop.f32.mrf.mxu0
  %v3094 = vadd.f32 %v3065, %v3093
  %v3095 = vpop.f32.mrf.mxu0
  %v3096 = vadd.f32 %v3067, %v3095
  %3097 = vmatmul.bf16.gmra.mxu0 %v2836
  %v3098 = vpop.f32.mrf.mxu0
  %v3099 = vadd.f32 %v3070, %v3098
  %v3100 = vpop.f32.mrf.mxu0
  %v3101 = vadd.f32 %v3072, %v3100
  %3102 = vmatmul.bf16.gmra.mxu0 %v2840
  %v3103 = vpop.f32.mrf.mxu0
  %v3104 = vadd.f32 %v3075, %v3103
  %v3105 = vpop.f32.mrf.mxu0
  %v3106 = vadd.f32 %v3077, %v3105
  %3107 = vmatmul.bf16.gmra.mxu0 %v2844
  %v3108 = vpop.f32.mrf.mxu0
  %v3109 = vadd.f32 %v3080, %v3108
  %v3110 = vpop.f32.mrf.mxu0
  %v3111 = vadd.f32 %v3082, %v3110
  %3112 = vdwg.mxu0
  %3113 = vmatpush.bf16.msra.mxu0 %v3014
  %3114 = vmatpush.bf16.msra.mxu0 %v3013
  %3115 = vmatpush.bf16.msra.mxu0 %v3012
  %3116 = vmatpush.bf16.msra.mxu0 %v3011
  %3117 = vmatpush.bf16.msra.mxu0 %v3010
  %3118 = vmatpush.bf16.msra.mxu0 %v3009
  %3119 = vmatpush.bf16.msra.mxu0 %v3008
  %3120 = vmatpush.bf16.msra.mxu0 %v3007
  %3121 = vmatmul.bf16.gmra.mxu0 %v2833
  %v3122 = vpop.f32.mrf.mxu0
  %v3123 = vadd.f32 %v3094, %v3122
  %v3124 = vpop.f32.mrf.mxu0
  %v3125 = vadd.f32 %v3096, %v3124
  %3126 = vmatmul.bf16.gmra.mxu0 %v2837
  %v3127 = vpop.f32.mrf.mxu0
  %v3128 = vadd.f32 %v3099, %v3127
  %v3129 = vpop.f32.mrf.mxu0
  %v3130 = vadd.f32 %v3101, %v3129
  %3131 = vmatmul.bf16.gmra.mxu0 %v2841
  %v3132 = vpop.f32.mrf.mxu0
  %v3133 = vadd.f32 %v3104, %v3132
  %v3134 = vpop.f32.mrf.mxu0
  %v3135 = vadd.f32 %v3106, %v3134
  %3136 = vmatmul.bf16.gmra.mxu0 %v2845
  %v3137 = vpop.f32.mrf.mxu0
  %v3138 = vadd.f32 %v3109, %v3137
  %v3139 = vpop.f32.mrf.mxu0
  %v3140 = vadd.f32 %v3111, %v3139
  %3141 = vdwg.mxu0
  %3142 = vmatpush.bf16.msra.mxu0 %v3022
  %3143 = vmatpush.bf16.msra.mxu0 %v3021
  %3144 = vmatpush.bf16.msra.mxu0 %v3020
  %3145 = vmatpush.bf16.msra.mxu0 %v3019
  %3146 = vmatpush.bf16.msra.mxu0 %v3018
  %3147 = vmatpush.bf16.msra.mxu0 %v3017
  %3148 = vmatpush.bf16.msra.mxu0 %v3016
  %3149 = vmatpush.bf16.msra.mxu0 %v3015
  %3150 = vmatmul.bf16.gmra.mxu0 %v2834
  %v3151 = vpop.f32.mrf.mxu0
  %v3152 = vadd.f32 %v3123, %v3151
  %v3153 = vpop.f32.mrf.mxu0
  %v3154 = vadd.f32 %v3125, %v3153
  %3155 = vmatmul.bf16.gmra.mxu0 %v2838
  %v3156 = vpop.f32.mrf.mxu0
  %v3157 = vadd.f32 %v3128, %v3156
  %v3158 = vpop.f32.mrf.mxu0
  %v3159 = vadd.f32 %v3130, %v3158
  %3160 = vmatmul.bf16.gmra.mxu0 %v2842
  %v3161 = vpop.f32.mrf.mxu0
  %v3162 = vadd.f32 %v3133, %v3161
  %v3163 = vpop.f32.mrf.mxu0
  %v3164 = vadd.f32 %v3135, %v3163
  %3165 = vmatmul.bf16.gmra.mxu0 %v2846
  %v3166 = vpop.f32.mrf.mxu0
  %v3167 = vadd.f32 %v3138, %v3166
  %v3168 = vpop.f32.mrf.mxu0
  %v3169 = vadd.f32 %v3140, %v3168
  %3170 = vdwg.mxu0
  %v3171 = vadd.f32 %v2189, %v3152
  %v3172 = vadd.f32 %v2191, %v3154
  %v3173 = vadd.f32 %v2194, %v3157
  %v3174 = vadd.f32 %v2196, %v3159
  %v3175 = vadd.f32 %v2199, %v3162
  %v3176 = vadd.f32 %v2201, %v3164
  %v3177 = vadd.f32 %v2204, %v3167
  %v3178 = vadd.f32 %v2206, %v3169
  %v3179 = vmax.f32 %v3171, 0.0
  %v3180 = vmax.f32 %v3172, 0.0
  %v3181 = vmax.f32 %v3173, 0.0
  %v3182 = vmax.f32 %v3174, 0.0
  %v3183 = vmax.f32 %v3175, 0.0
  %v3184 = vmax.f32 %v3176, 0.0
  %v3185 = vmax.f32 %v3177, 0.0
  %v3186 = vmax.f32 %v3178, 0.0
  %v3187 = vsel %vm77, %v3179, 0.0
  %v3188 = vsel %vm77, %v3180, 0.0
  %v3189 = vadd.f32 %v3187, %v3188
  %v3190 = vsel %vm77, %v3181, 0.0
  %v3191 = vadd.f32 %v3189, %v3190
  %v3192 = vsel %vm77, %v3182, 0.0
  %v3193 = vadd.f32 %v3191, %v3192
  %v3194 = vsel %vm77, %v3183, 0.0
  %v3195 = vadd.f32 %v3193, %v3194
  %v3196 = vsel %vm77, %v3184, 0.0
  %v3197 = vadd.f32 %v3195, %v3196
  %v3198 = vsel %vm77, %v3185, 0.0
  %v3199 = vadd.f32 %v3197, %v3198
  %v3200 = vsel %vm77, %v3186, 0.0
  %v3201 = vadd.f32 %v3199, %v3200
  %v3202 = vrot.slane %v3201, 4
  %v3203 = vadd.f32 %v3201, %v3202
  %v3204 = vrot.slane %v3203, 2
  %v3205 = vadd.f32 %v3203, %v3204
  %v3206 = vrot.slane %v3205, 1
  %v3207 = vadd.f32 %v3205, %v3206
  %v3208 = vrcp.pop 64.0
  %v3209 = vmul.f32 64.0, %v3208
  %v3210 = vsub.f32 1.0, %v3209
  %v3211 = vmul.f32 %v3208, %v3210
  %v3212 = vadd.f32 %v3208, %v3211
  %vm3213 = vweird.f32 %v3208
  %v3214 = vsel %vm3213, %v3208, %v3212
  %v3215 = vmul.f32 %v3207, %v3214
  %v3216 = vsub.f32 %v3179, %v3215
  %v3217 = vsub.f32 %v3180, %v3215
  %v3218 = vsub.f32 %v3181, %v3215
  %v3219 = vsub.f32 %v3182, %v3215
  %v3220 = vsub.f32 %v3183, %v3215
  %v3221 = vsub.f32 %v3184, %v3215
  %v3222 = vsub.f32 %v3185, %v3215
  %v3223 = vsub.f32 %v3186, %v3215
  %v3224 = vmul.f32 %v3216, %v3216
  %v3225 = vmul.f32 %v3217, %v3217
  %v3226 = vmul.f32 %v3218, %v3218
  %v3227 = vmul.f32 %v3219, %v3219
  %v3228 = vmul.f32 %v3220, %v3220
  %v3229 = vmul.f32 %v3221, %v3221
  %v3230 = vmul.f32 %v3222, %v3222
  %v3231 = vmul.f32 %v3223, %v3223
  %v3232 = vsel %vm77, %v3224, 0.0
  %v3233 = vsel %vm77, %v3225, 0.0
  %v3234 = vadd.f32 %v3232, %v3233
  %v3235 = vsel %vm77, %v3226, 0.0
  %v3236 = vadd.f32 %v3234, %v3235
  %v3237 = vsel %vm77, %v3227, 0.0
  %v3238 = vadd.f32 %v3236, %v3237
  %v3239 = vsel %vm77, %v3228, 0.0
  %v3240 = vadd.f32 %v3238, %v3239
  %v3241 = vsel %vm77, %v3229, 0.0
  %v3242 = vadd.f32 %v3240, %v3241
  %v3243 = vsel %vm77, %v3230, 0.0
  %v3244 = vadd.f32 %v3242, %v3243
  %v3245 = vsel %vm77, %v3231, 0.0
  %v3246 = vadd.f32 %v3244, %v3245
  %v3247 = vrot.slane %v3246, 4
  %v3248 = vadd.f32 %v3246, %v3247
  %v3249 = vrot.slane %v3248, 2
  %v3250 = vadd.f32 %v3248, %v3249
  %v3251 = vrot.slane %v3250, 1
  %v3252 = vadd.f32 %v3250, %v3251
  %v3253 = vmul.f32 %v3252, %v3214
  %v3254 = vadd.f32 %v3253, 1e-05
  %v3255 = vrsqrt.pop %v3254
  %v3256 = vmul.f32 %v3255, %v3254
  %v3257 = vmul.f32 %v3256, %v3255
  %v3258 = vmul.f32 0.5, %v3257
  %v3259 = vsub.f32 1.5, %v3258
  %v3260 = vmul.f32 %v3255, %v3259
  %vm3261 = vweird.f32 %v3254
  %vm3262 = vweird.f32 %v3255
  %vm3263 = vmor %vm3261, %vm3262
  %v3264 = vsel %vm3263, %v3255, %v3260
  %v3265 = vmul.f32 %v3216, %v3264
  %v3266 = vmul.f32 %v3217, %v3264
  %v3267 = vmul.f32 %v3218, %v3264
  %v3268 = vmul.f32 %v3219, %v3264
  %v3269 = vmul.f32 %v3220, %v3264
  %v3270 = vmul.f32 %v3221, %v3264
  %v3271 = vmul.f32 %v3222, %v3264
  %v3272 = vmul.f32 %v3223, %v3264
  %v3273 = vld [vmem:[%s2] sm:$0x1]
  %v3275 = vperm.slane %v3273, 0
  %v3277 = vmul.f32 %v3265, %v3275
  %v3278 = vmul.f32 %v3266, %v3275
  %v3279 = vmul.f32 %v3267, %v3275
  %v3280 = vmul.f32 %v3268, %v3275
  %v3281 = vmul.f32 %v3269, %v3275
  %v3282 = vmul.f32 %v3270, %v3275
  %v3283 = vmul.f32 %v3271, %v3275
  %v3284 = vmul.f32 %v3272, %v3275
  %v3285 = vadd.f32 %v2135, %v3277
  %v3286 = vadd.f32 %v2136, %v3278
  %v3287 = vadd.f32 %v2137, %v3279
  %v3288 = vadd.f32 %v2138, %v3280
  %v3289 = vadd.f32 %v2139, %v3281
  %v3290 = vadd.f32 %v2140, %v3282
  %v3291 = vadd.f32 %v2141, %v3283
  %v3292 = vadd.f32 %v2142, %v3284
  %v3293 = vld [vmem:[%s3] sm:$0x1]
  %v3295 = vperm.slane %v3293, 0
  %v3297 = vadd.f32 %v3285, %v3295
  %v3298 = vadd.f32 %v3286, %v3295
  %v3299 = vadd.f32 %v3287, %v3295
  %v3300 = vadd.f32 %v3288, %v3295
  %v3301 = vadd.f32 %v3289, %v3295
  %v3302 = vadd.f32 %v3290, %v3295
  %v3303 = vadd.f32 %v3291, %v3295
  %v3304 = vadd.f32 %v3292, %v3295
  %3305 = vst.msk [vmem:[%s13] sm:$0xff] %vm77, %v3297
  %3306 = vst.msk [vmem:[%s13 + $0x8] sm:$0xff] %vm77, %v3298
  %3307 = vst.msk [vmem:[%s13 + $0x10] sm:$0xff] %vm77, %v3299
  %3308 = vst.msk [vmem:[%s13 + $0x18] sm:$0xff] %vm77, %v3300
  %3309 = vst.msk [vmem:[%s13 + $0x20] sm:$0xff] %vm77, %v3301
  %3310 = vst.msk [vmem:[%s13 + $0x28] sm:$0xff] %vm77, %v3302
  %3311 = vst.msk [vmem:[%s13 + $0x30] sm:$0xff] %vm77, %v3303
  %3312 = vst.msk [vmem:[%s13 + $0x38] sm:$0xff] %vm77, %v3304
  // Predicated region
  $region54: #{rgcn_forward.1} parent=0 // pred_check
    _
  $region55: #{rgcn_forward.1} parent=0 // pred_check_branch
    %3314 = sbr.rel (0) target = $region57
  $region56: #{rgcn_forward.1} parent=0 // pred_region
    _
  $region57: #{rgcn_forward.1} parent=0 // pred_fallthru
    _
  // Predicated region
  $region58: #{rgcn_forward.1} parent=0 // pred_check
    _
  $region59: #{rgcn_forward.1} parent=0 // pred_check_branch
    %3316 = sbr.rel (0) target = $region61
  $region60: #{rgcn_forward.1} parent=0 // pred_region
    _
  $region61: #{rgcn_forward.1} parent=0 // pred_fallthru
    _

</llo_original>
